<compile_context>
chip_gen: v6e
topology: v6e:2x2x1
jax: 0.10.0
libtpu: 0.0.40
codegen_flags: <defaults>
</compile_context>

<pallas_src>
import functools

import jax
import jax.numpy as jnp
from jax import lax
from jax.experimental import pallas as pl
from jax.experimental.pallas import tpu as pltpu

_LANE = 128
_BN_EPS = 1e-5


def _round_up(x, m):
    return (x + m - 1) // m * m


def _pick_row_tile(h_out, w_out, target_m=256):
    """Rows per tile: ~target_m im2col rows, sublane-friendly when possible."""
    th = max(1, target_m // max(1, w_out))
    th = min(th, h_out)
    if th >= 8:
        th = (th // 8) * 8
    elif h_out >= 8:
        th = 8
    else:
        th = h_out
    return th


# ----------------------------------------------------------------------------
# In-kernel conv taps: KH contiguous row-slab loads, static KW shifts of the
# loaded value, KH*KW small MXU dots accumulated in f32 registers.
# Returns (TH*WOUT, COUT_MXU) f32.
# ----------------------------------------------------------------------------
def _conv_taps(x_ref, w_ref, *, KH, KW, TH, WOUT, CIN):
    r = pl.program_id(1)
    row0 = pl.multiple_of(r * TH, TH)
    M = TH * WOUT
    acc = jnp.zeros((M, w_ref.shape[-1]), jnp.float32)
    for kh in range(KH):
        slab = x_ref[pl.ds(row0 + kh, TH), :, :]              # (TH, Wp, CIN) contiguous
        for kw in range(KW):
            xs = slab[:, kw:kw + WOUT, :].reshape(M, CIN)     # static shift of the slab
            acc = acc + jnp.dot(xs, w_ref[kh * KW + kw],
                                preferred_element_type=jnp.float32)
    return acc


def _conv_stats_kernel(x_ref, w_ref, stats_ref, *, KH, KW, TH, WOUT, CIN, COUT,
                       HOUT, NEED_MASK):
    # bn=True pass 1: per-image (sum, sumsq) of the bias-free conv, accumulated
    # in the resident stats output block across the row-tile axis.
    r = pl.program_id(1)
    acc = _conv_taps(x_ref, w_ref, KH=KH, KW=KW, TH=TH, WOUT=WOUT, CIN=CIN)
    acc = acc[:, :COUT]                                       # drop MXU lane padding
    if NEED_MASK:                                             # rows >= HOUT are padding
        M = TH * WOUT
        rows = r * TH + (lax.broadcasted_iota(jnp.int32, (M, 1), 0) // WOUT)
        acc = acc * (rows < HOUT).astype(acc.dtype)
    s = jnp.sum(acc, axis=0, keepdims=True)
    q = jnp.sum(acc * acc, axis=0, keepdims=True)
    sq = jnp.concatenate([s, q], axis=0)                      # (2, COUT)

    @pl.when(r == 0)
    def _():
        stats_ref[...] = jnp.zeros_like(stats_ref)

    stats_ref[...] += sq


def _conv_affine_kernel(x_ref, w_ref, scale_ref, shift_ref, o_ref, *, KH, KW,
                        TH, WOUT, CIN, COUT):
    # Conv + fused per-channel affine (BN apply or plain bias). Single HBM write.
    acc = _conv_taps(x_ref, w_ref, KH=KH, KW=KW, TH=TH, WOUT=WOUT, CIN=CIN)
    acc = acc[:, :COUT]                                       # drop MXU lane padding
    out = acc * scale_ref[...] + shift_ref[...]               # (M,C)*(1,C)+(1,C)
    o_ref[...] = out.reshape(TH, WOUT, COUT).astype(o_ref.dtype)


# ----------------------------------------------------------------------------
# Wrapper
# ----------------------------------------------------------------------------
def basic_conv2d(x_nchw, weight, bias, gamma, beta, *, kernel_size, bn=True):
    """Forward pass of BasicConv2d.

    x_nchw : (N, Cin, H, W)       -- PyTorch NCHW layout
    weight : (Cout, Cin, KH, KW)  -- PyTorch Conv2d weight layout
    bias   : (Cout,)
    gamma, beta : (Cout,)         -- BatchNorm2d affine params (used iff bn)
    """
    KH, KW = kernel_size
    N, Cin, H, W = x_nchw.shape
    Cout = weight.shape[0]
    ph, pw = KH // 2, KW // 2
    Hp, Wp = H + 2 * ph, W + 2 * pw
    Hout, Wout = Hp - KH + 1, Wp - KW + 1          # == H, W for odd kernels
    Cout_mxu = _round_up(Cout, _LANE)              # padded only inside VMEM

    TH = _pick_row_tile(Hout, Wout)
    RT = pl.cdiv(Hout, TH)
    Hout_p = RT * TH
    Hp_pad = Hout_p + KH - 1                       # rows needed by the last tile

    # Single fused XLA pass over x: NCHW->NHWC, bf16 cast, zero pad (halo + row round-up).
    x = jnp.transpose(x_nchw, (0, 2, 3, 1)).astype(jnp.bfloat16)
    xp = jnp.pad(x, ((0, 0), (ph, Hp_pad - H - ph), (pw, pw), (0, 0)))

    # Weights: (Cout, Cin, KH, KW) -> per-tap (KH*KW, Cin, Cout_mxu), bf16, lane-padded.
    w = jnp.transpose(weight, (2, 3, 1, 0)).reshape(KH * KW, Cin, Cout).astype(jnp.bfloat16)
    w = jnp.pad(w, ((0, 0), (0, 0), (0, Cout_mxu - Cout)))

    # Explicit VMEM budget: double-buffered blocks + f32 accumulator + headroom.
    x_blk = Hp_pad * Wp * Cin * 2
    w_blk = KH * KW * Cin * Cout_mxu * 2
    o_blk = TH * Wout * Cout * 4
    demand = 2 * (x_blk + w_blk + o_blk) + 4 * TH * Wout * Cout_mxu
    vmem_limit = int(min(64 << 20, max(16 << 20, 4 * demand + (4 << 20))))

    cparams = pltpu.CompilerParams(
        dimension_semantics=("parallel", "arbitrary"),
        vmem_limit_bytes=vmem_limit)

    x_spec = pl.BlockSpec((None, Hp_pad, Wp, Cin), lambda n, r: (n, 0, 0, 0))
    w_spec = pl.BlockSpec((KH * KW, Cin, Cout_mxu), lambda n, r: (0, 0, 0))
    v_spec = pl.BlockSpec((1, Cout), lambda n, r: (0, 0))
    o_spec = pl.BlockSpec((None, TH, Wout, Cout), lambda n, r: (n, r, 0, 0))

    conv_cfg = dict(KH=KH, KW=KW, TH=TH, WOUT=Wout, CIN=Cin, COUT=Cout)

    if bn:
        # Pass 1: per-image (sum, sumsq) channel stats of the bias-free conv.
        stats = pl.pallas_call(
            functools.partial(_conv_stats_kernel, HOUT=Hout,
                              NEED_MASK=(Hout_p != Hout), **conv_cfg),
            out_shape=jax.ShapeDtypeStruct((N, 2, Cout), jnp.float32),
            grid_spec=pltpu.PrefetchScalarGridSpec(
                num_scalar_prefetch=0, grid=(N, RT),
                in_specs=[x_spec, w_spec],
                out_specs=pl.BlockSpec((None, 2, Cout), lambda n, r: (n, 0, 0))),
            compiler_params=cparams,
        )(xp, w)

        # Tiny per-channel reduction; the conv bias cancels exactly under BN.
        # NOTE: E[x^2]-E[x]^2 in f32; fine at these sizes (clamped at 0).
        m_total = float(N * Hout * Wout)
        sums = jnp.sum(stats, axis=0)                          # (2, Cout)
        mean = sums[0] / m_total
        var = jnp.maximum(sums[1] / m_total - mean * mean, 0.0)
        inv = lax.rsqrt(var + _BN_EPS)
        g = gamma.astype(jnp.float32)
        scale = (g * inv).reshape(1, Cout)
        shift = (beta.astype(jnp.float32) - mean * g * inv).reshape(1, Cout)
    else:
        scale = jnp.ones((1, Cout), jnp.float32)
        shift = bias.astype(jnp.float32).reshape(1, Cout)

    # Pass 2 (or the only pass when bn=False): conv + fused affine.
    out = pl.pallas_call(
        functools.partial(_conv_affine_kernel, **conv_cfg),
        out_shape=jax.ShapeDtypeStruct((N, Hout_p, Wout, Cout), jnp.float32),
        grid_spec=pltpu.PrefetchScalarGridSpec(
            num_scalar_prefetch=0, grid=(N, RT),
            in_specs=[x_spec, w_spec, v_spec, v_spec],
            out_specs=o_spec),
        compiler_params=cparams,
    )(xp, w, scale, shift)

    if Hout_p != Hout:
        out = out[:, :Hout]
    return jnp.transpose(out, (0, 3, 1, 2))                    # NHWC -> NCHW


# ----------------------------------------------------------------------------
# Pure-JAX reference (mirrors the PyTorch module forward)
# ----------------------------------------------------------------------------
def _reference(x_nchw, weight, bias, gamma, beta, *, kernel_size, bn=True):
    KH, KW = kernel_size
    h = lax.conv_general_dilated(
        x_nchw.astype(jnp.float32), weight.astype(jnp.float32),
        window_strides=(1, 1), padding=((KH // 2, KH // 2), (KW // 2, KW // 2)),
        dimension_numbers=("NCHW", "OIHW", "NCHW"))
    h = h + bias.reshape(1, -1, 1, 1)
    if bn:
        mean = jnp.mean(h, axis=(0, 2, 3), keepdims=True)
        var = jnp.mean((h - mean) ** 2, axis=(0, 2, 3), keepdims=True)
        h = (h - mean) * lax.rsqrt(var + _BN_EPS)
        h = h * gamma.reshape(1, -1, 1, 1) + beta.reshape(1, -1, 1, 1)
    return h


if __name__ == "__main__":
    key = jax.random.PRNGKey(0)
    k_x, k_w, k_b, k_g, k_be = jax.random.split(key, 5)

    # Small shapes consistent with the module: batch=2, Cin=4, 16x16 spatial,
    # Cout=8, kernel_size=(3,3).
    N, Cin, H, W = 2, 4, 16, 16
    Cout, KH, KW = 8, 3, 3

    x = jax.random.normal(k_x, (N, Cin, H, W), dtype=jnp.float32)
    weight = jax.random.normal(k_w, (Cout, Cin, KH, KW), dtype=jnp.float32) * 0.1
    bias = jax.random.normal(k_b, (Cout,), dtype=jnp.float32) * 0.1
    gamma = 1.0 + 0.1 * jax.random.normal(k_g, (Cout,), dtype=jnp.float32)
    beta = 0.1 * jax.random.normal(k_be, (Cout,), dtype=jnp.float32)

    # The reference uses the same bf16 rounding of the MXU operands so the check
    # isolates kernel correctness from the (intentional) bf16 operand cast.
    x_r = x.astype(jnp.bfloat16).astype(jnp.float32)
    w_r = weight.astype(jnp.bfloat16).astype(jnp.float32)

    for bn in (True, False):
        out = basic_conv2d(x, weight, bias, gamma, beta, kernel_size=(KH, KW), bn=bn)
        out = jax.block_until_ready(out)
        ref = _reference(x_r, w_r, bias, gamma, beta, kernel_size=(KH, KW), bn=bn)
        assert out.shape == (N, Cout, H, W)
        assert jnp.allclose(out, ref, atol=2e-3, rtol=2e-3), f"mismatch vs reference (bn={bn})"

    print("KERNEL_OK")
</pallas_src>

<mosaic_0001>
module attributes {stable_mosaic.version = 11 : i64} {
  func.func @_conv_stats_kernel(%arg0: i32, %arg1: i32, %arg2: memref<1x18x18x4xbf16, #tpu.memory_space<vmem>>, %arg3: memref<9x4x128xbf16, #tpu.memory_space<vmem>>, %arg4: memref<1x2x8xf32, #tpu.memory_space<vmem>>) attributes {dimension_semantics = [#tpu.dimension_semantics<parallel>, #tpu.dimension_semantics<arbitrary>], iteration_bounds = array<i64: 2, 1>, scalar_prefetch = 0 : i64, scratch_operands = 0 : i64, tpu.core_type = #tpu.core_type<tc>, window_params = [{transform_indices = @transform_0, window_bounds = array<i64: 1, 18, 18, 4>}, {pipeline_mode = #tpu.pipeline_mode<synchronous>, transform_indices = @transform_1, window_bounds = array<i64: 9, 4, 128>}, {transform_indices = @transform_2, window_bounds = array<i64: 1, 2, 8>}]} {
    %c16_i32 = arith.constant 16 : i32
    %0 = arith.muli %arg1, %c16_i32 : i32
    %1 = tpu.assume_multiple %0, 16 : i32
    %cst = arith.constant 0.000000e+00 : f32
    %2 = vector.broadcast %cst : f32 to vector<256x128xf32>
    %c0_i32 = arith.constant 0 : i32
    %3 = arith.addi %1, %c0_i32 : i32
    %c0 = arith.constant 0 : index
    %4 = arith.index_cast %3 : i32 to index
    %c0_0 = arith.constant 0 : index
    %c0_1 = arith.constant 0 : index
    %5 = vector.load %arg2[%c0, %4, %c0_0, %c0_1] : memref<1x18x18x4xbf16, #tpu.memory_space<vmem>>, vector<1x16x18x4xbf16>
    %6 = vector.shape_cast %5 : vector<1x16x18x4xbf16> to vector<16x18x4xbf16>
    %7 = vector.extract_strided_slice %6 {offsets = [0, 0, 0], sizes = [16, 16, 4], strides = [1, 1, 1]} : vector<16x18x4xbf16> to vector<16x16x4xbf16>
    %8 = vector.shape_cast %7 : vector<16x16x4xbf16> to vector<256x4xbf16>
    %c0_2 = arith.constant 0 : index
    %c0_3 = arith.constant 0 : index
    %c0_4 = arith.constant 0 : index
    %9 = vector.load %arg3[%c0_2, %c0_3, %c0_4] : memref<9x4x128xbf16, #tpu.memory_space<vmem>>, vector<1x4x128xbf16>
    %10 = vector.shape_cast %9 : vector<1x4x128xbf16> to vector<4x128xbf16>
    %cst_5 = arith.constant dense<0.000000e+00> : vector<256x128xf32>
    %11 = tpu.matmul %8, %10, %cst_5 {dimension_numbers = #tpu.dot_dimension_numbers<[1], [0], [0], [1], [0, 0, 1, 1], [], []>} : vector<256x4xbf16>, vector<4x128xbf16>, vector<256x128xf32> -> vector<256x128xf32>
    %12 = arith.addf %2, %11 : vector<256x128xf32>
    %13 = vector.extract_strided_slice %6 {offsets = [0, 1, 0], sizes = [16, 16, 4], strides = [1, 1, 1]} : vector<16x18x4xbf16> to vector<16x16x4xbf16>
    %14 = vector.shape_cast %13 : vector<16x16x4xbf16> to vector<256x4xbf16>
    %c1 = arith.constant 1 : index
    %c0_6 = arith.constant 0 : index
    %c0_7 = arith.constant 0 : index
    %15 = vector.load %arg3[%c1, %c0_6, %c0_7] : memref<9x4x128xbf16, #tpu.memory_space<vmem>>, vector<1x4x128xbf16>
    %16 = vector.shape_cast %15 : vector<1x4x128xbf16> to vector<4x128xbf16>
    %cst_8 = arith.constant dense<0.000000e+00> : vector<256x128xf32>
    %17 = tpu.matmul %14, %16, %cst_8 {dimension_numbers = #tpu.dot_dimension_numbers<[1], [0], [0], [1], [0, 0, 1, 1], [], []>} : vector<256x4xbf16>, vector<4x128xbf16>, vector<256x128xf32> -> vector<256x128xf32>
    %18 = arith.addf %12, %17 : vector<256x128xf32>
    %19 = vector.extract_strided_slice %6 {offsets = [0, 2, 0], sizes = [16, 16, 4], strides = [1, 1, 1]} : vector<16x18x4xbf16> to vector<16x16x4xbf16>
    %20 = vector.shape_cast %19 : vector<16x16x4xbf16> to vector<256x4xbf16>
    %c2 = arith.constant 2 : index
    %c0_9 = arith.constant 0 : index
    %c0_10 = arith.constant 0 : index
    %21 = vector.load %arg3[%c2, %c0_9, %c0_10] : memref<9x4x128xbf16, #tpu.memory_space<vmem>>, vector<1x4x128xbf16>
    %22 = vector.shape_cast %21 : vector<1x4x128xbf16> to vector<4x128xbf16>
    %cst_11 = arith.constant dense<0.000000e+00> : vector<256x128xf32>
    %23 = tpu.matmul %20, %22, %cst_11 {dimension_numbers = #tpu.dot_dimension_numbers<[1], [0], [0], [1], [0, 0, 1, 1], [], []>} : vector<256x4xbf16>, vector<4x128xbf16>, vector<256x128xf32> -> vector<256x128xf32>
    %24 = arith.addf %18, %23 : vector<256x128xf32>
    %c1_i32 = arith.constant 1 : i32
    %25 = arith.addi %1, %c1_i32 : i32
    %c0_12 = arith.constant 0 : index
    %26 = arith.index_cast %25 : i32 to index
    %c0_13 = arith.constant 0 : index
    %c0_14 = arith.constant 0 : index
    %27 = vector.load %arg2[%c0_12, %26, %c0_13, %c0_14] : memref<1x18x18x4xbf16, #tpu.memory_space<vmem>>, vector<1x16x18x4xbf16>
    %28 = vector.shape_cast %27 : vector<1x16x18x4xbf16> to vector<16x18x4xbf16>
    %29 = vector.extract_strided_slice %28 {offsets = [0, 0, 0], sizes = [16, 16, 4], strides = [1, 1, 1]} : vector<16x18x4xbf16> to vector<16x16x4xbf16>
    %30 = vector.shape_cast %29 : vector<16x16x4xbf16> to vector<256x4xbf16>
    %c3 = arith.constant 3 : index
    %c0_15 = arith.constant 0 : index
    %c0_16 = arith.constant 0 : index
    %31 = vector.load %arg3[%c3, %c0_15, %c0_16] : memref<9x4x128xbf16, #tpu.memory_space<vmem>>, vector<1x4x128xbf16>
    %32 = vector.shape_cast %31 : vector<1x4x128xbf16> to vector<4x128xbf16>
    %cst_17 = arith.constant dense<0.000000e+00> : vector<256x128xf32>
    %33 = tpu.matmul %30, %32, %cst_17 {dimension_numbers = #tpu.dot_dimension_numbers<[1], [0], [0], [1], [0, 0, 1, 1], [], []>} : vector<256x4xbf16>, vector<4x128xbf16>, vector<256x128xf32> -> vector<256x128xf32>
    %34 = arith.addf %24, %33 : vector<256x128xf32>
    %35 = vector.extract_strided_slice %28 {offsets = [0, 1, 0], sizes = [16, 16, 4], strides = [1, 1, 1]} : vector<16x18x4xbf16> to vector<16x16x4xbf16>
    %36 = vector.shape_cast %35 : vector<16x16x4xbf16> to vector<256x4xbf16>
    %c4 = arith.constant 4 : index
    %c0_18 = arith.constant 0 : index
    %c0_19 = arith.constant 0 : index
    %37 = vector.load %arg3[%c4, %c0_18, %c0_19] : memref<9x4x128xbf16, #tpu.memory_space<vmem>>, vector<1x4x128xbf16>
    %38 = vector.shape_cast %37 : vector<1x4x128xbf16> to vector<4x128xbf16>
    %cst_20 = arith.constant dense<0.000000e+00> : vector<256x128xf32>
    %39 = tpu.matmul %36, %38, %cst_20 {dimension_numbers = #tpu.dot_dimension_numbers<[1], [0], [0], [1], [0, 0, 1, 1], [], []>} : vector<256x4xbf16>, vector<4x128xbf16>, vector<256x128xf32> -> vector<256x128xf32>
    %40 = arith.addf %34, %39 : vector<256x128xf32>
    %41 = vector.extract_strided_slice %28 {offsets = [0, 2, 0], sizes = [16, 16, 4], strides = [1, 1, 1]} : vector<16x18x4xbf16> to vector<16x16x4xbf16>
    %42 = vector.shape_cast %41 : vector<16x16x4xbf16> to vector<256x4xbf16>
    %c5 = arith.constant 5 : index
    %c0_21 = arith.constant 0 : index
    %c0_22 = arith.constant 0 : index
    %43 = vector.load %arg3[%c5, %c0_21, %c0_22] : memref<9x4x128xbf16, #tpu.memory_space<vmem>>, vector<1x4x128xbf16>
    %44 = vector.shape_cast %43 : vector<1x4x128xbf16> to vector<4x128xbf16>
    %cst_23 = arith.constant dense<0.000000e+00> : vector<256x128xf32>
    %45 = tpu.matmul %42, %44, %cst_23 {dimension_numbers = #tpu.dot_dimension_numbers<[1], [0], [0], [1], [0, 0, 1, 1], [], []>} : vector<256x4xbf16>, vector<4x128xbf16>, vector<256x128xf32> -> vector<256x128xf32>
    %46 = arith.addf %40, %45 : vector<256x128xf32>
    %c2_i32 = arith.constant 2 : i32
    %47 = arith.addi %1, %c2_i32 : i32
    %c0_24 = arith.constant 0 : index
    %48 = arith.index_cast %47 : i32 to index
    %c0_25 = arith.constant 0 : index
    %c0_26 = arith.constant 0 : index
    %49 = vector.load %arg2[%c0_24, %48, %c0_25, %c0_26] : memref<1x18x18x4xbf16, #tpu.memory_space<vmem>>, vector<1x16x18x4xbf16>
    %50 = vector.shape_cast %49 : vector<1x16x18x4xbf16> to vector<16x18x4xbf16>
    %51 = vector.extract_strided_slice %50 {offsets = [0, 0, 0], sizes = [16, 16, 4], strides = [1, 1, 1]} : vector<16x18x4xbf16> to vector<16x16x4xbf16>
    %52 = vector.shape_cast %51 : vector<16x16x4xbf16> to vector<256x4xbf16>
    %c6 = arith.constant 6 : index
    %c0_27 = arith.constant 0 : index
    %c0_28 = arith.constant 0 : index
    %53 = vector.load %arg3[%c6, %c0_27, %c0_28] : memref<9x4x128xbf16, #tpu.memory_space<vmem>>, vector<1x4x128xbf16>
    %54 = vector.shape_cast %53 : vector<1x4x128xbf16> to vector<4x128xbf16>
    %cst_29 = arith.constant dense<0.000000e+00> : vector<256x128xf32>
    %55 = tpu.matmul %52, %54, %cst_29 {dimension_numbers = #tpu.dot_dimension_numbers<[1], [0], [0], [1], [0, 0, 1, 1], [], []>} : vector<256x4xbf16>, vector<4x128xbf16>, vector<256x128xf32> -> vector<256x128xf32>
    %56 = arith.addf %46, %55 : vector<256x128xf32>
    %57 = vector.extract_strided_slice %50 {offsets = [0, 1, 0], sizes = [16, 16, 4], strides = [1, 1, 1]} : vector<16x18x4xbf16> to vector<16x16x4xbf16>
    %58 = vector.shape_cast %57 : vector<16x16x4xbf16> to vector<256x4xbf16>
    %c7 = arith.constant 7 : index
    %c0_30 = arith.constant 0 : index
    %c0_31 = arith.constant 0 : index
    %59 = vector.load %arg3[%c7, %c0_30, %c0_31] : memref<9x4x128xbf16, #tpu.memory_space<vmem>>, vector<1x4x128xbf16>
    %60 = vector.shape_cast %59 : vector<1x4x128xbf16> to vector<4x128xbf16>
    %cst_32 = arith.constant dense<0.000000e+00> : vector<256x128xf32>
    %61 = tpu.matmul %58, %60, %cst_32 {dimension_numbers = #tpu.dot_dimension_numbers<[1], [0], [0], [1], [0, 0, 1, 1], [], []>} : vector<256x4xbf16>, vector<4x128xbf16>, vector<256x128xf32> -> vector<256x128xf32>
    %62 = arith.addf %56, %61 : vector<256x128xf32>
    %63 = vector.extract_strided_slice %50 {offsets = [0, 2, 0], sizes = [16, 16, 4], strides = [1, 1, 1]} : vector<16x18x4xbf16> to vector<16x16x4xbf16>
    %64 = vector.shape_cast %63 : vector<16x16x4xbf16> to vector<256x4xbf16>
    %c8 = arith.constant 8 : index
    %c0_33 = arith.constant 0 : index
    %c0_34 = arith.constant 0 : index
    %65 = vector.load %arg3[%c8, %c0_33, %c0_34] : memref<9x4x128xbf16, #tpu.memory_space<vmem>>, vector<1x4x128xbf16>
    %66 = vector.shape_cast %65 : vector<1x4x128xbf16> to vector<4x128xbf16>
    %cst_35 = arith.constant dense<0.000000e+00> : vector<256x128xf32>
    %67 = tpu.matmul %64, %66, %cst_35 {dimension_numbers = #tpu.dot_dimension_numbers<[1], [0], [0], [1], [0, 0, 1, 1], [], []>} : vector<256x4xbf16>, vector<4x128xbf16>, vector<256x128xf32> -> vector<256x128xf32>
    %68 = arith.addf %62, %67 : vector<256x128xf32>
    %69 = vector.extract_strided_slice %68 {offsets = [0, 0], sizes = [256, 8], strides = [1, 1]} : vector<256x128xf32> to vector<256x8xf32>
    %cst_36 = arith.constant dense<0.000000e+00> : vector<8xf32>
    %70 = vector.multi_reduction <add>, %69, %cst_36 [0] : vector<256x8xf32> to vector<8xf32>
    %71 = vector.shape_cast %70 : vector<8xf32> to vector<1x8xf32>
    %72 = arith.mulf %69, %69 : vector<256x8xf32>
    %cst_37 = arith.constant dense<0.000000e+00> : vector<8xf32>
    %73 = vector.multi_reduction <add>, %72, %cst_37 [0] : vector<256x8xf32> to vector<8xf32>
    %74 = vector.shape_cast %73 : vector<8xf32> to vector<1x8xf32>
    %75 = tpu.concatenate %71, %74 in 0 : vector<1x8xf32>, vector<1x8xf32> -> vector<2x8xf32>
    %c0_i32_38 = arith.constant 0 : i32
    %76 = arith.cmpi eq, %arg1, %c0_i32_38 : i32
    %77 = arith.extui %76 : i1 to i32
    %c0_i32_39 = arith.constant 0 : i32
    %78 = arith.cmpi ne, %77, %c0_i32_39 : i32
    scf.if %78 {
      %cst_46 = arith.constant 0.000000e+00 : f32
      %85 = vector.broadcast %cst_46 : f32 to vector<2x8xf32>
      %c0_47 = arith.constant 0 : index
      %c0_48 = arith.constant 0 : index
      %c0_49 = arith.constant 0 : index
      %86 = vector.load %arg4[%c0_47, %c0_48, %c0_49] : memref<1x2x8xf32, #tpu.memory_space<vmem>>, vector<1x2x8xf32>
      %87 = vector.shape_cast %86 : vector<1x2x8xf32> to vector<2x8xf32>
      %88 = vector.shape_cast %85 : vector<2x8xf32> to vector<1x2x8xf32>
      tpu.vector_store %arg4[%c0_47, %c0_48, %c0_49], %88 {strides = array<i32>} : memref<1x2x8xf32, #tpu.memory_space<vmem>>, vector<1x2x8xf32>,
    } else {
    }
    %c0_40 = arith.constant 0 : index
    %c0_41 = arith.constant 0 : index
    %c0_42 = arith.constant 0 : index
    %79 = vector.load %arg4[%c0_40, %c0_41, %c0_42] : memref<1x2x8xf32, #tpu.memory_space<vmem>>, vector<1x2x8xf32>
    %80 = vector.shape_cast %79 : vector<1x2x8xf32> to vector<2x8xf32>
    %81 = arith.addf %80, %75 : vector<2x8xf32>
    %c0_43 = arith.constant 0 : index
    %c0_44 = arith.constant 0 : index
    %c0_45 = arith.constant 0 : index
    %82 = vector.load %arg4[%c0_43, %c0_44, %c0_45] : memref<1x2x8xf32, #tpu.memory_space<vmem>>, vector<1x2x8xf32>
    %83 = vector.shape_cast %82 : vector<1x2x8xf32> to vector<2x8xf32>
    %84 = vector.shape_cast %81 : vector<2x8xf32> to vector<1x2x8xf32>
    tpu.vector_store %arg4[%c0_43, %c0_44, %c0_45], %84 {strides = array<i32>} : memref<1x2x8xf32, #tpu.memory_space<vmem>>, vector<1x2x8xf32>,
    return
  }
  func.func @transform_0(%arg0: i32, %arg1: i32) -> (i32, i32, i32, i32) {
    %c0_i32 = arith.constant 0 : i32
    %c0_i32_0 = arith.constant 0 : i32
    %c0_i32_1 = arith.constant 0 : i32
    %c0_i32_2 = arith.constant 0 : i32
    return %arg0, %c0_i32, %c0_i32_0, %c0_i32_1 : i32, i32, i32, i32
  }
  func.func @transform_1(%arg0: i32, %arg1: i32) -> (i32, i32, i32) {
    %c0_i32 = arith.constant 0 : i32
    %c0_i32_0 = arith.constant 0 : i32
    %c0_i32_1 = arith.constant 0 : i32
    %c0_i32_2 = arith.constant 0 : i32
    return %c0_i32, %c0_i32_0, %c0_i32_1 : i32, i32, i32
  }
  func.func @transform_2(%arg0: i32, %arg1: i32) -> (i32, i32, i32) {
    %c0_i32 = arith.constant 0 : i32
    %c0_i32_0 = arith.constant 0 : i32
    %c0_i32_1 = arith.constant 0 : i32
    return %arg0, %c0_i32, %c0_i32_0 : i32, i32, i32
  }
}

</mosaic_0001>

<llo_original>
// kernel: tpu_custom_call.1
$region0: #{tpu_custom_call.1}
  #allocation0 [shape = 'u32[]', space=smem, size = 0x4, offset = 0x4, fixed_abs, tag = 'smem constant byte address 0x4 - core index']
  #allocation1 [shape = 'u32[144,128]{1,0:T(1,128)}', space=vmem, size = 0x12000, scoped, tag = 'internal scratch']
  %s0 = inlined_call_operand.vmem [shape: bf16[2,18,18,4], index: 0, kind: input, shape index: {}]
  %s1 = inlined_call_operand.vmem [shape: bf16[9,4,128], index: 1, kind: input, shape index: {}]
  %s2 = inlined_call_operand.hbm [shape: f32[2,2,8], index: 2, kind: output, shape index: {}]
  %s3 = sld [smem:[#allocation0]]
  $region45: #{tpu_custom_call.1} parent=0
    _
  %s5 = ssub.s32 1, %s3
  %s6 = scalar_select 0, %s5, %s3
  $region1: #{tpu_custom_call.1} parent=0
    #allocation2 [shape = 'u8[2048]{0}', space=vmem, size = 0x800, scoped, tag = 'output window, operand 0']
    #allocation3 [shape = 's32[2]{0}', space=sflag, size = 0x8, scoped, tag = 'scoped memory for tpu_custom_call.1']
    %7 = vsyncpa [#allocation3], 0
    %s8 = scalar_lea.sflag [#allocation3], 1
    %9 = vsyncpa %s8, 0
    loop: start=0, step=1, limit=4
    $region2: #{tpu_custom_call.1} parent=1 // loop_pre_header
      _
    $region3: #{tpu_custom_call.1} parent=1 // loop_header
      %s11 = sphi 0, %s15
      %p12 = scmp.ge.s32.totalorder %s11, 4
      %s18 = sphi 0, %s30
      %s19 = sphi 0, %s26
      %s20 = sphi 0, %s18
      %s21 = sphi 0, %s19
      %s22 = sphi 0, %s20
      %s23 = sphi 0, %s21
      %s33 = sphi 0, %s35
      %s36 = sphi 0, %s33
      %s37 = sphi 0, %s36
      %s53 = sphi 0, %s37
      %s57 = sphi 0, %s57
      %s59 = sphi 0, %s57
      %s60 = sphi 0, %s59
      %s74 = sphi 0, %s60
      %s80 = sphi 0, %s82
      %s83 = sphi 0, %s80
      %s84 = sphi 0, %s83
      %s100 = sphi 0, %s84
    $region4: #{tpu_custom_call.1} parent=1 // loop_header_branch
      %14 = sbr.rel (%p12) target = $region8
    $region5: #{tpu_custom_call.1} parent=1 // loop_body
      %s16 = ssub.s32 %s11, 1
      %s17 = ssub.s32 %s11, 2
      %s24 = sadd.s32 1, %s19
      %p25 = scmp.ge.s32.totalorder %s24, 1
      %s26 = scalar_select %p25, 0, %s24
      %s27 = sadd.s32 1, %s18
      %s28 = scalar_select %p25, %s27, %s18
      %p29 = scmp.ge.s32.totalorder %s28, 2
      %s30 = scalar_select %p29, 0, %s28
      %s31 = ssub.s32 %s18, %s30
      %p32 = scmp.eq.s32.totalorder %s31, 0
      %s34 = sadd.s32 %s33, 1
      %s35 = scalar_select %p32, %s33, %s34
      %p38 = pneg %p32
      %p39 = scmp.eq.s32.totalorder %s11, 1
      %p40 = por %p38, %p39
      %p41 = scmp.ne.s32.totalorder %s33, %s36
      %p42 = scmp.eq.s32.totalorder %s11, 0
      %p43 = por %p41, %p42
      %p44 = scmp.ne.s32.totalorder %s33, %s36
      %p45 = scmp.eq.s32.totalorder %s16, 1
      %p46 = por %p44, %p45
      %p47 = scmp.ne.s32.totalorder %s36, %s37
      %p48 = scmp.eq.s32.totalorder %s16, 0
      %p49 = por %p47, %p48
      %p50 = scmp.ne.s32.totalorder %s36, %s37
      %p51 = scmp.eq.s32.totalorder %s17, 1
      %p52 = por %p50, %p51
      %p54 = scmp.ne.s32.totalorder %s37, %s53
      %p55 = scmp.eq.s32.totalorder %s17, 0
      %p56 = por %p54, %p55
      %s58 = sadd.s32 %s57, 1
      %p61 = scmp.eq.s32.totalorder %s11, 1
      %p62 = scmp.ne.s32.totalorder %s57, %s59
      %p63 = scmp.eq.s32.totalorder %s11, 0
      %p64 = por %p62, %p63
      %p65 = scmp.ne.s32.totalorder %s57, %s59
      %p66 = scmp.eq.s32.totalorder %s16, 1
      %p67 = por %p65, %p66
      %p68 = scmp.ne.s32.totalorder %s59, %s60
      %p69 = scmp.eq.s32.totalorder %s16, 0
      %p70 = por %p68, %p69
      %p71 = scmp.ne.s32.totalorder %s59, %s60
      %p72 = scmp.eq.s32.totalorder %s17, 1
      %p73 = por %p71, %p72
      %p75 = scmp.ne.s32.totalorder %s60, %s74
      %p76 = scmp.eq.s32.totalorder %s17, 0
      %p77 = por %p75, %p76
      %s78 = ssub.s32 %s18, %s30
      %p79 = scmp.eq.s32.totalorder %s78, 0
      %s81 = sadd.s32 %s80, 1
      %s82 = scalar_select %p79, %s80, %s81
      %p85 = pneg %p79
      %p86 = scmp.eq.s32.totalorder %s11, 1
      %p87 = por %p85, %p86
      %p88 = scmp.ne.s32.totalorder %s80, %s83
      %p89 = scmp.eq.s32.totalorder %s11, 0
      %p90 = por %p88, %p89
      %p91 = scmp.ne.s32.totalorder %s80, %s83
      %p92 = scmp.eq.s32.totalorder %s16, 1
      %p93 = por %p91, %p92
      %p94 = scmp.ne.s32.totalorder %s83, %s84
      %p95 = scmp.eq.s32.totalorder %s16, 0
      %p96 = por %p94, %p95
      %p97 = scmp.ne.s32.totalorder %s83, %s84
      %p98 = scmp.eq.s32.totalorder %s17, 1
      %p99 = por %p97, %p98
      %p101 = scmp.ne.s32.totalorder %s84, %s100
      %p102 = scmp.eq.s32.totalorder %s17, 0
      %p103 = por %p101, %p102
      %p104 = scmp.le.s32.totalorder 1, %s11
      %p105 = scmp.lt.s32.totalorder %s11, 3
      %p106 = pnand %p104, %p105
      %p107 = pneg %p106
      // Predicated region
      $region9: #{tpu_custom_call.1} parent=5 // pred_check
        _
      $region10: #{tpu_custom_call.1} parent=5 // pred_check_branch
        %109 = sbr.rel (%p106) target = $region12
      $region11: #{tpu_custom_call.1} parent=5 // pred_region
        %s110 = ssub.s32 %s11, 1
        // Predicated region
        $region13: #{tpu_custom_call.1} parent=11 // pred_check
          %p111 = pneg %p70
        $region14: #{tpu_custom_call.1} parent=11 // pred_check_branch
          %113 = sbr.rel (%p111) target = $region16
        $region15: #{tpu_custom_call.1} parent=11 // pred_region
          _
        $region16: #{tpu_custom_call.1} parent=11 // pred_fallthru
          _
      $region12: #{tpu_custom_call.1} parent=5 // pred_fallthru
        _
      %p114 = scmp.lt.s32.totalorder %s11, 2
      // Predicated region
      $region17: #{tpu_custom_call.1} parent=5 // pred_check
        %p115 = pneg %p114
      $region18: #{tpu_custom_call.1} parent=5 // pred_check_branch
        %117 = sbr.rel (%p115) target = $region20
      $region19: #{tpu_custom_call.1} parent=5 // pred_region
        // Predicated region
        $region21: #{tpu_custom_call.1} parent=19 // pred_check
          %p118 = pneg %p43
        $region22: #{tpu_custom_call.1} parent=19 // pred_check_branch
          %120 = sbr.rel (%p118) target = $region24
        $region23: #{tpu_custom_call.1} parent=19 // pred_region
          %p121 = scmp.lt.s32.totalorder %s18, 1
          %s122 = scalar_select %p121, %s18, 1
          %s123 = smul.addr %s122, 54
          %s124 = smul.addr %s123, 4
          %s125 = scalar_lea.vmem %s0, %s124
        $region24: #{tpu_custom_call.1} parent=19 // pred_fallthru
          _
      $region20: #{tpu_custom_call.1} parent=5 // pred_fallthru
        _
      %p126 = scmp.le.s32.totalorder 1, %s11
      %p127 = scmp.lt.s32.totalorder %s11, 3
      %p128 = pnand %p126, %p127
      %p129 = pneg %p128
      // Predicated region
      $region25: #{tpu_custom_call.1} parent=5 // pred_check
        _
      $region26: #{tpu_custom_call.1} parent=5 // pred_check_branch
        %131 = sbr.rel (%p128) target = $region28
      $region27: #{tpu_custom_call.1} parent=5 // pred_region
        %s132 = ssub.s32 %s11, 1
        %p133 = scmp.lt.s32.totalorder %s20, 1
        %s134 = scalar_select %p133, %s20, 1
        %s135 = smul.addr %s134, 54
        %s136 = smul.addr %s135, 4
        %s137 = scalar_lea.vmem %s0, %s136
        %p138 = pneg %p49
        %p139 = pneg %p46
        %p140 = pneg %p70
        %p141 = pneg %p67
        %p142 = pneg %p96
        %p143 = pneg %p93
        %s144 = sand.u32 %s83, 1
        %s145 = scalar_lea.sflag [#allocation3], %s144
        %s146 = sand.u32 %s83, 1
        %s147 = smul.addr %s146, 2
        %s148 = scalar_lea.vmem [#allocation2], %s147
        %p149 = scmp.lt.s32.totalorder %s20, 1
        %s150 = scalar_select %p149, %s20, 1
        %s151 = smul.addr %s150, 54
        %s152 = smul.addr %s151, 4
        %s153 = scalar_lea.vmem %s0, %s152
        %s155 = smul.u32 %s21, 16
        %s156 = smul.u32 %s155, 3
        %s157 = smul.addr %s156, 4
        %s158 = scalar_lea.vmem %s153, %s157
        %v159 = vld [vmem:[%s158] sm:$0xf]
        %v160 = vld [vmem:[%s158 + $0x4] sm:$0xf]
        %v161 = vld [vmem:[%s158 + $0x8] sm:$0x1]
        %v162 = vld [vmem:[%s158 + $0xc] sm:$0xf]
        %v163 = vld [vmem:[%s158 + $0x10] sm:$0xf]
        %v164 = vld [vmem:[%s158 + $0x14] sm:$0x1]
        %v165 = vld [vmem:[%s158 + $0x18] sm:$0xf]
        %v166 = vld [vmem:[%s158 + $0x1c] sm:$0xf]
        %v167 = vld [vmem:[%s158 + $0x20] sm:$0x1]
        %v168 = vld [vmem:[%s158 + $0x24] sm:$0xf]
        %v169 = vld [vmem:[%s158 + $0x28] sm:$0xf]
        %v170 = vld [vmem:[%s158 + $0x2c] sm:$0x1]
        %v171 = vld [vmem:[%s158 + $0x30] sm:$0xf]
        %v172 = vld [vmem:[%s158 + $0x34] sm:$0xf]
        %v173 = vld [vmem:[%s158 + $0x38] sm:$0x1]
        %v174 = vld [vmem:[%s158 + $0x3c] sm:$0xf]
        %v175 = vld [vmem:[%s158 + $0x40] sm:$0xf]
        %v176 = vld [vmem:[%s158 + $0x44] sm:$0x1]
        %v177 = vld [vmem:[%s158 + $0x48] sm:$0xf]
        %v178 = vld [vmem:[%s158 + $0x4c] sm:$0xf]
        %v179 = vld [vmem:[%s158 + $0x50] sm:$0x1]
        %v180 = vld [vmem:[%s158 + $0x54] sm:$0xf]
        %v181 = vld [vmem:[%s158 + $0x58] sm:$0xf]
        %v182 = vld [vmem:[%s158 + $0x5c] sm:$0x1]
        %v183 = vld [vmem:[%s158 + $0x60] sm:$0xf]
        %v184 = vld [vmem:[%s158 + $0x64] sm:$0xf]
        %v185 = vld [vmem:[%s158 + $0x68] sm:$0x1]
        %v186 = vld [vmem:[%s158 + $0x6c] sm:$0xf]
        %v187 = vld [vmem:[%s158 + $0x70] sm:$0xf]
        %v188 = vld [vmem:[%s158 + $0x74] sm:$0x1]
        %v189 = vld [vmem:[%s158 + $0x78] sm:$0xf]
        %v190 = vld [vmem:[%s158 + $0x7c] sm:$0xf]
        %v191 = vld [vmem:[%s158 + $0x80] sm:$0x1]
        %v192 = vld [vmem:[%s158 + $0x84] sm:$0xf]
        %v193 = vld [vmem:[%s158 + $0x88] sm:$0xf]
        %v194 = vld [vmem:[%s158 + $0x8c] sm:$0x1]
        %v195 = vld [vmem:[%s158 + $0x90] sm:$0xf]
        %v196 = vld [vmem:[%s158 + $0x94] sm:$0xf]
        %v197 = vld [vmem:[%s158 + $0x98] sm:$0x1]
        %v198 = vld [vmem:[%s158 + $0x9c] sm:$0xf]
        %v199 = vld [vmem:[%s158 + $0xa0] sm:$0xf]
        %v200 = vld [vmem:[%s158 + $0xa4] sm:$0x1]
        %v201 = vld [vmem:[%s158 + $0xa8] sm:$0xf]
        %v202 = vld [vmem:[%s158 + $0xac] sm:$0xf]
        %v203 = vld [vmem:[%s158 + $0xb0] sm:$0x1]
        %v204 = vld [vmem:[%s158 + $0xb4] sm:$0xf]
        %v205 = vld [vmem:[%s158 + $0xb8] sm:$0xf]
        %v206 = vld [vmem:[%s158 + $0xbc] sm:$0x1]
        %v207 = vld [vmem:[%s1] sm:$0x3]
        %vm208 = vsmask.f32 3328
        %vm209 = vsmask.f32 7440
        %vm210 = vmor %vm208, %vm209
        %v212 = vshrl.u32 %v159, 16
        %v214 = vrot.slane %v212, 4
        %v215 = vshll.u32 %v159, 16
        %v217 = vrot.slane %v215, 5
        %v218 = vor.u32 %v214, %v217
        %v219 = vrot.slane %v218, 4
        %v221 = vshll.u32 %v160, 16
        %v223 = vrot.slane %v221, 5
        %v224 = vsel %vm210, %v219, %v223
        %v225 = vshrl.u32 %v160, 16
        %v227 = vrot.slane %v225, 4
        %v228 = vor.u32 %v227, %v223
        %v229 = vrot.slane %v228, 4
        %v231 = vshll.u32 %v161, 16
        %v233 = vrot.slane %v231, 5
        %v234 = vsel %vm210, %v229, %v233
        %v236 = vshrl.u32 %v162, 16
        %v238 = vrot.slane %v236, 4
        %v239 = vshll.u32 %v162, 16
        %v241 = vrot.slane %v239, 5
        %v242 = vor.u32 %v238, %v241
        %v243 = vrot.slane %v242, 4
        %v245 = vshll.u32 %v163, 16
        %v247 = vrot.slane %v245, 5
        %v248 = vsel %vm210, %v243, %v247
        %v249 = vshrl.u32 %v163, 16
        %v251 = vrot.slane %v249, 4
        %v252 = vor.u32 %v251, %v247
        %v253 = vrot.slane %v252, 4
        %v255 = vshll.u32 %v164, 16
        %v257 = vrot.slane %v255, 5
        %v258 = vsel %vm210, %v253, %v257
        %v260 = vshrl.u32 %v165, 16
        %v262 = vrot.slane %v260, 4
        %v263 = vshll.u32 %v165, 16
        %v265 = vrot.slane %v263, 5
        %v266 = vor.u32 %v262, %v265
        %v267 = vrot.slane %v266, 4
        %v269 = vshll.u32 %v166, 16
        %v271 = vrot.slane %v269, 5
        %v272 = vsel %vm210, %v267, %v271
        %v273 = vshrl.u32 %v166, 16
        %v275 = vrot.slane %v273, 4
        %v276 = vor.u32 %v275, %v271
        %v277 = vrot.slane %v276, 4
        %v279 = vshll.u32 %v167, 16
        %v281 = vrot.slane %v279, 5
        %v282 = vsel %vm210, %v277, %v281
        %v284 = vshrl.u32 %v168, 16
        %v286 = vrot.slane %v284, 4
        %v287 = vshll.u32 %v168, 16
        %v289 = vrot.slane %v287, 5
        %v290 = vor.u32 %v286, %v289
        %v291 = vrot.slane %v290, 4
        %v293 = vshll.u32 %v169, 16
        %v295 = vrot.slane %v293, 5
        %v296 = vsel %vm210, %v291, %v295
        %v297 = vshrl.u32 %v169, 16
        %v299 = vrot.slane %v297, 4
        %v300 = vor.u32 %v299, %v295
        %v301 = vrot.slane %v300, 4
        %v303 = vshll.u32 %v170, 16
        %v305 = vrot.slane %v303, 5
        %v306 = vsel %vm210, %v301, %v305
        %v308 = vshrl.u32 %v171, 16
        %v310 = vrot.slane %v308, 4
        %v311 = vshll.u32 %v171, 16
        %v313 = vrot.slane %v311, 5
        %v314 = vor.u32 %v310, %v313
        %v315 = vrot.slane %v314, 4
        %v317 = vshll.u32 %v172, 16
        %v319 = vrot.slane %v317, 5
        %v320 = vsel %vm210, %v315, %v319
        %v321 = vshrl.u32 %v172, 16
        %v323 = vrot.slane %v321, 4
        %v324 = vor.u32 %v323, %v319
        %v325 = vrot.slane %v324, 4
        %v327 = vshll.u32 %v173, 16
        %v329 = vrot.slane %v327, 5
        %v330 = vsel %vm210, %v325, %v329
        %v332 = vshrl.u32 %v174, 16
        %v334 = vrot.slane %v332, 4
        %v335 = vshll.u32 %v174, 16
        %v337 = vrot.slane %v335, 5
        %v338 = vor.u32 %v334, %v337
        %v339 = vrot.slane %v338, 4
        %v341 = vshll.u32 %v175, 16
        %v343 = vrot.slane %v341, 5
        %v344 = vsel %vm210, %v339, %v343
        %v345 = vshrl.u32 %v175, 16
        %v347 = vrot.slane %v345, 4
        %v348 = vor.u32 %v347, %v343
        %v349 = vrot.slane %v348, 4
        %v351 = vshll.u32 %v176, 16
        %v353 = vrot.slane %v351, 5
        %v354 = vsel %vm210, %v349, %v353
        %v356 = vshrl.u32 %v177, 16
        %v358 = vrot.slane %v356, 4
        %v359 = vshll.u32 %v177, 16
        %v361 = vrot.slane %v359, 5
        %v362 = vor.u32 %v358, %v361
        %v363 = vrot.slane %v362, 4
        %v365 = vshll.u32 %v178, 16
        %v367 = vrot.slane %v365, 5
        %v368 = vsel %vm210, %v363, %v367
        %v369 = vshrl.u32 %v178, 16
        %v371 = vrot.slane %v369, 4
        %v372 = vor.u32 %v371, %v367
        %v373 = vrot.slane %v372, 4
        %v375 = vshll.u32 %v179, 16
        %v377 = vrot.slane %v375, 5
        %v378 = vsel %vm210, %v373, %v377
        %v380 = vshrl.u32 %v180, 16
        %v382 = vrot.slane %v380, 4
        %v383 = vshll.u32 %v180, 16
        %v385 = vrot.slane %v383, 5
        %v386 = vor.u32 %v382, %v385
        %v387 = vrot.slane %v386, 4
        %v389 = vshll.u32 %v181, 16
        %v391 = vrot.slane %v389, 5
        %v392 = vsel %vm210, %v387, %v391
        %v393 = vshrl.u32 %v181, 16
        %v395 = vrot.slane %v393, 4
        %v396 = vor.u32 %v395, %v391
        %v397 = vrot.slane %v396, 4
        %v399 = vshll.u32 %v182, 16
        %v401 = vrot.slane %v399, 5
        %v402 = vsel %vm210, %v397, %v401
        %v404 = vshrl.u32 %v183, 16
        %v406 = vrot.slane %v404, 4
        %v407 = vshll.u32 %v183, 16
        %v409 = vrot.slane %v407, 5
        %v410 = vor.u32 %v406, %v409
        %v411 = vrot.slane %v410, 4
        %v413 = vshll.u32 %v184, 16
        %v415 = vrot.slane %v413, 5
        %v416 = vsel %vm210, %v411, %v415
        %v417 = vshrl.u32 %v184, 16
        %v419 = vrot.slane %v417, 4
        %v420 = vor.u32 %v419, %v415
        %v421 = vrot.slane %v420, 4
        %v423 = vshll.u32 %v185, 16
        %v425 = vrot.slane %v423, 5
        %v426 = vsel %vm210, %v421, %v425
        %v428 = vshrl.u32 %v186, 16
        %v430 = vrot.slane %v428, 4
        %v431 = vshll.u32 %v186, 16
        %v433 = vrot.slane %v431, 5
        %v434 = vor.u32 %v430, %v433
        %v435 = vrot.slane %v434, 4
        %v437 = vshll.u32 %v187, 16
        %v439 = vrot.slane %v437, 5
        %v440 = vsel %vm210, %v435, %v439
        %v441 = vshrl.u32 %v187, 16
        %v443 = vrot.slane %v441, 4
        %v444 = vor.u32 %v443, %v439
        %v445 = vrot.slane %v444, 4
        %v447 = vshll.u32 %v188, 16
        %v449 = vrot.slane %v447, 5
        %v450 = vsel %vm210, %v445, %v449
        %v452 = vshrl.u32 %v189, 16
        %v454 = vrot.slane %v452, 4
        %v455 = vshll.u32 %v189, 16
        %v457 = vrot.slane %v455, 5
        %v458 = vor.u32 %v454, %v457
        %v459 = vrot.slane %v458, 4
        %v461 = vshll.u32 %v190, 16
        %v463 = vrot.slane %v461, 5
        %v464 = vsel %vm210, %v459, %v463
        %v465 = vshrl.u32 %v190, 16
        %v467 = vrot.slane %v465, 4
        %v468 = vor.u32 %v467, %v463
        %v469 = vrot.slane %v468, 4
        %v471 = vshll.u32 %v191, 16
        %v473 = vrot.slane %v471, 5
        %v474 = vsel %vm210, %v469, %v473
        %v476 = vshrl.u32 %v192, 16
        %v478 = vrot.slane %v476, 4
        %v479 = vshll.u32 %v192, 16
        %v481 = vrot.slane %v479, 5
        %v482 = vor.u32 %v478, %v481
        %v483 = vrot.slane %v482, 4
        %v485 = vshll.u32 %v193, 16
        %v487 = vrot.slane %v485, 5
        %v488 = vsel %vm210, %v483, %v487
        %v489 = vshrl.u32 %v193, 16
        %v491 = vrot.slane %v489, 4
        %v492 = vor.u32 %v491, %v487
        %v493 = vrot.slane %v492, 4
        %v495 = vshll.u32 %v194, 16
        %v497 = vrot.slane %v495, 5
        %v498 = vsel %vm210, %v493, %v497
        %v500 = vshrl.u32 %v195, 16
        %v502 = vrot.slane %v500, 4
        %v503 = vshll.u32 %v195, 16
        %v505 = vrot.slane %v503, 5
        %v506 = vor.u32 %v502, %v505
        %v507 = vrot.slane %v506, 4
        %v509 = vshll.u32 %v196, 16
        %v511 = vrot.slane %v509, 5
        %v512 = vsel %vm210, %v507, %v511
        %v513 = vshrl.u32 %v196, 16
        %v515 = vrot.slane %v513, 4
        %v516 = vor.u32 %v515, %v511
        %v517 = vrot.slane %v516, 4
        %v519 = vshll.u32 %v197, 16
        %v521 = vrot.slane %v519, 5
        %v522 = vsel %vm210, %v517, %v521
        %v524 = vshrl.u32 %v198, 16
        %v526 = vrot.slane %v524, 4
        %v527 = vshll.u32 %v198, 16
        %v529 = vrot.slane %v527, 5
        %v530 = vor.u32 %v526, %v529
        %v531 = vrot.slane %v530, 4
        %v533 = vshll.u32 %v199, 16
        %v535 = vrot.slane %v533, 5
        %v536 = vsel %vm210, %v531, %v535
        %v537 = vshrl.u32 %v199, 16
        %v539 = vrot.slane %v537, 4
        %v540 = vor.u32 %v539, %v535
        %v541 = vrot.slane %v540, 4
        %v543 = vshll.u32 %v200, 16
        %v545 = vrot.slane %v543, 5
        %v546 = vsel %vm210, %v541, %v545
        %v548 = vshrl.u32 %v201, 16
        %v550 = vrot.slane %v548, 4
        %v551 = vshll.u32 %v201, 16
        %v553 = vrot.slane %v551, 5
        %v554 = vor.u32 %v550, %v553
        %v555 = vrot.slane %v554, 4
        %v557 = vshll.u32 %v202, 16
        %v559 = vrot.slane %v557, 5
        %v560 = vsel %vm210, %v555, %v559
        %v561 = vshrl.u32 %v202, 16
        %v563 = vrot.slane %v561, 4
        %v564 = vor.u32 %v563, %v559
        %v565 = vrot.slane %v564, 4
        %v567 = vshll.u32 %v203, 16
        %v569 = vrot.slane %v567, 5
        %v570 = vsel %vm210, %v565, %v569
        %v572 = vshrl.u32 %v204, 16
        %v574 = vrot.slane %v572, 4
        %v575 = vshll.u32 %v204, 16
        %v577 = vrot.slane %v575, 5
        %v578 = vor.u32 %v574, %v577
        %v579 = vrot.slane %v578, 4
        %v581 = vshll.u32 %v205, 16
        %v583 = vrot.slane %v581, 5
        %v584 = vsel %vm210, %v579, %v583
        %v585 = vshrl.u32 %v205, 16
        %v587 = vrot.slane %v585, 4
        %v588 = vor.u32 %v587, %v583
        %v589 = vrot.slane %v588, 4
        %v591 = vshll.u32 %v206, 16
        %v593 = vrot.slane %v591, 5
        %v594 = vsel %vm210, %v589, %v593
        %s595 = scalar_lea.vmem %s1, 2
        %v596 = vld [vmem:[%s595] sm:$0x3]
        %v597 = vunpack.c.l.b16 %v224
        %v598 = vunpack.c.l.b16 %v234
        %v599 = vunpack.c.l.b16 %v248
        %v600 = vunpack.c.l.b16 %v258
        %v601 = vunpack.c.l.b16 %v272
        %v602 = vunpack.c.l.b16 %v282
        %v603 = vunpack.c.l.b16 %v296
        %v604 = vunpack.c.l.b16 %v306
        %v605 = vunpack.c.l.b16 %v320
        %v606 = vunpack.c.l.b16 %v330
        %v607 = vunpack.c.l.b16 %v344
        %v608 = vunpack.c.l.b16 %v354
        %v609 = vunpack.c.l.b16 %v368
        %v610 = vunpack.c.l.b16 %v378
        %v611 = vunpack.c.l.b16 %v392
        %v612 = vunpack.c.l.b16 %v402
        %v613 = vunpack.c.l.b16 %v416
        %v614 = vunpack.c.l.b16 %v426
        %v615 = vunpack.c.l.b16 %v440
        %v616 = vunpack.c.l.b16 %v450
        %v617 = vunpack.c.l.b16 %v464
        %v618 = vunpack.c.l.b16 %v474
        %v619 = vunpack.c.l.b16 %v488
        %v620 = vunpack.c.l.b16 %v498
        %v621 = vunpack.c.l.b16 %v512
        %v622 = vunpack.c.l.b16 %v522
        %v623 = vunpack.c.l.b16 %v536
        %v624 = vunpack.c.l.b16 %v546
        %v625 = vunpack.c.l.b16 %v560
        %v626 = vunpack.c.l.b16 %v570
        %v627 = vunpack.c.l.b16 %v584
        %v628 = vunpack.c.l.b16 %v594
        %v629 = vpack.c.b16 %v598, %v597
        %v630 = vpack.c.b16 %v600, %v599
        %v631 = vpack.c.b16 %v602, %v601
        %v632 = vpack.c.b16 %v604, %v603
        %v633 = vpack.c.b16 %v606, %v605
        %v634 = vpack.c.b16 %v608, %v607
        %v635 = vpack.c.b16 %v610, %v609
        %v636 = vpack.c.b16 %v612, %v611
        %v637 = vpack.c.b16 %v614, %v613
        %v638 = vpack.c.b16 %v616, %v615
        %v639 = vpack.c.b16 %v618, %v617
        %v640 = vpack.c.b16 %v620, %v619
        %v641 = vpack.c.b16 %v622, %v621
        %v642 = vpack.c.b16 %v624, %v623
        %v643 = vpack.c.b16 %v626, %v625
        %v644 = vpack.c.b16 %v628, %v627
        %vm645 = vcmask 31744
        %v647 = vsel %vm645, %v629, 0
        %v650 = vsel %vm645, %v630, 0
        %v653 = vsel %vm645, %v631, 0
        %v656 = vsel %vm645, %v632, 0
        %v659 = vsel %vm645, %v633, 0
        %v662 = vsel %vm645, %v634, 0
        %v665 = vsel %vm645, %v635, 0
        %v668 = vsel %vm645, %v636, 0
        %v671 = vsel %vm645, %v637, 0
        %v674 = vsel %vm645, %v638, 0
        %v677 = vsel %vm645, %v639, 0
        %v680 = vsel %vm645, %v640, 0
        %v683 = vsel %vm645, %v641, 0
        %v686 = vsel %vm645, %v642, 0
        %v689 = vsel %vm645, %v643, 0
        %v692 = vsel %vm645, %v644, 0
        %vm694 = vcmask 1041408
        %v696 = vsel %vm694, %v596, 0
        %698 = vmatprep.subr.bf16.mxu0 0
        %699 = vmatpush1.bf16.msra.mxu0 0
        %700 = vmatprep.subr.bf16.mxu0 0
        %701 = vmatpush1.bf16.msra.mxu0 0
        %702 = vmatprep.subr.bf16.mxu0 0
        %703 = vmatpush1.bf16.msra.mxu0 0
        %704 = vmatprep.subr.bf16.mxu0 0
        %705 = vmatpush1.bf16.msra.mxu0 0
        %706 = vmatprep.subr.bf16.mxu0 0
        %707 = vmatpush1.bf16.msra.mxu0 0
        %708 = vmatprep.subr.bf16.mxu0 0
        %709 = vmatpush1.bf16.msra.mxu0 0
        %710 = vmatprep.subr.bf16.mxu0 0
        %711 = vmatpush1.bf16.msra.mxu0 0
        %712 = vmatprep.subr.bf16.mxu0 0
        %713 = vmatpush1.bf16.msra.mxu0 %v696
        %714 = vmatprep.subr.bf16.mxu0 0
        %715 = vmatpush2.bf16.msra.mxu0 0
        %716 = vmatprep.subr.bf16.mxu0 0
        %717 = vmatpush2.bf16.msra.mxu0 0
        %718 = vmatprep.subr.bf16.mxu0 0
        %719 = vmatpush2.bf16.msra.mxu0 0
        %720 = vmatprep.subr.bf16.mxu0 0
        %721 = vmatpush2.bf16.msra.mxu0 0
        %722 = vmatprep.subr.bf16.mxu0 0
        %723 = vmatpush2.bf16.msra.mxu0 0
        %724 = vmatprep.subr.bf16.mxu0 0
        %725 = vmatpush2.bf16.msra.mxu0 0
        %726 = vmatprep.subr.bf16.mxu0 0
        %727 = vmatpush2.bf16.msra.mxu0 0
        %728 = vmatprep.subr.bf16.mxu0 0
        %729 = vmatpush2.bf16.msra.mxu0 0
        %730 = vmatprep.mubr.bf16.mxu0 0
        %731 = vmatmul.mubr.bf16.gmra.mxu0 %v647
        %v732 = vpop.f32.mrf.mxu0
        %v733 = vadd.f32 0.0, %v732
        %v734 = vpop.f32.mrf.mxu0
        %v735 = vpop.f32.mrf.mxu0
        %v736 = vadd.f32 0.0, %v735
        %v737 = vpop.f32.mrf.mxu0
        %738 = vmatprep.mubr.bf16.mxu0 0
        %739 = vmatmul.mubr.bf16.gmra.mxu0 %v650
        %v740 = vpop.f32.mrf.mxu0
        %v741 = vadd.f32 0.0, %v740
        %v742 = vpop.f32.mrf.mxu0
        %v743 = vpop.f32.mrf.mxu0
        %v744 = vadd.f32 0.0, %v743
        %v745 = vpop.f32.mrf.mxu0
        %746 = vmatprep.mubr.bf16.mxu0 0
        %747 = vmatmul.mubr.bf16.gmra.mxu0 %v653
        %v748 = vpop.f32.mrf.mxu0
        %v749 = vadd.f32 0.0, %v748
        %v750 = vpop.f32.mrf.mxu0
        %v751 = vpop.f32.mrf.mxu0
        %v752 = vadd.f32 0.0, %v751
        %v753 = vpop.f32.mrf.mxu0
        %754 = vmatprep.mubr.bf16.mxu0 0
        %755 = vmatmul.mubr.bf16.gmra.mxu0 %v656
        %v756 = vpop.f32.mrf.mxu0
        %v757 = vadd.f32 0.0, %v756
        %v758 = vpop.f32.mrf.mxu0
        %v759 = vpop.f32.mrf.mxu0
        %v760 = vadd.f32 0.0, %v759
        %v761 = vpop.f32.mrf.mxu0
        %762 = vmatprep.mubr.bf16.mxu0 0
        %763 = vmatmul.mubr.bf16.gmra.mxu0 %v659
        %v764 = vpop.f32.mrf.mxu0
        %v765 = vadd.f32 0.0, %v764
        %v766 = vpop.f32.mrf.mxu0
        %v767 = vpop.f32.mrf.mxu0
        %v768 = vadd.f32 0.0, %v767
        %v769 = vpop.f32.mrf.mxu0
        %770 = vmatprep.mubr.bf16.mxu0 0
        %771 = vmatmul.mubr.bf16.gmra.mxu0 %v662
        %v772 = vpop.f32.mrf.mxu0
        %v773 = vadd.f32 0.0, %v772
        %v774 = vpop.f32.mrf.mxu0
        %v775 = vpop.f32.mrf.mxu0
        %v776 = vadd.f32 0.0, %v775
        %v777 = vpop.f32.mrf.mxu0
        %778 = vmatprep.mubr.bf16.mxu0 0
        %779 = vmatmul.mubr.bf16.gmra.mxu0 %v665
        %v780 = vpop.f32.mrf.mxu0
        %v781 = vadd.f32 0.0, %v780
        %v782 = vpop.f32.mrf.mxu0
        %v783 = vpop.f32.mrf.mxu0
        %v784 = vadd.f32 0.0, %v783
        %v785 = vpop.f32.mrf.mxu0
        %786 = vmatprep.mubr.bf16.mxu0 0
        %787 = vmatmul.mubr.bf16.gmra.mxu0 %v668
        %v788 = vpop.f32.mrf.mxu0
        %v789 = vadd.f32 0.0, %v788
        %v790 = vpop.f32.mrf.mxu0
        %v791 = vpop.f32.mrf.mxu0
        %v792 = vadd.f32 0.0, %v791
        %v793 = vpop.f32.mrf.mxu0
        %794 = vmatprep.mubr.bf16.mxu0 0
        %795 = vmatmul.mubr.bf16.gmra.mxu0 %v671
        %v796 = vpop.f32.mrf.mxu0
        %v797 = vadd.f32 0.0, %v796
        %v798 = vpop.f32.mrf.mxu0
        %v799 = vpop.f32.mrf.mxu0
        %v800 = vadd.f32 0.0, %v799
        %v801 = vpop.f32.mrf.mxu0
        %802 = vmatprep.mubr.bf16.mxu0 0
        %803 = vmatmul.mubr.bf16.gmra.mxu0 %v674
        %v804 = vpop.f32.mrf.mxu0
        %v805 = vadd.f32 0.0, %v804
        %v806 = vpop.f32.mrf.mxu0
        %v807 = vpop.f32.mrf.mxu0
        %v808 = vadd.f32 0.0, %v807
        %v809 = vpop.f32.mrf.mxu0
        %810 = vmatprep.mubr.bf16.mxu0 0
        %811 = vmatmul.mubr.bf16.gmra.mxu0 %v677
        %v812 = vpop.f32.mrf.mxu0
        %v813 = vadd.f32 0.0, %v812
        %v814 = vpop.f32.mrf.mxu0
        %v815 = vpop.f32.mrf.mxu0
        %v816 = vadd.f32 0.0, %v815
        %v817 = vpop.f32.mrf.mxu0
        %818 = vmatprep.mubr.bf16.mxu0 0
        %819 = vmatmul.mubr.bf16.gmra.mxu0 %v680
        %v820 = vpop.f32.mrf.mxu0
        %v821 = vadd.f32 0.0, %v820
        %v822 = vpop.f32.mrf.mxu0
        %v823 = vpop.f32.mrf.mxu0
        %v824 = vadd.f32 0.0, %v823
        %v825 = vpop.f32.mrf.mxu0
        %826 = vmatprep.mubr.bf16.mxu0 0
        %827 = vmatmul.mubr.bf16.gmra.mxu0 %v683
        %v828 = vpop.f32.mrf.mxu0
        %v829 = vadd.f32 0.0, %v828
        %v830 = vpop.f32.mrf.mxu0
        %v831 = vpop.f32.mrf.mxu0
        %v832 = vadd.f32 0.0, %v831
        %v833 = vpop.f32.mrf.mxu0
        %834 = vmatprep.mubr.bf16.mxu0 0
        %835 = vmatmul.mubr.bf16.gmra.mxu0 %v686
        %v836 = vpop.f32.mrf.mxu0
        %v837 = vadd.f32 0.0, %v836
        %v838 = vpop.f32.mrf.mxu0
        %v839 = vpop.f32.mrf.mxu0
        %v840 = vadd.f32 0.0, %v839
        %v841 = vpop.f32.mrf.mxu0
        %842 = vmatprep.mubr.bf16.mxu0 0
        %843 = vmatmul.mubr.bf16.gmra.mxu0 %v689
        %v844 = vpop.f32.mrf.mxu0
        %v845 = vadd.f32 0.0, %v844
        %v846 = vpop.f32.mrf.mxu0
        %v847 = vpop.f32.mrf.mxu0
        %v848 = vadd.f32 0.0, %v847
        %v849 = vpop.f32.mrf.mxu0
        %850 = vmatprep.mubr.bf16.mxu0 0
        %851 = vmatmul.mubr.bf16.gmra.mxu0 %v692
        %v852 = vpop.f32.mrf.mxu0
        %v853 = vadd.f32 0.0, %v852
        %v854 = vpop.f32.mrf.mxu0
        %v855 = vpop.f32.mrf.mxu0
        %v856 = vadd.f32 0.0, %v855
        %v857 = vpop.f32.mrf.mxu0
        %858 = vdwg.mxu0
        %v891 = vunpack.c.l.b16 %v159
        %v892 = vunpack.c.l.b16 %v160
        %v893 = vunpack.c.l.b16 %v162
        %v894 = vunpack.c.l.b16 %v163
        %v895 = vunpack.c.l.b16 %v165
        %v896 = vunpack.c.l.b16 %v166
        %v897 = vunpack.c.l.b16 %v168
        %v898 = vunpack.c.l.b16 %v169
        %v899 = vunpack.c.l.b16 %v171
        %v900 = vunpack.c.l.b16 %v172
        %v901 = vunpack.c.l.b16 %v174
        %v902 = vunpack.c.l.b16 %v175
        %v903 = vunpack.c.l.b16 %v177
        %v904 = vunpack.c.l.b16 %v178
        %v905 = vunpack.c.l.b16 %v180
        %v906 = vunpack.c.l.b16 %v181
        %v907 = vunpack.c.l.b16 %v183
        %v908 = vunpack.c.l.b16 %v184
        %v909 = vunpack.c.l.b16 %v186
        %v910 = vunpack.c.l.b16 %v187
        %v911 = vunpack.c.l.b16 %v189
        %v912 = vunpack.c.l.b16 %v190
        %v913 = vunpack.c.l.b16 %v192
        %v914 = vunpack.c.l.b16 %v193
        %v915 = vunpack.c.l.b16 %v195
        %v916 = vunpack.c.l.b16 %v196
        %v917 = vunpack.c.l.b16 %v198
        %v918 = vunpack.c.l.b16 %v199
        %v919 = vunpack.c.l.b16 %v201
        %v920 = vunpack.c.l.b16 %v202
        %v921 = vunpack.c.l.b16 %v204
        %v922 = vunpack.c.l.b16 %v205
        %v923 = vpack.c.b16 %v892, %v891
        %v924 = vpack.c.b16 %v894, %v893
        %v925 = vpack.c.b16 %v896, %v895
        %v926 = vpack.c.b16 %v898, %v897
        %v927 = vpack.c.b16 %v900, %v899
        %v928 = vpack.c.b16 %v902, %v901
        %v929 = vpack.c.b16 %v904, %v903
        %v930 = vpack.c.b16 %v906, %v905
        %v931 = vpack.c.b16 %v908, %v907
        %v932 = vpack.c.b16 %v910, %v909
        %v933 = vpack.c.b16 %v912, %v911
        %v934 = vpack.c.b16 %v914, %v913
        %v935 = vpack.c.b16 %v916, %v915
        %v936 = vpack.c.b16 %v918, %v917
        %v937 = vpack.c.b16 %v920, %v919
        %v938 = vpack.c.b16 %v922, %v921
        %v940 = vsel %vm645, %v923, 0
        %v943 = vsel %vm645, %v924, 0
        %v946 = vsel %vm645, %v925, 0
        %v949 = vsel %vm645, %v926, 0
        %v952 = vsel %vm645, %v927, 0
        %v955 = vsel %vm645, %v928, 0
        %v958 = vsel %vm645, %v929, 0
        %v961 = vsel %vm645, %v930, 0
        %v964 = vsel %vm645, %v931, 0
        %v967 = vsel %vm645, %v932, 0
        %v970 = vsel %vm645, %v933, 0
        %v973 = vsel %vm645, %v934, 0
        %v976 = vsel %vm645, %v935, 0
        %v979 = vsel %vm645, %v936, 0
        %v982 = vsel %vm645, %v937, 0
        %v985 = vsel %vm645, %v938, 0
        %v988 = vsel %vm694, %v207, 0
        %990 = vmatprep.subr.bf16.mxu0 0
        %991 = vmatpush1.bf16.msra.mxu0 0
        %992 = vmatprep.subr.bf16.mxu0 0
        %993 = vmatpush1.bf16.msra.mxu0 0
        %994 = vmatprep.subr.bf16.mxu0 0
        %995 = vmatpush1.bf16.msra.mxu0 0
        %996 = vmatprep.subr.bf16.mxu0 0
        %997 = vmatpush1.bf16.msra.mxu0 0
        %998 = vmatprep.subr.bf16.mxu0 0
        %999 = vmatpush1.bf16.msra.mxu0 0
        %1000 = vmatprep.subr.bf16.mxu0 0
        %1001 = vmatpush1.bf16.msra.mxu0 0
        %1002 = vmatprep.subr.bf16.mxu0 0
        %1003 = vmatpush1.bf16.msra.mxu0 0
        %1004 = vmatprep.subr.bf16.mxu0 0
        %1005 = vmatpush1.bf16.msra.mxu0 %v988
        %1006 = vmatprep.subr.bf16.mxu0 0
        %1007 = vmatpush2.bf16.msra.mxu0 0
        %1008 = vmatprep.subr.bf16.mxu0 0
        %1009 = vmatpush2.bf16.msra.mxu0 0
        %1010 = vmatprep.subr.bf16.mxu0 0
        %1011 = vmatpush2.bf16.msra.mxu0 0
        %1012 = vmatprep.subr.bf16.mxu0 0
        %1013 = vmatpush2.bf16.msra.mxu0 0
        %1014 = vmatprep.subr.bf16.mxu0 0
        %1015 = vmatpush2.bf16.msra.mxu0 0
        %1016 = vmatprep.subr.bf16.mxu0 0
        %1017 = vmatpush2.bf16.msra.mxu0 0
        %1018 = vmatprep.subr.bf16.mxu0 0
        %1019 = vmatpush2.bf16.msra.mxu0 0
        %1020 = vmatprep.subr.bf16.mxu0 0
        %1021 = vmatpush2.bf16.msra.mxu0 0
        %1022 = vmatprep.mubr.bf16.mxu0 0
        %1023 = vmatmul.mubr.bf16.gmra.mxu0 %v940
        %v1024 = vpop.f32.mrf.mxu0
        %v1025 = vadd.f32 %v733, %v1024
        %v1026 = vpop.f32.mrf.mxu0
        %v1027 = vpop.f32.mrf.mxu0
        %v1028 = vadd.f32 %v736, %v1027
        %v1029 = vpop.f32.mrf.mxu0
        %1030 = vmatprep.mubr.bf16.mxu0 0
        %1031 = vmatmul.mubr.bf16.gmra.mxu0 %v943
        %v1032 = vpop.f32.mrf.mxu0
        %v1033 = vadd.f32 %v741, %v1032
        %v1034 = vpop.f32.mrf.mxu0
        %v1035 = vpop.f32.mrf.mxu0
        %v1036 = vadd.f32 %v744, %v1035
        %v1037 = vpop.f32.mrf.mxu0
        %1038 = vmatprep.mubr.bf16.mxu0 0
        %1039 = vmatmul.mubr.bf16.gmra.mxu0 %v946
        %v1040 = vpop.f32.mrf.mxu0
        %v1041 = vadd.f32 %v749, %v1040
        %v1042 = vpop.f32.mrf.mxu0
        %v1043 = vpop.f32.mrf.mxu0
        %v1044 = vadd.f32 %v752, %v1043
        %v1045 = vpop.f32.mrf.mxu0
        %1046 = vmatprep.mubr.bf16.mxu0 0
        %1047 = vmatmul.mubr.bf16.gmra.mxu0 %v949
        %v1048 = vpop.f32.mrf.mxu0
        %v1049 = vadd.f32 %v757, %v1048
        %v1050 = vpop.f32.mrf.mxu0
        %v1051 = vpop.f32.mrf.mxu0
        %v1052 = vadd.f32 %v760, %v1051
        %v1053 = vpop.f32.mrf.mxu0
        %1054 = vmatprep.mubr.bf16.mxu0 0
        %1055 = vmatmul.mubr.bf16.gmra.mxu0 %v952
        %v1056 = vpop.f32.mrf.mxu0
        %v1057 = vadd.f32 %v765, %v1056
        %v1058 = vpop.f32.mrf.mxu0
        %v1059 = vpop.f32.mrf.mxu0
        %v1060 = vadd.f32 %v768, %v1059
        %v1061 = vpop.f32.mrf.mxu0
        %1062 = vmatprep.mubr.bf16.mxu0 0
        %1063 = vmatmul.mubr.bf16.gmra.mxu0 %v955
        %v1064 = vpop.f32.mrf.mxu0
        %v1065 = vadd.f32 %v773, %v1064
        %v1066 = vpop.f32.mrf.mxu0
        %v1067 = vpop.f32.mrf.mxu0
        %v1068 = vadd.f32 %v776, %v1067
        %v1069 = vpop.f32.mrf.mxu0
        %1070 = vmatprep.mubr.bf16.mxu0 0
        %1071 = vmatmul.mubr.bf16.gmra.mxu0 %v958
        %v1072 = vpop.f32.mrf.mxu0
        %v1073 = vadd.f32 %v781, %v1072
        %v1074 = vpop.f32.mrf.mxu0
        %v1075 = vpop.f32.mrf.mxu0
        %v1076 = vadd.f32 %v784, %v1075
        %v1077 = vpop.f32.mrf.mxu0
        %1078 = vmatprep.mubr.bf16.mxu0 0
        %1079 = vmatmul.mubr.bf16.gmra.mxu0 %v961
        %v1080 = vpop.f32.mrf.mxu0
        %v1081 = vadd.f32 %v789, %v1080
        %v1082 = vpop.f32.mrf.mxu0
        %v1083 = vpop.f32.mrf.mxu0
        %v1084 = vadd.f32 %v792, %v1083
        %v1085 = vpop.f32.mrf.mxu0
        %1086 = vmatprep.mubr.bf16.mxu0 0
        %1087 = vmatmul.mubr.bf16.gmra.mxu0 %v964
        %v1088 = vpop.f32.mrf.mxu0
        %v1089 = vadd.f32 %v797, %v1088
        %v1090 = vpop.f32.mrf.mxu0
        %v1091 = vpop.f32.mrf.mxu0
        %v1092 = vadd.f32 %v800, %v1091
        %v1093 = vpop.f32.mrf.mxu0
        %1094 = vmatprep.mubr.bf16.mxu0 0
        %1095 = vmatmul.mubr.bf16.gmra.mxu0 %v967
        %v1096 = vpop.f32.mrf.mxu0
        %v1097 = vadd.f32 %v805, %v1096
        %v1098 = vpop.f32.mrf.mxu0
        %v1099 = vpop.f32.mrf.mxu0
        %v1100 = vadd.f32 %v808, %v1099
        %v1101 = vpop.f32.mrf.mxu0
        %1102 = vmatprep.mubr.bf16.mxu0 0
        %1103 = vmatmul.mubr.bf16.gmra.mxu0 %v970
        %v1104 = vpop.f32.mrf.mxu0
        %v1105 = vadd.f32 %v813, %v1104
        %v1106 = vpop.f32.mrf.mxu0
        %v1107 = vpop.f32.mrf.mxu0
        %v1108 = vadd.f32 %v816, %v1107
        %v1109 = vpop.f32.mrf.mxu0
        %1110 = vmatprep.mubr.bf16.mxu0 0
        %1111 = vmatmul.mubr.bf16.gmra.mxu0 %v973
        %v1112 = vpop.f32.mrf.mxu0
        %v1113 = vadd.f32 %v821, %v1112
        %v1114 = vpop.f32.mrf.mxu0
        %v1115 = vpop.f32.mrf.mxu0
        %v1116 = vadd.f32 %v824, %v1115
        %v1117 = vpop.f32.mrf.mxu0
        %1118 = vmatprep.mubr.bf16.mxu0 0
        %1119 = vmatmul.mubr.bf16.gmra.mxu0 %v976
        %v1120 = vpop.f32.mrf.mxu0
        %v1121 = vadd.f32 %v829, %v1120
        %v1122 = vpop.f32.mrf.mxu0
        %v1123 = vpop.f32.mrf.mxu0
        %v1124 = vadd.f32 %v832, %v1123
        %v1125 = vpop.f32.mrf.mxu0
        %1126 = vmatprep.mubr.bf16.mxu0 0
        %1127 = vmatmul.mubr.bf16.gmra.mxu0 %v979
        %v1128 = vpop.f32.mrf.mxu0
        %v1129 = vadd.f32 %v837, %v1128
        %v1130 = vpop.f32.mrf.mxu0
        %v1131 = vpop.f32.mrf.mxu0
        %v1132 = vadd.f32 %v840, %v1131
        %v1133 = vpop.f32.mrf.mxu0
        %1134 = vmatprep.mubr.bf16.mxu0 0
        %1135 = vmatmul.mubr.bf16.gmra.mxu0 %v982
        %v1136 = vpop.f32.mrf.mxu0
        %v1137 = vadd.f32 %v845, %v1136
        %v1138 = vpop.f32.mrf.mxu0
        %v1139 = vpop.f32.mrf.mxu0
        %v1140 = vadd.f32 %v848, %v1139
        %v1141 = vpop.f32.mrf.mxu0
        %1142 = vmatprep.mubr.bf16.mxu0 0
        %1143 = vmatmul.mubr.bf16.gmra.mxu0 %v985
        %v1144 = vpop.f32.mrf.mxu0
        %v1145 = vadd.f32 %v853, %v1144
        %v1146 = vpop.f32.mrf.mxu0
        %v1147 = vpop.f32.mrf.mxu0
        %v1148 = vadd.f32 %v856, %v1147
        %v1149 = vpop.f32.mrf.mxu0
        %1150 = vdwg.mxu0
        %vm1167 = vcmask 1042432
        %vm1168 = vcmask 1046532
        %vm1169 = vmor %vm1167, %vm1168
        %v1170 = vrot.slane %v159, 5
        %v1171 = vrot.slane %v1170, 4
        %v1172 = vrot.slane %v160, 5
        %v1173 = vsel %vm1169, %v1171, %v1172
        %v1174 = vrot.slane %v1172, 4
        %v1175 = vrot.slane %v161, 5
        %v1176 = vsel %vm1169, %v1174, %v1175
        %v1177 = vrot.slane %v162, 5
        %v1178 = vrot.slane %v1177, 4
        %v1179 = vrot.slane %v163, 5
        %v1180 = vsel %vm1169, %v1178, %v1179
        %v1181 = vrot.slane %v1179, 4
        %v1182 = vrot.slane %v164, 5
        %v1183 = vsel %vm1169, %v1181, %v1182
        %v1184 = vrot.slane %v165, 5
        %v1185 = vrot.slane %v1184, 4
        %v1186 = vrot.slane %v166, 5
        %v1187 = vsel %vm1169, %v1185, %v1186
        %v1188 = vrot.slane %v1186, 4
        %v1189 = vrot.slane %v167, 5
        %v1190 = vsel %vm1169, %v1188, %v1189
        %v1191 = vrot.slane %v168, 5
        %v1192 = vrot.slane %v1191, 4
        %v1193 = vrot.slane %v169, 5
        %v1194 = vsel %vm1169, %v1192, %v1193
        %v1195 = vrot.slane %v1193, 4
        %v1196 = vrot.slane %v170, 5
        %v1197 = vsel %vm1169, %v1195, %v1196
        %v1198 = vrot.slane %v171, 5
        %v1199 = vrot.slane %v1198, 4
        %v1200 = vrot.slane %v172, 5
        %v1201 = vsel %vm1169, %v1199, %v1200
        %v1202 = vrot.slane %v1200, 4
        %v1203 = vrot.slane %v173, 5
        %v1204 = vsel %vm1169, %v1202, %v1203
        %v1205 = vrot.slane %v174, 5
        %v1206 = vrot.slane %v1205, 4
        %v1207 = vrot.slane %v175, 5
        %v1208 = vsel %vm1169, %v1206, %v1207
        %v1209 = vrot.slane %v1207, 4
        %v1210 = vrot.slane %v176, 5
        %v1211 = vsel %vm1169, %v1209, %v1210
        %v1212 = vrot.slane %v177, 5
        %v1213 = vrot.slane %v1212, 4
        %v1214 = vrot.slane %v178, 5
        %v1215 = vsel %vm1169, %v1213, %v1214
        %v1216 = vrot.slane %v1214, 4
        %v1217 = vrot.slane %v179, 5
        %v1218 = vsel %vm1169, %v1216, %v1217
        %v1219 = vrot.slane %v180, 5
        %v1220 = vrot.slane %v1219, 4
        %v1221 = vrot.slane %v181, 5
        %v1222 = vsel %vm1169, %v1220, %v1221
        %v1223 = vrot.slane %v1221, 4
        %v1224 = vrot.slane %v182, 5
        %v1225 = vsel %vm1169, %v1223, %v1224
        %v1226 = vrot.slane %v183, 5
        %v1227 = vrot.slane %v1226, 4
        %v1228 = vrot.slane %v184, 5
        %v1229 = vsel %vm1169, %v1227, %v1228
        %v1230 = vrot.slane %v1228, 4
        %v1231 = vrot.slane %v185, 5
        %v1232 = vsel %vm1169, %v1230, %v1231
        %v1233 = vrot.slane %v186, 5
        %v1234 = vrot.slane %v1233, 4
        %v1235 = vrot.slane %v187, 5
        %v1236 = vsel %vm1169, %v1234, %v1235
        %v1237 = vrot.slane %v1235, 4
        %v1238 = vrot.slane %v188, 5
        %v1239 = vsel %vm1169, %v1237, %v1238
        %v1240 = vrot.slane %v189, 5
        %v1241 = vrot.slane %v1240, 4
        %v1242 = vrot.slane %v190, 5
        %v1243 = vsel %vm1169, %v1241, %v1242
        %v1244 = vrot.slane %v1242, 4
        %v1245 = vrot.slane %v191, 5
        %v1246 = vsel %vm1169, %v1244, %v1245
        %v1247 = vrot.slane %v192, 5
        %v1248 = vrot.slane %v1247, 4
        %v1249 = vrot.slane %v193, 5
        %v1250 = vsel %vm1169, %v1248, %v1249
        %v1251 = vrot.slane %v1249, 4
        %v1252 = vrot.slane %v194, 5
        %v1253 = vsel %vm1169, %v1251, %v1252
        %v1254 = vrot.slane %v195, 5
        %v1255 = vrot.slane %v1254, 4
        %v1256 = vrot.slane %v196, 5
        %v1257 = vsel %vm1169, %v1255, %v1256
        %v1258 = vrot.slane %v1256, 4
        %v1259 = vrot.slane %v197, 5
        %v1260 = vsel %vm1169, %v1258, %v1259
        %v1261 = vrot.slane %v198, 5
        %v1262 = vrot.slane %v1261, 4
        %v1263 = vrot.slane %v199, 5
        %v1264 = vsel %vm1169, %v1262, %v1263
        %v1265 = vrot.slane %v1263, 4
        %v1266 = vrot.slane %v200, 5
        %v1267 = vsel %vm1169, %v1265, %v1266
        %v1268 = vrot.slane %v201, 5
        %v1269 = vrot.slane %v1268, 4
        %v1270 = vrot.slane %v202, 5
        %v1271 = vsel %vm1169, %v1269, %v1270
        %v1272 = vrot.slane %v1270, 4
        %v1273 = vrot.slane %v203, 5
        %v1274 = vsel %vm1169, %v1272, %v1273
        %v1275 = vrot.slane %v204, 5
        %v1276 = vrot.slane %v1275, 4
        %v1277 = vrot.slane %v205, 5
        %v1278 = vsel %vm1169, %v1276, %v1277
        %v1279 = vrot.slane %v1277, 4
        %v1280 = vrot.slane %v206, 5
        %v1281 = vsel %vm1169, %v1279, %v1280
        %s1282 = scalar_lea.vmem %s1, 4
        %v1283 = vld [vmem:[%s1282] sm:$0x3]
        %v1284 = vunpack.c.l.b16 %v1173
        %v1285 = vunpack.c.l.b16 %v1176
        %v1286 = vunpack.c.l.b16 %v1180
        %v1287 = vunpack.c.l.b16 %v1183
        %v1288 = vunpack.c.l.b16 %v1187
        %v1289 = vunpack.c.l.b16 %v1190
        %v1290 = vunpack.c.l.b16 %v1194
        %v1291 = vunpack.c.l.b16 %v1197
        %v1292 = vunpack.c.l.b16 %v1201
        %v1293 = vunpack.c.l.b16 %v1204
        %v1294 = vunpack.c.l.b16 %v1208
        %v1295 = vunpack.c.l.b16 %v1211
        %v1296 = vunpack.c.l.b16 %v1215
        %v1297 = vunpack.c.l.b16 %v1218
        %v1298 = vunpack.c.l.b16 %v1222
        %v1299 = vunpack.c.l.b16 %v1225
        %v1300 = vunpack.c.l.b16 %v1229
        %v1301 = vunpack.c.l.b16 %v1232
        %v1302 = vunpack.c.l.b16 %v1236
        %v1303 = vunpack.c.l.b16 %v1239
        %v1304 = vunpack.c.l.b16 %v1243
        %v1305 = vunpack.c.l.b16 %v1246
        %v1306 = vunpack.c.l.b16 %v1250
        %v1307 = vunpack.c.l.b16 %v1253
        %v1308 = vunpack.c.l.b16 %v1257
        %v1309 = vunpack.c.l.b16 %v1260
        %v1310 = vunpack.c.l.b16 %v1264
        %v1311 = vunpack.c.l.b16 %v1267
        %v1312 = vunpack.c.l.b16 %v1271
        %v1313 = vunpack.c.l.b16 %v1274
        %v1314 = vunpack.c.l.b16 %v1278
        %v1315 = vunpack.c.l.b16 %v1281
        %v1316 = vpack.c.b16 %v1285, %v1284
        %v1317 = vpack.c.b16 %v1287, %v1286
        %v1318 = vpack.c.b16 %v1289, %v1288
        %v1319 = vpack.c.b16 %v1291, %v1290
        %v1320 = vpack.c.b16 %v1293, %v1292
        %v1321 = vpack.c.b16 %v1295, %v1294
        %v1322 = vpack.c.b16 %v1297, %v1296
        %v1323 = vpack.c.b16 %v1299, %v1298
        %v1324 = vpack.c.b16 %v1301, %v1300
        %v1325 = vpack.c.b16 %v1303, %v1302
        %v1326 = vpack.c.b16 %v1305, %v1304
        %v1327 = vpack.c.b16 %v1307, %v1306
        %v1328 = vpack.c.b16 %v1309, %v1308
        %v1329 = vpack.c.b16 %v1311, %v1310
        %v1330 = vpack.c.b16 %v1313, %v1312
        %v1331 = vpack.c.b16 %v1315, %v1314
        %v1333 = vsel %vm645, %v1316, 0
        %v1336 = vsel %vm645, %v1317, 0
        %v1339 = vsel %vm645, %v1318, 0
        %v1342 = vsel %vm645, %v1319, 0
        %v1345 = vsel %vm645, %v1320, 0
        %v1348 = vsel %vm645, %v1321, 0
        %v1351 = vsel %vm645, %v1322, 0
        %v1354 = vsel %vm645, %v1323, 0
        %v1357 = vsel %vm645, %v1324, 0
        %v1360 = vsel %vm645, %v1325, 0
        %v1363 = vsel %vm645, %v1326, 0
        %v1366 = vsel %vm645, %v1327, 0
        %v1369 = vsel %vm645, %v1328, 0
        %v1372 = vsel %vm645, %v1329, 0
        %v1375 = vsel %vm645, %v1330, 0
        %v1378 = vsel %vm645, %v1331, 0
        %v1381 = vsel %vm694, %v1283, 0
        %1383 = vmatprep.subr.bf16.mxu0 0
        %1384 = vmatpush1.bf16.msra.mxu0 0
        %1385 = vmatprep.subr.bf16.mxu0 0
        %1386 = vmatpush1.bf16.msra.mxu0 0
        %1387 = vmatprep.subr.bf16.mxu0 0
        %1388 = vmatpush1.bf16.msra.mxu0 0
        %1389 = vmatprep.subr.bf16.mxu0 0
        %1390 = vmatpush1.bf16.msra.mxu0 0
        %1391 = vmatprep.subr.bf16.mxu0 0
        %1392 = vmatpush1.bf16.msra.mxu0 0
        %1393 = vmatprep.subr.bf16.mxu0 0
        %1394 = vmatpush1.bf16.msra.mxu0 0
        %1395 = vmatprep.subr.bf16.mxu0 0
        %1396 = vmatpush1.bf16.msra.mxu0 0
        %1397 = vmatprep.subr.bf16.mxu0 0
        %1398 = vmatpush1.bf16.msra.mxu0 %v1381
        %1399 = vmatprep.subr.bf16.mxu0 0
        %1400 = vmatpush2.bf16.msra.mxu0 0
        %1401 = vmatprep.subr.bf16.mxu0 0
        %1402 = vmatpush2.bf16.msra.mxu0 0
        %1403 = vmatprep.subr.bf16.mxu0 0
        %1404 = vmatpush2.bf16.msra.mxu0 0
        %1405 = vmatprep.subr.bf16.mxu0 0
        %1406 = vmatpush2.bf16.msra.mxu0 0
        %1407 = vmatprep.subr.bf16.mxu0 0
        %1408 = vmatpush2.bf16.msra.mxu0 0
        %1409 = vmatprep.subr.bf16.mxu0 0
        %1410 = vmatpush2.bf16.msra.mxu0 0
        %1411 = vmatprep.subr.bf16.mxu0 0
        %1412 = vmatpush2.bf16.msra.mxu0 0
        %1413 = vmatprep.subr.bf16.mxu0 0
        %1414 = vmatpush2.bf16.msra.mxu0 0
        %1415 = vmatprep.mubr.bf16.mxu0 0
        %1416 = vmatmul.mubr.bf16.gmra.mxu0 %v1333
        %v1417 = vpop.f32.mrf.mxu0
        %v1418 = vadd.f32 0.0, %v1417
        %v1419 = vpop.f32.mrf.mxu0
        %v1420 = vpop.f32.mrf.mxu0
        %v1421 = vadd.f32 0.0, %v1420
        %v1422 = vpop.f32.mrf.mxu0
        %1423 = vmatprep.mubr.bf16.mxu0 0
        %1424 = vmatmul.mubr.bf16.gmra.mxu0 %v1336
        %v1425 = vpop.f32.mrf.mxu0
        %v1426 = vadd.f32 0.0, %v1425
        %v1427 = vpop.f32.mrf.mxu0
        %v1428 = vpop.f32.mrf.mxu0
        %v1429 = vadd.f32 0.0, %v1428
        %v1430 = vpop.f32.mrf.mxu0
        %1431 = vmatprep.mubr.bf16.mxu0 0
        %1432 = vmatmul.mubr.bf16.gmra.mxu0 %v1339
        %v1433 = vpop.f32.mrf.mxu0
        %v1434 = vadd.f32 0.0, %v1433
        %v1435 = vpop.f32.mrf.mxu0
        %v1436 = vpop.f32.mrf.mxu0
        %v1437 = vadd.f32 0.0, %v1436
        %v1438 = vpop.f32.mrf.mxu0
        %1439 = vmatprep.mubr.bf16.mxu0 0
        %1440 = vmatmul.mubr.bf16.gmra.mxu0 %v1342
        %v1441 = vpop.f32.mrf.mxu0
        %v1442 = vadd.f32 0.0, %v1441
        %v1443 = vpop.f32.mrf.mxu0
        %v1444 = vpop.f32.mrf.mxu0
        %v1445 = vadd.f32 0.0, %v1444
        %v1446 = vpop.f32.mrf.mxu0
        %1447 = vmatprep.mubr.bf16.mxu0 0
        %1448 = vmatmul.mubr.bf16.gmra.mxu0 %v1345
        %v1449 = vpop.f32.mrf.mxu0
        %v1450 = vadd.f32 0.0, %v1449
        %v1451 = vpop.f32.mrf.mxu0
        %v1452 = vpop.f32.mrf.mxu0
        %v1453 = vadd.f32 0.0, %v1452
        %v1454 = vpop.f32.mrf.mxu0
        %1455 = vmatprep.mubr.bf16.mxu0 0
        %1456 = vmatmul.mubr.bf16.gmra.mxu0 %v1348
        %v1457 = vpop.f32.mrf.mxu0
        %v1458 = vadd.f32 0.0, %v1457
        %v1459 = vpop.f32.mrf.mxu0
        %v1460 = vpop.f32.mrf.mxu0
        %v1461 = vadd.f32 0.0, %v1460
        %v1462 = vpop.f32.mrf.mxu0
        %1463 = vmatprep.mubr.bf16.mxu0 0
        %1464 = vmatmul.mubr.bf16.gmra.mxu0 %v1351
        %v1465 = vpop.f32.mrf.mxu0
        %v1466 = vadd.f32 0.0, %v1465
        %v1467 = vpop.f32.mrf.mxu0
        %v1468 = vpop.f32.mrf.mxu0
        %v1469 = vadd.f32 0.0, %v1468
        %v1470 = vpop.f32.mrf.mxu0
        %1471 = vmatprep.mubr.bf16.mxu0 0
        %1472 = vmatmul.mubr.bf16.gmra.mxu0 %v1354
        %v1473 = vpop.f32.mrf.mxu0
        %v1474 = vadd.f32 0.0, %v1473
        %v1475 = vpop.f32.mrf.mxu0
        %v1476 = vpop.f32.mrf.mxu0
        %v1477 = vadd.f32 0.0, %v1476
        %v1478 = vpop.f32.mrf.mxu0
        %1479 = vmatprep.mubr.bf16.mxu0 0
        %1480 = vmatmul.mubr.bf16.gmra.mxu0 %v1357
        %v1481 = vpop.f32.mrf.mxu0
        %v1482 = vadd.f32 0.0, %v1481
        %v1483 = vpop.f32.mrf.mxu0
        %v1484 = vpop.f32.mrf.mxu0
        %v1485 = vadd.f32 0.0, %v1484
        %v1486 = vpop.f32.mrf.mxu0
        %1487 = vmatprep.mubr.bf16.mxu0 0
        %1488 = vmatmul.mubr.bf16.gmra.mxu0 %v1360
        %v1489 = vpop.f32.mrf.mxu0
        %v1490 = vadd.f32 0.0, %v1489
        %v1491 = vpop.f32.mrf.mxu0
        %v1492 = vpop.f32.mrf.mxu0
        %v1493 = vadd.f32 0.0, %v1492
        %v1494 = vpop.f32.mrf.mxu0
        %1495 = vmatprep.mubr.bf16.mxu0 0
        %1496 = vmatmul.mubr.bf16.gmra.mxu0 %v1363
        %v1497 = vpop.f32.mrf.mxu0
        %v1498 = vadd.f32 0.0, %v1497
        %v1499 = vpop.f32.mrf.mxu0
        %v1500 = vpop.f32.mrf.mxu0
        %v1501 = vadd.f32 0.0, %v1500
        %v1502 = vpop.f32.mrf.mxu0
        %1503 = vmatprep.mubr.bf16.mxu0 0
        %1504 = vmatmul.mubr.bf16.gmra.mxu0 %v1366
        %v1505 = vpop.f32.mrf.mxu0
        %v1506 = vadd.f32 0.0, %v1505
        %v1507 = vpop.f32.mrf.mxu0
        %v1508 = vpop.f32.mrf.mxu0
        %v1509 = vadd.f32 0.0, %v1508
        %v1510 = vpop.f32.mrf.mxu0
        %1511 = vmatprep.mubr.bf16.mxu0 0
        %1512 = vmatmul.mubr.bf16.gmra.mxu0 %v1369
        %v1513 = vpop.f32.mrf.mxu0
        %v1514 = vadd.f32 0.0, %v1513
        %v1515 = vpop.f32.mrf.mxu0
        %v1516 = vpop.f32.mrf.mxu0
        %v1517 = vadd.f32 0.0, %v1516
        %v1518 = vpop.f32.mrf.mxu0
        %1519 = vmatprep.mubr.bf16.mxu0 0
        %1520 = vmatmul.mubr.bf16.gmra.mxu0 %v1372
        %v1521 = vpop.f32.mrf.mxu0
        %v1522 = vadd.f32 0.0, %v1521
        %v1523 = vpop.f32.mrf.mxu0
        %v1524 = vpop.f32.mrf.mxu0
        %v1525 = vadd.f32 0.0, %v1524
        %v1526 = vpop.f32.mrf.mxu0
        %1527 = vmatprep.mubr.bf16.mxu0 0
        %1528 = vmatmul.mubr.bf16.gmra.mxu0 %v1375
        %v1529 = vpop.f32.mrf.mxu0
        %v1530 = vadd.f32 0.0, %v1529
        %v1531 = vpop.f32.mrf.mxu0
        %v1532 = vpop.f32.mrf.mxu0
        %v1533 = vadd.f32 0.0, %v1532
        %v1534 = vpop.f32.mrf.mxu0
        %1535 = vmatprep.mubr.bf16.mxu0 0
        %1536 = vmatmul.mubr.bf16.gmra.mxu0 %v1378
        %v1537 = vpop.f32.mrf.mxu0
        %v1538 = vadd.f32 0.0, %v1537
        %v1539 = vpop.f32.mrf.mxu0
        %v1540 = vpop.f32.mrf.mxu0
        %v1541 = vadd.f32 0.0, %v1540
        %v1542 = vpop.f32.mrf.mxu0
        %1543 = vdwg.mxu0
        %v1544 = vadd.f32 %v1025, %v1418
        %v1545 = vadd.f32 %v1028, %v1421
        %v1546 = vadd.f32 %v1033, %v1426
        %v1547 = vadd.f32 %v1036, %v1429
        %v1548 = vadd.f32 %v1041, %v1434
        %v1549 = vadd.f32 %v1044, %v1437
        %v1550 = vadd.f32 %v1049, %v1442
        %v1551 = vadd.f32 %v1052, %v1445
        %v1552 = vadd.f32 %v1057, %v1450
        %v1553 = vadd.f32 %v1060, %v1453
        %v1554 = vadd.f32 %v1065, %v1458
        %v1555 = vadd.f32 %v1068, %v1461
        %v1556 = vadd.f32 %v1073, %v1466
        %v1557 = vadd.f32 %v1076, %v1469
        %v1558 = vadd.f32 %v1081, %v1474
        %v1559 = vadd.f32 %v1084, %v1477
        %v1560 = vadd.f32 %v1089, %v1482
        %v1561 = vadd.f32 %v1092, %v1485
        %v1562 = vadd.f32 %v1097, %v1490
        %v1563 = vadd.f32 %v1100, %v1493
        %v1564 = vadd.f32 %v1105, %v1498
        %v1565 = vadd.f32 %v1108, %v1501
        %v1566 = vadd.f32 %v1113, %v1506
        %v1567 = vadd.f32 %v1116, %v1509
        %v1568 = vadd.f32 %v1121, %v1514
        %v1569 = vadd.f32 %v1124, %v1517
        %v1570 = vadd.f32 %v1129, %v1522
        %v1571 = vadd.f32 %v1132, %v1525
        %v1572 = vadd.f32 %v1137, %v1530
        %v1573 = vadd.f32 %v1140, %v1533
        %v1574 = vadd.f32 %v1145, %v1538
        %v1575 = vadd.f32 %v1148, %v1541
        %s1576 = sadd.s32 %s155, 1
        %s1577 = smul.u32 %s1576, 3
        %s1578 = smul.addr %s1577, 4
        %s1579 = scalar_lea.vmem %s153, %s1578
        %v1580 = vld [vmem:[%s1579] sm:$0xf]
        %v1581 = vld [vmem:[%s1579 + $0x4] sm:$0xf]
        %v1582 = vld [vmem:[%s1579 + $0x8] sm:$0x1]
        %v1583 = vld [vmem:[%s1579 + $0xc] sm:$0xf]
        %v1584 = vld [vmem:[%s1579 + $0x10] sm:$0xf]
        %v1585 = vld [vmem:[%s1579 + $0x14] sm:$0x1]
        %v1586 = vld [vmem:[%s1579 + $0x18] sm:$0xf]
        %v1587 = vld [vmem:[%s1579 + $0x1c] sm:$0xf]
        %v1588 = vld [vmem:[%s1579 + $0x20] sm:$0x1]
        %v1589 = vld [vmem:[%s1579 + $0x24] sm:$0xf]
        %v1590 = vld [vmem:[%s1579 + $0x28] sm:$0xf]
        %v1591 = vld [vmem:[%s1579 + $0x2c] sm:$0x1]
        %v1592 = vld [vmem:[%s1579 + $0x30] sm:$0xf]
        %v1593 = vld [vmem:[%s1579 + $0x34] sm:$0xf]
        %v1594 = vld [vmem:[%s1579 + $0x38] sm:$0x1]
        %v1595 = vld [vmem:[%s1579 + $0x3c] sm:$0xf]
        %v1596 = vld [vmem:[%s1579 + $0x40] sm:$0xf]
        %v1597 = vld [vmem:[%s1579 + $0x44] sm:$0x1]
        %v1598 = vld [vmem:[%s1579 + $0x48] sm:$0xf]
        %v1599 = vld [vmem:[%s1579 + $0x4c] sm:$0xf]
        %v1600 = vld [vmem:[%s1579 + $0x50] sm:$0x1]
        %v1601 = vld [vmem:[%s1579 + $0x54] sm:$0xf]
        %v1602 = vld [vmem:[%s1579 + $0x58] sm:$0xf]
        %v1603 = vld [vmem:[%s1579 + $0x5c] sm:$0x1]
        %v1604 = vld [vmem:[%s1579 + $0x60] sm:$0xf]
        %v1605 = vld [vmem:[%s1579 + $0x64] sm:$0xf]
        %v1606 = vld [vmem:[%s1579 + $0x68] sm:$0x1]
        %v1607 = vld [vmem:[%s1579 + $0x6c] sm:$0xf]
        %v1608 = vld [vmem:[%s1579 + $0x70] sm:$0xf]
        %v1609 = vld [vmem:[%s1579 + $0x74] sm:$0x1]
        %v1610 = vld [vmem:[%s1579 + $0x78] sm:$0xf]
        %v1611 = vld [vmem:[%s1579 + $0x7c] sm:$0xf]
        %v1612 = vld [vmem:[%s1579 + $0x80] sm:$0x1]
        %v1613 = vld [vmem:[%s1579 + $0x84] sm:$0xf]
        %v1614 = vld [vmem:[%s1579 + $0x88] sm:$0xf]
        %v1615 = vld [vmem:[%s1579 + $0x8c] sm:$0x1]
        %v1616 = vld [vmem:[%s1579 + $0x90] sm:$0xf]
        %v1617 = vld [vmem:[%s1579 + $0x94] sm:$0xf]
        %v1618 = vld [vmem:[%s1579 + $0x98] sm:$0x1]
        %v1619 = vld [vmem:[%s1579 + $0x9c] sm:$0xf]
        %v1620 = vld [vmem:[%s1579 + $0xa0] sm:$0xf]
        %v1621 = vld [vmem:[%s1579 + $0xa4] sm:$0x1]
        %v1622 = vld [vmem:[%s1579 + $0xa8] sm:$0xf]
        %v1623 = vld [vmem:[%s1579 + $0xac] sm:$0xf]
        %v1624 = vld [vmem:[%s1579 + $0xb0] sm:$0x1]
        %v1625 = vld [vmem:[%s1579 + $0xb4] sm:$0xf]
        %v1626 = vld [vmem:[%s1579 + $0xb8] sm:$0xf]
        %v1627 = vld [vmem:[%s1579 + $0xbc] sm:$0x1]
        %s1628 = scalar_lea.vmem %s1, 6
        %v1629 = vld [vmem:[%s1628] sm:$0x3]
        %v1662 = vunpack.c.l.b16 %v1580
        %v1663 = vunpack.c.l.b16 %v1581
        %v1664 = vunpack.c.l.b16 %v1583
        %v1665 = vunpack.c.l.b16 %v1584
        %v1666 = vunpack.c.l.b16 %v1586
        %v1667 = vunpack.c.l.b16 %v1587
        %v1668 = vunpack.c.l.b16 %v1589
        %v1669 = vunpack.c.l.b16 %v1590
        %v1670 = vunpack.c.l.b16 %v1592
        %v1671 = vunpack.c.l.b16 %v1593
        %v1672 = vunpack.c.l.b16 %v1595
        %v1673 = vunpack.c.l.b16 %v1596
        %v1674 = vunpack.c.l.b16 %v1598
        %v1675 = vunpack.c.l.b16 %v1599
        %v1676 = vunpack.c.l.b16 %v1601
        %v1677 = vunpack.c.l.b16 %v1602
        %v1678 = vunpack.c.l.b16 %v1604
        %v1679 = vunpack.c.l.b16 %v1605
        %v1680 = vunpack.c.l.b16 %v1607
        %v1681 = vunpack.c.l.b16 %v1608
        %v1682 = vunpack.c.l.b16 %v1610
        %v1683 = vunpack.c.l.b16 %v1611
        %v1684 = vunpack.c.l.b16 %v1613
        %v1685 = vunpack.c.l.b16 %v1614
        %v1686 = vunpack.c.l.b16 %v1616
        %v1687 = vunpack.c.l.b16 %v1617
        %v1688 = vunpack.c.l.b16 %v1619
        %v1689 = vunpack.c.l.b16 %v1620
        %v1690 = vunpack.c.l.b16 %v1622
        %v1691 = vunpack.c.l.b16 %v1623
        %v1692 = vunpack.c.l.b16 %v1625
        %v1693 = vunpack.c.l.b16 %v1626
        %v1694 = vpack.c.b16 %v1663, %v1662
        %v1695 = vpack.c.b16 %v1665, %v1664
        %v1696 = vpack.c.b16 %v1667, %v1666
        %v1697 = vpack.c.b16 %v1669, %v1668
        %v1698 = vpack.c.b16 %v1671, %v1670
        %v1699 = vpack.c.b16 %v1673, %v1672
        %v1700 = vpack.c.b16 %v1675, %v1674
        %v1701 = vpack.c.b16 %v1677, %v1676
        %v1702 = vpack.c.b16 %v1679, %v1678
        %v1703 = vpack.c.b16 %v1681, %v1680
        %v1704 = vpack.c.b16 %v1683, %v1682
        %v1705 = vpack.c.b16 %v1685, %v1684
        %v1706 = vpack.c.b16 %v1687, %v1686
        %v1707 = vpack.c.b16 %v1689, %v1688
        %v1708 = vpack.c.b16 %v1691, %v1690
        %v1709 = vpack.c.b16 %v1693, %v1692
        %v1711 = vsel %vm645, %v1694, 0
        %v1714 = vsel %vm645, %v1695, 0
        %v1717 = vsel %vm645, %v1696, 0
        %v1720 = vsel %vm645, %v1697, 0
        %v1723 = vsel %vm645, %v1698, 0
        %v1726 = vsel %vm645, %v1699, 0
        %v1729 = vsel %vm645, %v1700, 0
        %v1732 = vsel %vm645, %v1701, 0
        %v1735 = vsel %vm645, %v1702, 0
        %v1738 = vsel %vm645, %v1703, 0
        %v1741 = vsel %vm645, %v1704, 0
        %v1744 = vsel %vm645, %v1705, 0
        %v1747 = vsel %vm645, %v1706, 0
        %v1750 = vsel %vm645, %v1707, 0
        %v1753 = vsel %vm645, %v1708, 0
        %v1756 = vsel %vm645, %v1709, 0
        %v1759 = vsel %vm694, %v1629, 0
        %1761 = vmatprep.subr.bf16.mxu0 0
        %1762 = vmatpush1.bf16.msra.mxu0 0
        %1763 = vmatprep.subr.bf16.mxu0 0
        %1764 = vmatpush1.bf16.msra.mxu0 0
        %1765 = vmatprep.subr.bf16.mxu0 0
        %1766 = vmatpush1.bf16.msra.mxu0 0
        %1767 = vmatprep.subr.bf16.mxu0 0
        %1768 = vmatpush1.bf16.msra.mxu0 0
        %1769 = vmatprep.subr.bf16.mxu0 0
        %1770 = vmatpush1.bf16.msra.mxu0 0
        %1771 = vmatprep.subr.bf16.mxu0 0
        %1772 = vmatpush1.bf16.msra.mxu0 0
        %1773 = vmatprep.subr.bf16.mxu0 0
        %1774 = vmatpush1.bf16.msra.mxu0 0
        %1775 = vmatprep.subr.bf16.mxu0 0
        %1776 = vmatpush1.bf16.msra.mxu0 %v1759
        %1777 = vmatprep.subr.bf16.mxu0 0
        %1778 = vmatpush2.bf16.msra.mxu0 0
        %1779 = vmatprep.subr.bf16.mxu0 0
        %1780 = vmatpush2.bf16.msra.mxu0 0
        %1781 = vmatprep.subr.bf16.mxu0 0
        %1782 = vmatpush2.bf16.msra.mxu0 0
        %1783 = vmatprep.subr.bf16.mxu0 0
        %1784 = vmatpush2.bf16.msra.mxu0 0
        %1785 = vmatprep.subr.bf16.mxu0 0
        %1786 = vmatpush2.bf16.msra.mxu0 0
        %1787 = vmatprep.subr.bf16.mxu0 0
        %1788 = vmatpush2.bf16.msra.mxu0 0
        %1789 = vmatprep.subr.bf16.mxu0 0
        %1790 = vmatpush2.bf16.msra.mxu0 0
        %1791 = vmatprep.subr.bf16.mxu0 0
        %1792 = vmatpush2.bf16.msra.mxu0 0
        %1793 = vmatprep.mubr.bf16.mxu0 0
        %1794 = vmatmul.mubr.bf16.gmra.mxu0 %v1711
        %v1795 = vpop.f32.mrf.mxu0
        %v1796 = vadd.f32 0.0, %v1795
        %v1797 = vpop.f32.mrf.mxu0
        %v1798 = vpop.f32.mrf.mxu0
        %v1799 = vadd.f32 0.0, %v1798
        %v1800 = vpop.f32.mrf.mxu0
        %1801 = vmatprep.mubr.bf16.mxu0 0
        %1802 = vmatmul.mubr.bf16.gmra.mxu0 %v1714
        %v1803 = vpop.f32.mrf.mxu0
        %v1804 = vadd.f32 0.0, %v1803
        %v1805 = vpop.f32.mrf.mxu0
        %v1806 = vpop.f32.mrf.mxu0
        %v1807 = vadd.f32 0.0, %v1806
        %v1808 = vpop.f32.mrf.mxu0
        %1809 = vmatprep.mubr.bf16.mxu0 0
        %1810 = vmatmul.mubr.bf16.gmra.mxu0 %v1717
        %v1811 = vpop.f32.mrf.mxu0
        %v1812 = vadd.f32 0.0, %v1811
        %v1813 = vpop.f32.mrf.mxu0
        %v1814 = vpop.f32.mrf.mxu0
        %v1815 = vadd.f32 0.0, %v1814
        %v1816 = vpop.f32.mrf.mxu0
        %1817 = vmatprep.mubr.bf16.mxu0 0
        %1818 = vmatmul.mubr.bf16.gmra.mxu0 %v1720
        %v1819 = vpop.f32.mrf.mxu0
        %v1820 = vadd.f32 0.0, %v1819
        %v1821 = vpop.f32.mrf.mxu0
        %v1822 = vpop.f32.mrf.mxu0
        %v1823 = vadd.f32 0.0, %v1822
        %v1824 = vpop.f32.mrf.mxu0
        %1825 = vmatprep.mubr.bf16.mxu0 0
        %1826 = vmatmul.mubr.bf16.gmra.mxu0 %v1723
        %v1827 = vpop.f32.mrf.mxu0
        %v1828 = vadd.f32 0.0, %v1827
        %v1829 = vpop.f32.mrf.mxu0
        %v1830 = vpop.f32.mrf.mxu0
        %v1831 = vadd.f32 0.0, %v1830
        %v1832 = vpop.f32.mrf.mxu0
        %1833 = vmatprep.mubr.bf16.mxu0 0
        %1834 = vmatmul.mubr.bf16.gmra.mxu0 %v1726
        %v1835 = vpop.f32.mrf.mxu0
        %v1836 = vadd.f32 0.0, %v1835
        %v1837 = vpop.f32.mrf.mxu0
        %v1838 = vpop.f32.mrf.mxu0
        %v1839 = vadd.f32 0.0, %v1838
        %v1840 = vpop.f32.mrf.mxu0
        %1841 = vmatprep.mubr.bf16.mxu0 0
        %1842 = vmatmul.mubr.bf16.gmra.mxu0 %v1729
        %v1843 = vpop.f32.mrf.mxu0
        %v1844 = vadd.f32 0.0, %v1843
        %v1845 = vpop.f32.mrf.mxu0
        %v1846 = vpop.f32.mrf.mxu0
        %v1847 = vadd.f32 0.0, %v1846
        %v1848 = vpop.f32.mrf.mxu0
        %1849 = vmatprep.mubr.bf16.mxu0 0
        %1850 = vmatmul.mubr.bf16.gmra.mxu0 %v1732
        %v1851 = vpop.f32.mrf.mxu0
        %v1852 = vadd.f32 0.0, %v1851
        %v1853 = vpop.f32.mrf.mxu0
        %v1854 = vpop.f32.mrf.mxu0
        %v1855 = vadd.f32 0.0, %v1854
        %v1856 = vpop.f32.mrf.mxu0
        %1857 = vmatprep.mubr.bf16.mxu0 0
        %1858 = vmatmul.mubr.bf16.gmra.mxu0 %v1735
        %v1859 = vpop.f32.mrf.mxu0
        %v1860 = vadd.f32 0.0, %v1859
        %v1861 = vpop.f32.mrf.mxu0
        %v1862 = vpop.f32.mrf.mxu0
        %v1863 = vadd.f32 0.0, %v1862
        %v1864 = vpop.f32.mrf.mxu0
        %1865 = vmatprep.mubr.bf16.mxu0 0
        %1866 = vmatmul.mubr.bf16.gmra.mxu0 %v1738
        %v1867 = vpop.f32.mrf.mxu0
        %v1868 = vadd.f32 0.0, %v1867
        %v1869 = vpop.f32.mrf.mxu0
        %v1870 = vpop.f32.mrf.mxu0
        %v1871 = vadd.f32 0.0, %v1870
        %v1872 = vpop.f32.mrf.mxu0
        %1873 = vmatprep.mubr.bf16.mxu0 0
        %1874 = vmatmul.mubr.bf16.gmra.mxu0 %v1741
        %v1875 = vpop.f32.mrf.mxu0
        %v1876 = vadd.f32 0.0, %v1875
        %v1877 = vpop.f32.mrf.mxu0
        %v1878 = vpop.f32.mrf.mxu0
        %v1879 = vadd.f32 0.0, %v1878
        %v1880 = vpop.f32.mrf.mxu0
        %1881 = vmatprep.mubr.bf16.mxu0 0
        %1882 = vmatmul.mubr.bf16.gmra.mxu0 %v1744
        %v1883 = vpop.f32.mrf.mxu0
        %v1884 = vadd.f32 0.0, %v1883
        %v1885 = vpop.f32.mrf.mxu0
        %v1886 = vpop.f32.mrf.mxu0
        %v1887 = vadd.f32 0.0, %v1886
        %v1888 = vpop.f32.mrf.mxu0
        %1889 = vmatprep.mubr.bf16.mxu0 0
        %1890 = vmatmul.mubr.bf16.gmra.mxu0 %v1747
        %v1891 = vpop.f32.mrf.mxu0
        %v1892 = vadd.f32 0.0, %v1891
        %v1893 = vpop.f32.mrf.mxu0
        %v1894 = vpop.f32.mrf.mxu0
        %v1895 = vadd.f32 0.0, %v1894
        %v1896 = vpop.f32.mrf.mxu0
        %1897 = vmatprep.mubr.bf16.mxu0 0
        %1898 = vmatmul.mubr.bf16.gmra.mxu0 %v1750
        %v1899 = vpop.f32.mrf.mxu0
        %v1900 = vadd.f32 0.0, %v1899
        %v1901 = vpop.f32.mrf.mxu0
        %v1902 = vpop.f32.mrf.mxu0
        %v1903 = vadd.f32 0.0, %v1902
        %v1904 = vpop.f32.mrf.mxu0
        %1905 = vmatprep.mubr.bf16.mxu0 0
        %1906 = vmatmul.mubr.bf16.gmra.mxu0 %v1753
        %v1907 = vpop.f32.mrf.mxu0
        %v1908 = vadd.f32 0.0, %v1907
        %v1909 = vpop.f32.mrf.mxu0
        %v1910 = vpop.f32.mrf.mxu0
        %v1911 = vadd.f32 0.0, %v1910
        %v1912 = vpop.f32.mrf.mxu0
        %1913 = vmatprep.mubr.bf16.mxu0 0
        %1914 = vmatmul.mubr.bf16.gmra.mxu0 %v1756
        %v1915 = vpop.f32.mrf.mxu0
        %v1916 = vadd.f32 0.0, %v1915
        %v1917 = vpop.f32.mrf.mxu0
        %v1918 = vpop.f32.mrf.mxu0
        %v1919 = vadd.f32 0.0, %v1918
        %v1920 = vpop.f32.mrf.mxu0
        %1921 = vdwg.mxu0
        %v1922 = vadd.f32 %v1544, %v1796
        %v1923 = vadd.f32 %v1545, %v1799
        %v1924 = vadd.f32 %v1546, %v1804
        %v1925 = vadd.f32 %v1547, %v1807
        %v1926 = vadd.f32 %v1548, %v1812
        %v1927 = vadd.f32 %v1549, %v1815
        %v1928 = vadd.f32 %v1550, %v1820
        %v1929 = vadd.f32 %v1551, %v1823
        %v1930 = vadd.f32 %v1552, %v1828
        %v1931 = vadd.f32 %v1553, %v1831
        %v1932 = vadd.f32 %v1554, %v1836
        %v1933 = vadd.f32 %v1555, %v1839
        %v1934 = vadd.f32 %v1556, %v1844
        %v1935 = vadd.f32 %v1557, %v1847
        %v1936 = vadd.f32 %v1558, %v1852
        %v1937 = vadd.f32 %v1559, %v1855
        %v1938 = vadd.f32 %v1560, %v1860
        %v1939 = vadd.f32 %v1561, %v1863
        %v1940 = vadd.f32 %v1562, %v1868
        %v1941 = vadd.f32 %v1563, %v1871
        %v1942 = vadd.f32 %v1564, %v1876
        %v1943 = vadd.f32 %v1565, %v1879
        %v1944 = vadd.f32 %v1566, %v1884
        %v1945 = vadd.f32 %v1567, %v1887
        %v1946 = vadd.f32 %v1568, %v1892
        %v1947 = vadd.f32 %v1569, %v1895
        %v1948 = vadd.f32 %v1570, %v1900
        %v1949 = vadd.f32 %v1571, %v1903
        %v1950 = vadd.f32 %v1572, %v1908
        %v1951 = vadd.f32 %v1573, %v1911
        %v1952 = vadd.f32 %v1574, %v1916
        %v1953 = vadd.f32 %v1575, %v1919
        %v1955 = vshrl.u32 %v1580, 16
        %v1957 = vrot.slane %v1955, 4
        %v1958 = vshll.u32 %v1580, 16
        %v1960 = vrot.slane %v1958, 5
        %v1961 = vor.u32 %v1957, %v1960
        %v1962 = vrot.slane %v1961, 4
        %v1964 = vshll.u32 %v1581, 16
        %v1966 = vrot.slane %v1964, 5
        %v1967 = vsel %vm210, %v1962, %v1966
        %v1968 = vshrl.u32 %v1581, 16
        %v1970 = vrot.slane %v1968, 4
        %v1971 = vor.u32 %v1970, %v1966
        %v1972 = vrot.slane %v1971, 4
        %v1974 = vshll.u32 %v1582, 16
        %v1976 = vrot.slane %v1974, 5
        %v1977 = vsel %vm210, %v1972, %v1976
        %v1979 = vshrl.u32 %v1583, 16
        %v1981 = vrot.slane %v1979, 4
        %v1982 = vshll.u32 %v1583, 16
        %v1984 = vrot.slane %v1982, 5
        %v1985 = vor.u32 %v1981, %v1984
        %v1986 = vrot.slane %v1985, 4
        %v1988 = vshll.u32 %v1584, 16
        %v1990 = vrot.slane %v1988, 5
        %v1991 = vsel %vm210, %v1986, %v1990
        %v1992 = vshrl.u32 %v1584, 16
        %v1994 = vrot.slane %v1992, 4
        %v1995 = vor.u32 %v1994, %v1990
        %v1996 = vrot.slane %v1995, 4
        %v1998 = vshll.u32 %v1585, 16
        %v2000 = vrot.slane %v1998, 5
        %v2001 = vsel %vm210, %v1996, %v2000
        %v2003 = vshrl.u32 %v1586, 16
        %v2005 = vrot.slane %v2003, 4
        %v2006 = vshll.u32 %v1586, 16
        %v2008 = vrot.slane %v2006, 5
        %v2009 = vor.u32 %v2005, %v2008
        %v2010 = vrot.slane %v2009, 4
        %v2012 = vshll.u32 %v1587, 16
        %v2014 = vrot.slane %v2012, 5
        %v2015 = vsel %vm210, %v2010, %v2014
        %v2016 = vshrl.u32 %v1587, 16
        %v2018 = vrot.slane %v2016, 4
        %v2019 = vor.u32 %v2018, %v2014
        %v2020 = vrot.slane %v2019, 4
        %v2022 = vshll.u32 %v1588, 16
        %v2024 = vrot.slane %v2022, 5
        %v2025 = vsel %vm210, %v2020, %v2024
        %v2027 = vshrl.u32 %v1589, 16
        %v2029 = vrot.slane %v2027, 4
        %v2030 = vshll.u32 %v1589, 16
        %v2032 = vrot.slane %v2030, 5
        %v2033 = vor.u32 %v2029, %v2032
        %v2034 = vrot.slane %v2033, 4
        %v2036 = vshll.u32 %v1590, 16
        %v2038 = vrot.slane %v2036, 5
        %v2039 = vsel %vm210, %v2034, %v2038
        %v2040 = vshrl.u32 %v1590, 16
        %v2042 = vrot.slane %v2040, 4
        %v2043 = vor.u32 %v2042, %v2038
        %v2044 = vrot.slane %v2043, 4
        %v2046 = vshll.u32 %v1591, 16
        %v2048 = vrot.slane %v2046, 5
        %v2049 = vsel %vm210, %v2044, %v2048
        %v2051 = vshrl.u32 %v1592, 16
        %v2053 = vrot.slane %v2051, 4
        %v2054 = vshll.u32 %v1592, 16
        %v2056 = vrot.slane %v2054, 5
        %v2057 = vor.u32 %v2053, %v2056
        %v2058 = vrot.slane %v2057, 4
        %v2060 = vshll.u32 %v1593, 16
        %v2062 = vrot.slane %v2060, 5
        %v2063 = vsel %vm210, %v2058, %v2062
        %v2064 = vshrl.u32 %v1593, 16
        %v2066 = vrot.slane %v2064, 4
        %v2067 = vor.u32 %v2066, %v2062
        %v2068 = vrot.slane %v2067, 4
        %v2070 = vshll.u32 %v1594, 16
        %v2072 = vrot.slane %v2070, 5
        %v2073 = vsel %vm210, %v2068, %v2072
        %v2075 = vshrl.u32 %v1595, 16
        %v2077 = vrot.slane %v2075, 4
        %v2078 = vshll.u32 %v1595, 16
        %v2080 = vrot.slane %v2078, 5
        %v2081 = vor.u32 %v2077, %v2080
        %v2082 = vrot.slane %v2081, 4
        %v2084 = vshll.u32 %v1596, 16
        %v2086 = vrot.slane %v2084, 5
        %v2087 = vsel %vm210, %v2082, %v2086
        %v2088 = vshrl.u32 %v1596, 16
        %v2090 = vrot.slane %v2088, 4
        %v2091 = vor.u32 %v2090, %v2086
        %v2092 = vrot.slane %v2091, 4
        %v2094 = vshll.u32 %v1597, 16
        %v2096 = vrot.slane %v2094, 5
        %v2097 = vsel %vm210, %v2092, %v2096
        %v2099 = vshrl.u32 %v1598, 16
        %v2101 = vrot.slane %v2099, 4
        %v2102 = vshll.u32 %v1598, 16
        %v2104 = vrot.slane %v2102, 5
        %v2105 = vor.u32 %v2101, %v2104
        %v2106 = vrot.slane %v2105, 4
        %v2108 = vshll.u32 %v1599, 16
        %v2110 = vrot.slane %v2108, 5
        %v2111 = vsel %vm210, %v2106, %v2110
        %v2112 = vshrl.u32 %v1599, 16
        %v2114 = vrot.slane %v2112, 4
        %v2115 = vor.u32 %v2114, %v2110
        %v2116 = vrot.slane %v2115, 4
        %v2118 = vshll.u32 %v1600, 16
        %v2120 = vrot.slane %v2118, 5
        %v2121 = vsel %vm210, %v2116, %v2120
        %v2123 = vshrl.u32 %v1601, 16
        %v2125 = vrot.slane %v2123, 4
        %v2126 = vshll.u32 %v1601, 16
        %v2128 = vrot.slane %v2126, 5
        %v2129 = vor.u32 %v2125, %v2128
        %v2130 = vrot.slane %v2129, 4
        %v2132 = vshll.u32 %v1602, 16
        %v2134 = vrot.slane %v2132, 5
        %v2135 = vsel %vm210, %v2130, %v2134
        %v2136 = vshrl.u32 %v1602, 16
        %v2138 = vrot.slane %v2136, 4
        %v2139 = vor.u32 %v2138, %v2134
        %v2140 = vrot.slane %v2139, 4
        %v2142 = vshll.u32 %v1603, 16
        %v2144 = vrot.slane %v2142, 5
        %v2145 = vsel %vm210, %v2140, %v2144
        %v2147 = vshrl.u32 %v1604, 16
        %v2149 = vrot.slane %v2147, 4
        %v2150 = vshll.u32 %v1604, 16
        %v2152 = vrot.slane %v2150, 5
        %v2153 = vor.u32 %v2149, %v2152
        %v2154 = vrot.slane %v2153, 4
        %v2156 = vshll.u32 %v1605, 16
        %v2158 = vrot.slane %v2156, 5
        %v2159 = vsel %vm210, %v2154, %v2158
        %v2160 = vshrl.u32 %v1605, 16
        %v2162 = vrot.slane %v2160, 4
        %v2163 = vor.u32 %v2162, %v2158
        %v2164 = vrot.slane %v2163, 4
        %v2166 = vshll.u32 %v1606, 16
        %v2168 = vrot.slane %v2166, 5
        %v2169 = vsel %vm210, %v2164, %v2168
        %v2171 = vshrl.u32 %v1607, 16
        %v2173 = vrot.slane %v2171, 4
        %v2174 = vshll.u32 %v1607, 16
        %v2176 = vrot.slane %v2174, 5
        %v2177 = vor.u32 %v2173, %v2176
        %v2178 = vrot.slane %v2177, 4
        %v2180 = vshll.u32 %v1608, 16
        %v2182 = vrot.slane %v2180, 5
        %v2183 = vsel %vm210, %v2178, %v2182
        %v2184 = vshrl.u32 %v1608, 16
        %v2186 = vrot.slane %v2184, 4
        %v2187 = vor.u32 %v2186, %v2182
        %v2188 = vrot.slane %v2187, 4
        %v2190 = vshll.u32 %v1609, 16
        %v2192 = vrot.slane %v2190, 5
        %v2193 = vsel %vm210, %v2188, %v2192
        %v2195 = vshrl.u32 %v1610, 16
        %v2197 = vrot.slane %v2195, 4
        %v2198 = vshll.u32 %v1610, 16
        %v2200 = vrot.slane %v2198, 5
        %v2201 = vor.u32 %v2197, %v2200
        %v2202 = vrot.slane %v2201, 4
        %v2204 = vshll.u32 %v1611, 16
        %v2206 = vrot.slane %v2204, 5
        %v2207 = vsel %vm210, %v2202, %v2206
        %v2208 = vshrl.u32 %v1611, 16
        %v2210 = vrot.slane %v2208, 4
        %v2211 = vor.u32 %v2210, %v2206
        %v2212 = vrot.slane %v2211, 4
        %v2214 = vshll.u32 %v1612, 16
        %v2216 = vrot.slane %v2214, 5
        %v2217 = vsel %vm210, %v2212, %v2216
        %v2219 = vshrl.u32 %v1613, 16
        %v2221 = vrot.slane %v2219, 4
        %v2222 = vshll.u32 %v1613, 16
        %v2224 = vrot.slane %v2222, 5
        %v2225 = vor.u32 %v2221, %v2224
        %v2226 = vrot.slane %v2225, 4
        %v2228 = vshll.u32 %v1614, 16
        %v2230 = vrot.slane %v2228, 5
        %v2231 = vsel %vm210, %v2226, %v2230
        %v2232 = vshrl.u32 %v1614, 16
        %v2234 = vrot.slane %v2232, 4
        %v2235 = vor.u32 %v2234, %v2230
        %v2236 = vrot.slane %v2235, 4
        %v2238 = vshll.u32 %v1615, 16
        %v2240 = vrot.slane %v2238, 5
        %v2241 = vsel %vm210, %v2236, %v2240
        %v2243 = vshrl.u32 %v1616, 16
        %v2245 = vrot.slane %v2243, 4
        %v2246 = vshll.u32 %v1616, 16
        %v2248 = vrot.slane %v2246, 5
        %v2249 = vor.u32 %v2245, %v2248
        %v2250 = vrot.slane %v2249, 4
        %v2252 = vshll.u32 %v1617, 16
        %v2254 = vrot.slane %v2252, 5
        %v2255 = vsel %vm210, %v2250, %v2254
        %v2256 = vshrl.u32 %v1617, 16
        %v2258 = vrot.slane %v2256, 4
        %v2259 = vor.u32 %v2258, %v2254
        %v2260 = vrot.slane %v2259, 4
        %v2262 = vshll.u32 %v1618, 16
        %v2264 = vrot.slane %v2262, 5
        %v2265 = vsel %vm210, %v2260, %v2264
        %v2267 = vshrl.u32 %v1619, 16
        %v2269 = vrot.slane %v2267, 4
        %v2270 = vshll.u32 %v1619, 16
        %v2272 = vrot.slane %v2270, 5
        %v2273 = vor.u32 %v2269, %v2272
        %v2274 = vrot.slane %v2273, 4
        %v2276 = vshll.u32 %v1620, 16
        %v2278 = vrot.slane %v2276, 5
        %v2279 = vsel %vm210, %v2274, %v2278
        %v2280 = vshrl.u32 %v1620, 16
        %v2282 = vrot.slane %v2280, 4
        %v2283 = vor.u32 %v2282, %v2278
        %v2284 = vrot.slane %v2283, 4
        %v2286 = vshll.u32 %v1621, 16
        %v2288 = vrot.slane %v2286, 5
        %v2289 = vsel %vm210, %v2284, %v2288
        %v2291 = vshrl.u32 %v1622, 16
        %v2293 = vrot.slane %v2291, 4
        %v2294 = vshll.u32 %v1622, 16
        %v2296 = vrot.slane %v2294, 5
        %v2297 = vor.u32 %v2293, %v2296
        %v2298 = vrot.slane %v2297, 4
        %v2300 = vshll.u32 %v1623, 16
        %v2302 = vrot.slane %v2300, 5
        %v2303 = vsel %vm210, %v2298, %v2302
        %v2304 = vshrl.u32 %v1623, 16
        %v2306 = vrot.slane %v2304, 4
        %v2307 = vor.u32 %v2306, %v2302
        %v2308 = vrot.slane %v2307, 4
        %v2310 = vshll.u32 %v1624, 16
        %v2312 = vrot.slane %v2310, 5
        %v2313 = vsel %vm210, %v2308, %v2312
        %v2315 = vshrl.u32 %v1625, 16
        %v2317 = vrot.slane %v2315, 4
        %v2318 = vshll.u32 %v1625, 16
        %v2320 = vrot.slane %v2318, 5
        %v2321 = vor.u32 %v2317, %v2320
        %v2322 = vrot.slane %v2321, 4
        %v2324 = vshll.u32 %v1626, 16
        %v2326 = vrot.slane %v2324, 5
        %v2327 = vsel %vm210, %v2322, %v2326
        %v2328 = vshrl.u32 %v1626, 16
        %v2330 = vrot.slane %v2328, 4
        %v2331 = vor.u32 %v2330, %v2326
        %v2332 = vrot.slane %v2331, 4
        %v2334 = vshll.u32 %v1627, 16
        %v2336 = vrot.slane %v2334, 5
        %v2337 = vsel %vm210, %v2332, %v2336
        %s2338 = scalar_lea.vmem %s1, 8
        %v2339 = vld [vmem:[%s2338] sm:$0x3]
        %v2340 = vunpack.c.l.b16 %v1967
        %v2341 = vunpack.c.l.b16 %v1977
        %v2342 = vunpack.c.l.b16 %v1991
        %v2343 = vunpack.c.l.b16 %v2001
        %v2344 = vunpack.c.l.b16 %v2015
        %v2345 = vunpack.c.l.b16 %v2025
        %v2346 = vunpack.c.l.b16 %v2039
        %v2347 = vunpack.c.l.b16 %v2049
        %v2348 = vunpack.c.l.b16 %v2063
        %v2349 = vunpack.c.l.b16 %v2073
        %v2350 = vunpack.c.l.b16 %v2087
        %v2351 = vunpack.c.l.b16 %v2097
        %v2352 = vunpack.c.l.b16 %v2111
        %v2353 = vunpack.c.l.b16 %v2121
        %v2354 = vunpack.c.l.b16 %v2135
        %v2355 = vunpack.c.l.b16 %v2145
        %v2356 = vunpack.c.l.b16 %v2159
        %v2357 = vunpack.c.l.b16 %v2169
        %v2358 = vunpack.c.l.b16 %v2183
        %v2359 = vunpack.c.l.b16 %v2193
        %v2360 = vunpack.c.l.b16 %v2207
        %v2361 = vunpack.c.l.b16 %v2217
        %v2362 = vunpack.c.l.b16 %v2231
        %v2363 = vunpack.c.l.b16 %v2241
        %v2364 = vunpack.c.l.b16 %v2255
        %v2365 = vunpack.c.l.b16 %v2265
        %v2366 = vunpack.c.l.b16 %v2279
        %v2367 = vunpack.c.l.b16 %v2289
        %v2368 = vunpack.c.l.b16 %v2303
        %v2369 = vunpack.c.l.b16 %v2313
        %v2370 = vunpack.c.l.b16 %v2327
        %v2371 = vunpack.c.l.b16 %v2337
        %v2372 = vpack.c.b16 %v2341, %v2340
        %v2373 = vpack.c.b16 %v2343, %v2342
        %v2374 = vpack.c.b16 %v2345, %v2344
        %v2375 = vpack.c.b16 %v2347, %v2346
        %v2376 = vpack.c.b16 %v2349, %v2348
        %v2377 = vpack.c.b16 %v2351, %v2350
        %v2378 = vpack.c.b16 %v2353, %v2352
        %v2379 = vpack.c.b16 %v2355, %v2354
        %v2380 = vpack.c.b16 %v2357, %v2356
        %v2381 = vpack.c.b16 %v2359, %v2358
        %v2382 = vpack.c.b16 %v2361, %v2360
        %v2383 = vpack.c.b16 %v2363, %v2362
        %v2384 = vpack.c.b16 %v2365, %v2364
        %v2385 = vpack.c.b16 %v2367, %v2366
        %v2386 = vpack.c.b16 %v2369, %v2368
        %v2387 = vpack.c.b16 %v2371, %v2370
        %v2389 = vsel %vm645, %v2372, 0
        %v2392 = vsel %vm645, %v2373, 0
        %v2395 = vsel %vm645, %v2374, 0
        %v2398 = vsel %vm645, %v2375, 0
        %v2401 = vsel %vm645, %v2376, 0
        %v2404 = vsel %vm645, %v2377, 0
        %v2407 = vsel %vm645, %v2378, 0
        %v2410 = vsel %vm645, %v2379, 0
        %v2413 = vsel %vm645, %v2380, 0
        %v2416 = vsel %vm645, %v2381, 0
        %v2419 = vsel %vm645, %v2382, 0
        %v2422 = vsel %vm645, %v2383, 0
        %v2425 = vsel %vm645, %v2384, 0
        %v2428 = vsel %vm645, %v2385, 0
        %v2431 = vsel %vm645, %v2386, 0
        %v2434 = vsel %vm645, %v2387, 0
        %v2437 = vsel %vm694, %v2339, 0
        %2439 = vmatprep.subr.bf16.mxu0 0
        %2440 = vmatpush1.bf16.msra.mxu0 0
        %2441 = vmatprep.subr.bf16.mxu0 0
        %2442 = vmatpush1.bf16.msra.mxu0 0
        %2443 = vmatprep.subr.bf16.mxu0 0
        %2444 = vmatpush1.bf16.msra.mxu0 0
        %2445 = vmatprep.subr.bf16.mxu0 0
        %2446 = vmatpush1.bf16.msra.mxu0 0
        %2447 = vmatprep.subr.bf16.mxu0 0
        %2448 = vmatpush1.bf16.msra.mxu0 0
        %2449 = vmatprep.subr.bf16.mxu0 0
        %2450 = vmatpush1.bf16.msra.mxu0 0
        %2451 = vmatprep.subr.bf16.mxu0 0
        %2452 = vmatpush1.bf16.msra.mxu0 0
        %2453 = vmatprep.subr.bf16.mxu0 0
        %2454 = vmatpush1.bf16.msra.mxu0 %v2437
        %2455 = vmatprep.subr.bf16.mxu0 0
        %2456 = vmatpush2.bf16.msra.mxu0 0
        %2457 = vmatprep.subr.bf16.mxu0 0
        %2458 = vmatpush2.bf16.msra.mxu0 0
        %2459 = vmatprep.subr.bf16.mxu0 0
        %2460 = vmatpush2.bf16.msra.mxu0 0
        %2461 = vmatprep.subr.bf16.mxu0 0
        %2462 = vmatpush2.bf16.msra.mxu0 0
        %2463 = vmatprep.subr.bf16.mxu0 0
        %2464 = vmatpush2.bf16.msra.mxu0 0
        %2465 = vmatprep.subr.bf16.mxu0 0
        %2466 = vmatpush2.bf16.msra.mxu0 0
        %2467 = vmatprep.subr.bf16.mxu0 0
        %2468 = vmatpush2.bf16.msra.mxu0 0
        %2469 = vmatprep.subr.bf16.mxu0 0
        %2470 = vmatpush2.bf16.msra.mxu0 0
        %2471 = vmatprep.mubr.bf16.mxu0 0
        %2472 = vmatmul.mubr.bf16.gmra.mxu0 %v2389
        %v2473 = vpop.f32.mrf.mxu0
        %v2474 = vadd.f32 0.0, %v2473
        %v2475 = vpop.f32.mrf.mxu0
        %v2476 = vpop.f32.mrf.mxu0
        %v2477 = vadd.f32 0.0, %v2476
        %v2478 = vpop.f32.mrf.mxu0
        %2479 = vmatprep.mubr.bf16.mxu0 0
        %2480 = vmatmul.mubr.bf16.gmra.mxu0 %v2392
        %v2481 = vpop.f32.mrf.mxu0
        %v2482 = vadd.f32 0.0, %v2481
        %v2483 = vpop.f32.mrf.mxu0
        %v2484 = vpop.f32.mrf.mxu0
        %v2485 = vadd.f32 0.0, %v2484
        %v2486 = vpop.f32.mrf.mxu0
        %2487 = vmatprep.mubr.bf16.mxu0 0
        %2488 = vmatmul.mubr.bf16.gmra.mxu0 %v2395
        %v2489 = vpop.f32.mrf.mxu0
        %v2490 = vadd.f32 0.0, %v2489
        %v2491 = vpop.f32.mrf.mxu0
        %v2492 = vpop.f32.mrf.mxu0
        %v2493 = vadd.f32 0.0, %v2492
        %v2494 = vpop.f32.mrf.mxu0
        %2495 = vmatprep.mubr.bf16.mxu0 0
        %2496 = vmatmul.mubr.bf16.gmra.mxu0 %v2398
        %v2497 = vpop.f32.mrf.mxu0
        %v2498 = vadd.f32 0.0, %v2497
        %v2499 = vpop.f32.mrf.mxu0
        %v2500 = vpop.f32.mrf.mxu0
        %v2501 = vadd.f32 0.0, %v2500
        %v2502 = vpop.f32.mrf.mxu0
        %2503 = vmatprep.mubr.bf16.mxu0 0
        %2504 = vmatmul.mubr.bf16.gmra.mxu0 %v2401
        %v2505 = vpop.f32.mrf.mxu0
        %v2506 = vadd.f32 0.0, %v2505
        %v2507 = vpop.f32.mrf.mxu0
        %v2508 = vpop.f32.mrf.mxu0
        %v2509 = vadd.f32 0.0, %v2508
        %v2510 = vpop.f32.mrf.mxu0
        %2511 = vmatprep.mubr.bf16.mxu0 0
        %2512 = vmatmul.mubr.bf16.gmra.mxu0 %v2404
        %v2513 = vpop.f32.mrf.mxu0
        %v2514 = vadd.f32 0.0, %v2513
        %v2515 = vpop.f32.mrf.mxu0
        %v2516 = vpop.f32.mrf.mxu0
        %v2517 = vadd.f32 0.0, %v2516
        %v2518 = vpop.f32.mrf.mxu0
        %2519 = vmatprep.mubr.bf16.mxu0 0
        %2520 = vmatmul.mubr.bf16.gmra.mxu0 %v2407
        %v2521 = vpop.f32.mrf.mxu0
        %v2522 = vadd.f32 0.0, %v2521
        %v2523 = vpop.f32.mrf.mxu0
        %v2524 = vpop.f32.mrf.mxu0
        %v2525 = vadd.f32 0.0, %v2524
        %v2526 = vpop.f32.mrf.mxu0
        %2527 = vmatprep.mubr.bf16.mxu0 0
        %2528 = vmatmul.mubr.bf16.gmra.mxu0 %v2410
        %v2529 = vpop.f32.mrf.mxu0
        %v2530 = vadd.f32 0.0, %v2529
        %v2531 = vpop.f32.mrf.mxu0
        %v2532 = vpop.f32.mrf.mxu0
        %v2533 = vadd.f32 0.0, %v2532
        %v2534 = vpop.f32.mrf.mxu0
        %2535 = vmatprep.mubr.bf16.mxu0 0
        %2536 = vmatmul.mubr.bf16.gmra.mxu0 %v2413
        %v2537 = vpop.f32.mrf.mxu0
        %v2538 = vadd.f32 0.0, %v2537
        %v2539 = vpop.f32.mrf.mxu0
        %v2540 = vpop.f32.mrf.mxu0
        %v2541 = vadd.f32 0.0, %v2540
        %v2542 = vpop.f32.mrf.mxu0
        %2543 = vmatprep.mubr.bf16.mxu0 0
        %2544 = vmatmul.mubr.bf16.gmra.mxu0 %v2416
        %v2545 = vpop.f32.mrf.mxu0
        %v2546 = vadd.f32 0.0, %v2545
        %v2547 = vpop.f32.mrf.mxu0
        %v2548 = vpop.f32.mrf.mxu0
        %v2549 = vadd.f32 0.0, %v2548
        %v2550 = vpop.f32.mrf.mxu0
        %2551 = vmatprep.mubr.bf16.mxu0 0
        %2552 = vmatmul.mubr.bf16.gmra.mxu0 %v2419
        %v2553 = vpop.f32.mrf.mxu0
        %v2554 = vadd.f32 0.0, %v2553
        %v2555 = vpop.f32.mrf.mxu0
        %v2556 = vpop.f32.mrf.mxu0
        %v2557 = vadd.f32 0.0, %v2556
        %v2558 = vpop.f32.mrf.mxu0
        %2559 = vmatprep.mubr.bf16.mxu0 0
        %2560 = vmatmul.mubr.bf16.gmra.mxu0 %v2422
        %v2561 = vpop.f32.mrf.mxu0
        %v2562 = vadd.f32 0.0, %v2561
        %v2563 = vpop.f32.mrf.mxu0
        %v2564 = vpop.f32.mrf.mxu0
        %v2565 = vadd.f32 0.0, %v2564
        %v2566 = vpop.f32.mrf.mxu0
        %2567 = vmatprep.mubr.bf16.mxu0 0
        %2568 = vmatmul.mubr.bf16.gmra.mxu0 %v2425
        %v2569 = vpop.f32.mrf.mxu0
        %v2570 = vadd.f32 0.0, %v2569
        %v2571 = vpop.f32.mrf.mxu0
        %v2572 = vpop.f32.mrf.mxu0
        %v2573 = vadd.f32 0.0, %v2572
        %v2574 = vpop.f32.mrf.mxu0
        %2575 = vmatprep.mubr.bf16.mxu0 0
        %2576 = vmatmul.mubr.bf16.gmra.mxu0 %v2428
        %v2577 = vpop.f32.mrf.mxu0
        %v2578 = vadd.f32 0.0, %v2577
        %v2579 = vpop.f32.mrf.mxu0
        %v2580 = vpop.f32.mrf.mxu0
        %v2581 = vadd.f32 0.0, %v2580
        %v2582 = vpop.f32.mrf.mxu0
        %2583 = vmatprep.mubr.bf16.mxu0 0
        %2584 = vmatmul.mubr.bf16.gmra.mxu0 %v2431
        %v2585 = vpop.f32.mrf.mxu0
        %v2586 = vadd.f32 0.0, %v2585
        %v2587 = vpop.f32.mrf.mxu0
        %v2588 = vpop.f32.mrf.mxu0
        %v2589 = vadd.f32 0.0, %v2588
        %v2590 = vpop.f32.mrf.mxu0
        %2591 = vmatprep.mubr.bf16.mxu0 0
        %2592 = vmatmul.mubr.bf16.gmra.mxu0 %v2434
        %v2593 = vpop.f32.mrf.mxu0
        %v2594 = vadd.f32 0.0, %v2593
        %v2595 = vpop.f32.mrf.mxu0
        %v2596 = vpop.f32.mrf.mxu0
        %v2597 = vadd.f32 0.0, %v2596
        %v2598 = vpop.f32.mrf.mxu0
        %2599 = vdwg.mxu0
        %v2600 = vadd.f32 %v1922, %v2474
        %v2601 = vadd.f32 %v1923, %v2477
        %v2602 = vadd.f32 %v1924, %v2482
        %v2603 = vadd.f32 %v1925, %v2485
        %v2604 = vadd.f32 %v1926, %v2490
        %v2605 = vadd.f32 %v1927, %v2493
        %v2606 = vadd.f32 %v1928, %v2498
        %v2607 = vadd.f32 %v1929, %v2501
        %v2608 = vadd.f32 %v1930, %v2506
        %v2609 = vadd.f32 %v1931, %v2509
        %v2610 = vadd.f32 %v1932, %v2514
        %v2611 = vadd.f32 %v1933, %v2517
        %v2612 = vadd.f32 %v1934, %v2522
        %v2613 = vadd.f32 %v1935, %v2525
        %v2614 = vadd.f32 %v1936, %v2530
        %v2615 = vadd.f32 %v1937, %v2533
        %v2616 = vadd.f32 %v1938, %v2538
        %v2617 = vadd.f32 %v1939, %v2541
        %v2618 = vadd.f32 %v1940, %v2546
        %v2619 = vadd.f32 %v1941, %v2549
        %v2620 = vadd.f32 %v1942, %v2554
        %v2621 = vadd.f32 %v1943, %v2557
        %v2622 = vadd.f32 %v1944, %v2562
        %v2623 = vadd.f32 %v1945, %v2565
        %v2624 = vadd.f32 %v1946, %v2570
        %v2625 = vadd.f32 %v1947, %v2573
        %v2626 = vadd.f32 %v1948, %v2578
        %v2627 = vadd.f32 %v1949, %v2581
        %v2628 = vadd.f32 %v1950, %v2586
        %v2629 = vadd.f32 %v1951, %v2589
        %v2630 = vadd.f32 %v1952, %v2594
        %v2631 = vadd.f32 %v1953, %v2597
        %v2648 = vrot.slane %v1580, 5
        %v2649 = vrot.slane %v2648, 4
        %v2650 = vrot.slane %v1581, 5
        %v2651 = vsel %vm1169, %v2649, %v2650
        %v2652 = vrot.slane %v2650, 4
        %v2653 = vrot.slane %v1582, 5
        %v2654 = vsel %vm1169, %v2652, %v2653
        %v2655 = vrot.slane %v1583, 5
        %v2656 = vrot.slane %v2655, 4
        %v2657 = vrot.slane %v1584, 5
        %v2658 = vsel %vm1169, %v2656, %v2657
        %v2659 = vrot.slane %v2657, 4
        %v2660 = vrot.slane %v1585, 5
        %v2661 = vsel %vm1169, %v2659, %v2660
        %v2662 = vrot.slane %v1586, 5
        %v2663 = vrot.slane %v2662, 4
        %v2664 = vrot.slane %v1587, 5
        %v2665 = vsel %vm1169, %v2663, %v2664
        %v2666 = vrot.slane %v2664, 4
        %v2667 = vrot.slane %v1588, 5
        %v2668 = vsel %vm1169, %v2666, %v2667
        %v2669 = vrot.slane %v1589, 5
        %v2670 = vrot.slane %v2669, 4
        %v2671 = vrot.slane %v1590, 5
        %v2672 = vsel %vm1169, %v2670, %v2671
        %v2673 = vrot.slane %v2671, 4
        %v2674 = vrot.slane %v1591, 5
        %v2675 = vsel %vm1169, %v2673, %v2674
        %v2676 = vrot.slane %v1592, 5
        %v2677 = vrot.slane %v2676, 4
        %v2678 = vrot.slane %v1593, 5
        %v2679 = vsel %vm1169, %v2677, %v2678
        %v2680 = vrot.slane %v2678, 4
        %v2681 = vrot.slane %v1594, 5
        %v2682 = vsel %vm1169, %v2680, %v2681
        %v2683 = vrot.slane %v1595, 5
        %v2684 = vrot.slane %v2683, 4
        %v2685 = vrot.slane %v1596, 5
        %v2686 = vsel %vm1169, %v2684, %v2685
        %v2687 = vrot.slane %v2685, 4
        %v2688 = vrot.slane %v1597, 5
        %v2689 = vsel %vm1169, %v2687, %v2688
        %v2690 = vrot.slane %v1598, 5
        %v2691 = vrot.slane %v2690, 4
        %v2692 = vrot.slane %v1599, 5
        %v2693 = vsel %vm1169, %v2691, %v2692
        %v2694 = vrot.slane %v2692, 4
        %v2695 = vrot.slane %v1600, 5
        %v2696 = vsel %vm1169, %v2694, %v2695
        %v2697 = vrot.slane %v1601, 5
        %v2698 = vrot.slane %v2697, 4
        %v2699 = vrot.slane %v1602, 5
        %v2700 = vsel %vm1169, %v2698, %v2699
        %v2701 = vrot.slane %v2699, 4
        %v2702 = vrot.slane %v1603, 5
        %v2703 = vsel %vm1169, %v2701, %v2702
        %v2704 = vrot.slane %v1604, 5
        %v2705 = vrot.slane %v2704, 4
        %v2706 = vrot.slane %v1605, 5
        %v2707 = vsel %vm1169, %v2705, %v2706
        %v2708 = vrot.slane %v2706, 4
        %v2709 = vrot.slane %v1606, 5
        %v2710 = vsel %vm1169, %v2708, %v2709
        %v2711 = vrot.slane %v1607, 5
        %v2712 = vrot.slane %v2711, 4
        %v2713 = vrot.slane %v1608, 5
        %v2714 = vsel %vm1169, %v2712, %v2713
        %v2715 = vrot.slane %v2713, 4
        %v2716 = vrot.slane %v1609, 5
        %v2717 = vsel %vm1169, %v2715, %v2716
        %v2718 = vrot.slane %v1610, 5
        %v2719 = vrot.slane %v2718, 4
        %v2720 = vrot.slane %v1611, 5
        %v2721 = vsel %vm1169, %v2719, %v2720
        %v2722 = vrot.slane %v2720, 4
        %v2723 = vrot.slane %v1612, 5
        %v2724 = vsel %vm1169, %v2722, %v2723
        %v2725 = vrot.slane %v1613, 5
        %v2726 = vrot.slane %v2725, 4
        %v2727 = vrot.slane %v1614, 5
        %v2728 = vsel %vm1169, %v2726, %v2727
        %v2729 = vrot.slane %v2727, 4
        %v2730 = vrot.slane %v1615, 5
        %v2731 = vsel %vm1169, %v2729, %v2730
        %v2732 = vrot.slane %v1616, 5
        %v2733 = vrot.slane %v2732, 4
        %v2734 = vrot.slane %v1617, 5
        %v2735 = vsel %vm1169, %v2733, %v2734
        %v2736 = vrot.slane %v2734, 4
        %v2737 = vrot.slane %v1618, 5
        %v2738 = vsel %vm1169, %v2736, %v2737
        %v2739 = vrot.slane %v1619, 5
        %v2740 = vrot.slane %v2739, 4
        %v2741 = vrot.slane %v1620, 5
        %v2742 = vsel %vm1169, %v2740, %v2741
        %v2743 = vrot.slane %v2741, 4
        %v2744 = vrot.slane %v1621, 5
        %v2745 = vsel %vm1169, %v2743, %v2744
        %v2746 = vrot.slane %v1622, 5
        %v2747 = vrot.slane %v2746, 4
        %v2748 = vrot.slane %v1623, 5
        %v2749 = vsel %vm1169, %v2747, %v2748
        %v2750 = vrot.slane %v2748, 4
        %v2751 = vrot.slane %v1624, 5
        %v2752 = vsel %vm1169, %v2750, %v2751
        %v2753 = vrot.slane %v1625, 5
        %v2754 = vrot.slane %v2753, 4
        %v2755 = vrot.slane %v1626, 5
        %v2756 = vsel %vm1169, %v2754, %v2755
        %v2757 = vrot.slane %v2755, 4
        %v2758 = vrot.slane %v1627, 5
        %v2759 = vsel %vm1169, %v2757, %v2758
        %s2760 = scalar_lea.vmem %s1, 10
        %v2761 = vld [vmem:[%s2760] sm:$0x3]
        %v2762 = vunpack.c.l.b16 %v2651
        %v2763 = vunpack.c.l.b16 %v2654
        %v2764 = vunpack.c.l.b16 %v2658
        %v2765 = vunpack.c.l.b16 %v2661
        %v2766 = vunpack.c.l.b16 %v2665
        %v2767 = vunpack.c.l.b16 %v2668
        %v2768 = vunpack.c.l.b16 %v2672
        %v2769 = vunpack.c.l.b16 %v2675
        %v2770 = vunpack.c.l.b16 %v2679
        %v2771 = vunpack.c.l.b16 %v2682
        %v2772 = vunpack.c.l.b16 %v2686
        %v2773 = vunpack.c.l.b16 %v2689
        %v2774 = vunpack.c.l.b16 %v2693
        %v2775 = vunpack.c.l.b16 %v2696
        %v2776 = vunpack.c.l.b16 %v2700
        %v2777 = vunpack.c.l.b16 %v2703
        %v2778 = vunpack.c.l.b16 %v2707
        %v2779 = vunpack.c.l.b16 %v2710
        %v2780 = vunpack.c.l.b16 %v2714
        %v2781 = vunpack.c.l.b16 %v2717
        %v2782 = vunpack.c.l.b16 %v2721
        %v2783 = vunpack.c.l.b16 %v2724
        %v2784 = vunpack.c.l.b16 %v2728
        %v2785 = vunpack.c.l.b16 %v2731
        %v2786 = vunpack.c.l.b16 %v2735
        %v2787 = vunpack.c.l.b16 %v2738
        %v2788 = vunpack.c.l.b16 %v2742
        %v2789 = vunpack.c.l.b16 %v2745
        %v2790 = vunpack.c.l.b16 %v2749
        %v2791 = vunpack.c.l.b16 %v2752
        %v2792 = vunpack.c.l.b16 %v2756
        %v2793 = vunpack.c.l.b16 %v2759
        %v2794 = vpack.c.b16 %v2763, %v2762
        %v2795 = vpack.c.b16 %v2765, %v2764
        %v2796 = vpack.c.b16 %v2767, %v2766
        %v2797 = vpack.c.b16 %v2769, %v2768
        %v2798 = vpack.c.b16 %v2771, %v2770
        %v2799 = vpack.c.b16 %v2773, %v2772
        %v2800 = vpack.c.b16 %v2775, %v2774
        %v2801 = vpack.c.b16 %v2777, %v2776
        %v2802 = vpack.c.b16 %v2779, %v2778
        %v2803 = vpack.c.b16 %v2781, %v2780
        %v2804 = vpack.c.b16 %v2783, %v2782
        %v2805 = vpack.c.b16 %v2785, %v2784
        %v2806 = vpack.c.b16 %v2787, %v2786
        %v2807 = vpack.c.b16 %v2789, %v2788
        %v2808 = vpack.c.b16 %v2791, %v2790
        %v2809 = vpack.c.b16 %v2793, %v2792
        %v2811 = vsel %vm645, %v2794, 0
        %v2814 = vsel %vm645, %v2795, 0
        %v2817 = vsel %vm645, %v2796, 0
        %v2820 = vsel %vm645, %v2797, 0
        %v2823 = vsel %vm645, %v2798, 0
        %v2826 = vsel %vm645, %v2799, 0
        %v2829 = vsel %vm645, %v2800, 0
        %v2832 = vsel %vm645, %v2801, 0
        %v2835 = vsel %vm645, %v2802, 0
        %v2838 = vsel %vm645, %v2803, 0
        %v2841 = vsel %vm645, %v2804, 0
        %v2844 = vsel %vm645, %v2805, 0
        %v2847 = vsel %vm645, %v2806, 0
        %v2850 = vsel %vm645, %v2807, 0
        %v2853 = vsel %vm645, %v2808, 0
        %v2856 = vsel %vm645, %v2809, 0
        %v2859 = vsel %vm694, %v2761, 0
        %2861 = vmatprep.subr.bf16.mxu0 0
        %2862 = vmatpush1.bf16.msra.mxu0 0
        %2863 = vmatprep.subr.bf16.mxu0 0
        %2864 = vmatpush1.bf16.msra.mxu0 0
        %2865 = vmatprep.subr.bf16.mxu0 0
        %2866 = vmatpush1.bf16.msra.mxu0 0
        %2867 = vmatprep.subr.bf16.mxu0 0
        %2868 = vmatpush1.bf16.msra.mxu0 0
        %2869 = vmatprep.subr.bf16.mxu0 0
        %2870 = vmatpush1.bf16.msra.mxu0 0
        %2871 = vmatprep.subr.bf16.mxu0 0
        %2872 = vmatpush1.bf16.msra.mxu0 0
        %2873 = vmatprep.subr.bf16.mxu0 0
        %2874 = vmatpush1.bf16.msra.mxu0 0
        %2875 = vmatprep.subr.bf16.mxu0 0
        %2876 = vmatpush1.bf16.msra.mxu0 %v2859
        %2877 = vmatprep.subr.bf16.mxu0 0
        %2878 = vmatpush2.bf16.msra.mxu0 0
        %2879 = vmatprep.subr.bf16.mxu0 0
        %2880 = vmatpush2.bf16.msra.mxu0 0
        %2881 = vmatprep.subr.bf16.mxu0 0
        %2882 = vmatpush2.bf16.msra.mxu0 0
        %2883 = vmatprep.subr.bf16.mxu0 0
        %2884 = vmatpush2.bf16.msra.mxu0 0
        %2885 = vmatprep.subr.bf16.mxu0 0
        %2886 = vmatpush2.bf16.msra.mxu0 0
        %2887 = vmatprep.subr.bf16.mxu0 0
        %2888 = vmatpush2.bf16.msra.mxu0 0
        %2889 = vmatprep.subr.bf16.mxu0 0
        %2890 = vmatpush2.bf16.msra.mxu0 0
        %2891 = vmatprep.subr.bf16.mxu0 0
        %2892 = vmatpush2.bf16.msra.mxu0 0
        %2893 = vmatprep.mubr.bf16.mxu0 0
        %2894 = vmatmul.mubr.bf16.gmra.mxu0 %v2811
        %v2895 = vpop.f32.mrf.mxu0
        %v2896 = vadd.f32 0.0, %v2895
        %v2897 = vpop.f32.mrf.mxu0
        %v2898 = vpop.f32.mrf.mxu0
        %v2899 = vadd.f32 0.0, %v2898
        %v2900 = vpop.f32.mrf.mxu0
        %2901 = vmatprep.mubr.bf16.mxu0 0
        %2902 = vmatmul.mubr.bf16.gmra.mxu0 %v2814
        %v2903 = vpop.f32.mrf.mxu0
        %v2904 = vadd.f32 0.0, %v2903
        %v2905 = vpop.f32.mrf.mxu0
        %v2906 = vpop.f32.mrf.mxu0
        %v2907 = vadd.f32 0.0, %v2906
        %v2908 = vpop.f32.mrf.mxu0
        %2909 = vmatprep.mubr.bf16.mxu0 0
        %2910 = vmatmul.mubr.bf16.gmra.mxu0 %v2817
        %v2911 = vpop.f32.mrf.mxu0
        %v2912 = vadd.f32 0.0, %v2911
        %v2913 = vpop.f32.mrf.mxu0
        %v2914 = vpop.f32.mrf.mxu0
        %v2915 = vadd.f32 0.0, %v2914
        %v2916 = vpop.f32.mrf.mxu0
        %2917 = vmatprep.mubr.bf16.mxu0 0
        %2918 = vmatmul.mubr.bf16.gmra.mxu0 %v2820
        %v2919 = vpop.f32.mrf.mxu0
        %v2920 = vadd.f32 0.0, %v2919
        %v2921 = vpop.f32.mrf.mxu0
        %v2922 = vpop.f32.mrf.mxu0
        %v2923 = vadd.f32 0.0, %v2922
        %v2924 = vpop.f32.mrf.mxu0
        %2925 = vmatprep.mubr.bf16.mxu0 0
        %2926 = vmatmul.mubr.bf16.gmra.mxu0 %v2823
        %v2927 = vpop.f32.mrf.mxu0
        %v2928 = vadd.f32 0.0, %v2927
        %v2929 = vpop.f32.mrf.mxu0
        %v2930 = vpop.f32.mrf.mxu0
        %v2931 = vadd.f32 0.0, %v2930
        %v2932 = vpop.f32.mrf.mxu0
        %2933 = vmatprep.mubr.bf16.mxu0 0
        %2934 = vmatmul.mubr.bf16.gmra.mxu0 %v2826
        %v2935 = vpop.f32.mrf.mxu0
        %v2936 = vadd.f32 0.0, %v2935
        %v2937 = vpop.f32.mrf.mxu0
        %v2938 = vpop.f32.mrf.mxu0
        %v2939 = vadd.f32 0.0, %v2938
        %v2940 = vpop.f32.mrf.mxu0
        %2941 = vmatprep.mubr.bf16.mxu0 0
        %2942 = vmatmul.mubr.bf16.gmra.mxu0 %v2829
        %v2943 = vpop.f32.mrf.mxu0
        %v2944 = vadd.f32 0.0, %v2943
        %v2945 = vpop.f32.mrf.mxu0
        %v2946 = vpop.f32.mrf.mxu0
        %v2947 = vadd.f32 0.0, %v2946
        %v2948 = vpop.f32.mrf.mxu0
        %2949 = vmatprep.mubr.bf16.mxu0 0
        %2950 = vmatmul.mubr.bf16.gmra.mxu0 %v2832
        %v2951 = vpop.f32.mrf.mxu0
        %v2952 = vadd.f32 0.0, %v2951
        %v2953 = vpop.f32.mrf.mxu0
        %v2954 = vpop.f32.mrf.mxu0
        %v2955 = vadd.f32 0.0, %v2954
        %v2956 = vpop.f32.mrf.mxu0
        %2957 = vmatprep.mubr.bf16.mxu0 0
        %2958 = vmatmul.mubr.bf16.gmra.mxu0 %v2835
        %v2959 = vpop.f32.mrf.mxu0
        %v2960 = vadd.f32 0.0, %v2959
        %v2961 = vpop.f32.mrf.mxu0
        %v2962 = vpop.f32.mrf.mxu0
        %v2963 = vadd.f32 0.0, %v2962
        %v2964 = vpop.f32.mrf.mxu0
        %2965 = vmatprep.mubr.bf16.mxu0 0
        %2966 = vmatmul.mubr.bf16.gmra.mxu0 %v2838
        %v2967 = vpop.f32.mrf.mxu0
        %v2968 = vadd.f32 0.0, %v2967
        %v2969 = vpop.f32.mrf.mxu0
        %v2970 = vpop.f32.mrf.mxu0
        %v2971 = vadd.f32 0.0, %v2970
        %v2972 = vpop.f32.mrf.mxu0
        %2973 = vmatprep.mubr.bf16.mxu0 0
        %2974 = vmatmul.mubr.bf16.gmra.mxu0 %v2841
        %v2975 = vpop.f32.mrf.mxu0
        %v2976 = vadd.f32 0.0, %v2975
        %v2977 = vpop.f32.mrf.mxu0
        %v2978 = vpop.f32.mrf.mxu0
        %v2979 = vadd.f32 0.0, %v2978
        %v2980 = vpop.f32.mrf.mxu0
        %2981 = vmatprep.mubr.bf16.mxu0 0
        %2982 = vmatmul.mubr.bf16.gmra.mxu0 %v2844
        %v2983 = vpop.f32.mrf.mxu0
        %v2984 = vadd.f32 0.0, %v2983
        %v2985 = vpop.f32.mrf.mxu0
        %v2986 = vpop.f32.mrf.mxu0
        %v2987 = vadd.f32 0.0, %v2986
        %v2988 = vpop.f32.mrf.mxu0
        %2989 = vmatprep.mubr.bf16.mxu0 0
        %2990 = vmatmul.mubr.bf16.gmra.mxu0 %v2847
        %v2991 = vpop.f32.mrf.mxu0
        %v2992 = vadd.f32 0.0, %v2991
        %v2993 = vpop.f32.mrf.mxu0
        %v2994 = vpop.f32.mrf.mxu0
        %v2995 = vadd.f32 0.0, %v2994
        %v2996 = vpop.f32.mrf.mxu0
        %2997 = vmatprep.mubr.bf16.mxu0 0
        %2998 = vmatmul.mubr.bf16.gmra.mxu0 %v2850
        %v2999 = vpop.f32.mrf.mxu0
        %v3000 = vadd.f32 0.0, %v2999
        %v3001 = vpop.f32.mrf.mxu0
        %v3002 = vpop.f32.mrf.mxu0
        %v3003 = vadd.f32 0.0, %v3002
        %v3004 = vpop.f32.mrf.mxu0
        %3005 = vmatprep.mubr.bf16.mxu0 0
        %3006 = vmatmul.mubr.bf16.gmra.mxu0 %v2853
        %v3007 = vpop.f32.mrf.mxu0
        %v3008 = vadd.f32 0.0, %v3007
        %v3009 = vpop.f32.mrf.mxu0
        %v3010 = vpop.f32.mrf.mxu0
        %v3011 = vadd.f32 0.0, %v3010
        %v3012 = vpop.f32.mrf.mxu0
        %3013 = vmatprep.mubr.bf16.mxu0 0
        %3014 = vmatmul.mubr.bf16.gmra.mxu0 %v2856
        %v3015 = vpop.f32.mrf.mxu0
        %v3016 = vadd.f32 0.0, %v3015
        %v3017 = vpop.f32.mrf.mxu0
        %v3018 = vpop.f32.mrf.mxu0
        %v3019 = vadd.f32 0.0, %v3018
        %v3020 = vpop.f32.mrf.mxu0
        %3021 = vdwg.mxu0
        %v3022 = vadd.f32 %v2600, %v2896
        %v3023 = vadd.f32 %v2601, %v2899
        %v3024 = vadd.f32 %v2602, %v2904
        %v3025 = vadd.f32 %v2603, %v2907
        %v3026 = vadd.f32 %v2604, %v2912
        %v3027 = vadd.f32 %v2605, %v2915
        %v3028 = vadd.f32 %v2606, %v2920
        %v3029 = vadd.f32 %v2607, %v2923
        %v3030 = vadd.f32 %v2608, %v2928
        %v3031 = vadd.f32 %v2609, %v2931
        %v3032 = vadd.f32 %v2610, %v2936
        %v3033 = vadd.f32 %v2611, %v2939
        %v3034 = vadd.f32 %v2612, %v2944
        %v3035 = vadd.f32 %v2613, %v2947
        %v3036 = vadd.f32 %v2614, %v2952
        %v3037 = vadd.f32 %v2615, %v2955
        %v3038 = vadd.f32 %v2616, %v2960
        %v3039 = vadd.f32 %v2617, %v2963
        %v3040 = vadd.f32 %v2618, %v2968
        %v3041 = vadd.f32 %v2619, %v2971
        %v3042 = vadd.f32 %v2620, %v2976
        %v3043 = vadd.f32 %v2621, %v2979
        %v3044 = vadd.f32 %v2622, %v2984
        %v3045 = vadd.f32 %v2623, %v2987
        %v3046 = vadd.f32 %v2624, %v2992
        %v3047 = vadd.f32 %v2625, %v2995
        %v3048 = vadd.f32 %v2626, %v3000
        %v3049 = vadd.f32 %v2627, %v3003
        %v3050 = vadd.f32 %v2628, %v3008
        %v3051 = vadd.f32 %v2629, %v3011
        %v3052 = vadd.f32 %v2630, %v3016
        %v3053 = vadd.f32 %v2631, %v3019
        %s3054 = sadd.s32 %s155, 2
        %s3055 = smul.u32 %s3054, 3
        %s3056 = smul.addr %s3055, 4
        %s3057 = scalar_lea.vmem %s153, %s3056
        %v3058 = vld [vmem:[%s3057] sm:$0xf]
        %v3059 = vld [vmem:[%s3057 + $0x4] sm:$0xf]
        %v3060 = vld [vmem:[%s3057 + $0x8] sm:$0x1]
        %v3061 = vld [vmem:[%s3057 + $0xc] sm:$0xf]
        %v3062 = vld [vmem:[%s3057 + $0x10] sm:$0xf]
        %v3063 = vld [vmem:[%s3057 + $0x14] sm:$0x1]
        %v3064 = vld [vmem:[%s3057 + $0x18] sm:$0xf]
        %v3065 = vld [vmem:[%s3057 + $0x1c] sm:$0xf]
        %v3066 = vld [vmem:[%s3057 + $0x20] sm:$0x1]
        %v3067 = vld [vmem:[%s3057 + $0x24] sm:$0xf]
        %v3068 = vld [vmem:[%s3057 + $0x28] sm:$0xf]
        %v3069 = vld [vmem:[%s3057 + $0x2c] sm:$0x1]
        %v3070 = vld [vmem:[%s3057 + $0x30] sm:$0xf]
        %v3071 = vld [vmem:[%s3057 + $0x34] sm:$0xf]
        %v3072 = vld [vmem:[%s3057 + $0x38] sm:$0x1]
        %v3073 = vld [vmem:[%s3057 + $0x3c] sm:$0xf]
        %v3074 = vld [vmem:[%s3057 + $0x40] sm:$0xf]
        %v3075 = vld [vmem:[%s3057 + $0x44] sm:$0x1]
        %v3076 = vld [vmem:[%s3057 + $0x48] sm:$0xf]
        %v3077 = vld [vmem:[%s3057 + $0x4c] sm:$0xf]
        %v3078 = vld [vmem:[%s3057 + $0x50] sm:$0x1]
        %v3079 = vld [vmem:[%s3057 + $0x54] sm:$0xf]
        %v3080 = vld [vmem:[%s3057 + $0x58] sm:$0xf]
        %v3081 = vld [vmem:[%s3057 + $0x5c] sm:$0x1]
        %v3082 = vld [vmem:[%s3057 + $0x60] sm:$0xf]
        %v3083 = vld [vmem:[%s3057 + $0x64] sm:$0xf]
        %v3084 = vld [vmem:[%s3057 + $0x68] sm:$0x1]
        %v3085 = vld [vmem:[%s3057 + $0x6c] sm:$0xf]
        %v3086 = vld [vmem:[%s3057 + $0x70] sm:$0xf]
        %v3087 = vld [vmem:[%s3057 + $0x74] sm:$0x1]
        %v3088 = vld [vmem:[%s3057 + $0x78] sm:$0xf]
        %v3089 = vld [vmem:[%s3057 + $0x7c] sm:$0xf]
        %v3090 = vld [vmem:[%s3057 + $0x80] sm:$0x1]
        %v3091 = vld [vmem:[%s3057 + $0x84] sm:$0xf]
        %v3092 = vld [vmem:[%s3057 + $0x88] sm:$0xf]
        %v3093 = vld [vmem:[%s3057 + $0x8c] sm:$0x1]
        %v3094 = vld [vmem:[%s3057 + $0x90] sm:$0xf]
        %v3095 = vld [vmem:[%s3057 + $0x94] sm:$0xf]
        %v3096 = vld [vmem:[%s3057 + $0x98] sm:$0x1]
        %v3097 = vld [vmem:[%s3057 + $0x9c] sm:$0xf]
        %v3098 = vld [vmem:[%s3057 + $0xa0] sm:$0xf]
        %v3099 = vld [vmem:[%s3057 + $0xa4] sm:$0x1]
        %v3100 = vld [vmem:[%s3057 + $0xa8] sm:$0xf]
        %v3101 = vld [vmem:[%s3057 + $0xac] sm:$0xf]
        %v3102 = vld [vmem:[%s3057 + $0xb0] sm:$0x1]
        %v3103 = vld [vmem:[%s3057 + $0xb4] sm:$0xf]
        %v3104 = vld [vmem:[%s3057 + $0xb8] sm:$0xf]
        %v3105 = vld [vmem:[%s3057 + $0xbc] sm:$0x1]
        %s3106 = scalar_lea.vmem %s1, 12
        %v3107 = vld [vmem:[%s3106] sm:$0x3]
        %v3140 = vunpack.c.l.b16 %v3058
        %v3141 = vunpack.c.l.b16 %v3059
        %v3142 = vunpack.c.l.b16 %v3061
        %v3143 = vunpack.c.l.b16 %v3062
        %v3144 = vunpack.c.l.b16 %v3064
        %v3145 = vunpack.c.l.b16 %v3065
        %v3146 = vunpack.c.l.b16 %v3067
        %v3147 = vunpack.c.l.b16 %v3068
        %v3148 = vunpack.c.l.b16 %v3070
        %v3149 = vunpack.c.l.b16 %v3071
        %v3150 = vunpack.c.l.b16 %v3073
        %v3151 = vunpack.c.l.b16 %v3074
        %v3152 = vunpack.c.l.b16 %v3076
        %v3153 = vunpack.c.l.b16 %v3077
        %v3154 = vunpack.c.l.b16 %v3079
        %v3155 = vunpack.c.l.b16 %v3080
        %v3156 = vunpack.c.l.b16 %v3082
        %v3157 = vunpack.c.l.b16 %v3083
        %v3158 = vunpack.c.l.b16 %v3085
        %v3159 = vunpack.c.l.b16 %v3086
        %v3160 = vunpack.c.l.b16 %v3088
        %v3161 = vunpack.c.l.b16 %v3089
        %v3162 = vunpack.c.l.b16 %v3091
        %v3163 = vunpack.c.l.b16 %v3092
        %v3164 = vunpack.c.l.b16 %v3094
        %v3165 = vunpack.c.l.b16 %v3095
        %v3166 = vunpack.c.l.b16 %v3097
        %v3167 = vunpack.c.l.b16 %v3098
        %v3168 = vunpack.c.l.b16 %v3100
        %v3169 = vunpack.c.l.b16 %v3101
        %v3170 = vunpack.c.l.b16 %v3103
        %v3171 = vunpack.c.l.b16 %v3104
        %v3172 = vpack.c.b16 %v3141, %v3140
        %v3173 = vpack.c.b16 %v3143, %v3142
        %v3174 = vpack.c.b16 %v3145, %v3144
        %v3175 = vpack.c.b16 %v3147, %v3146
        %v3176 = vpack.c.b16 %v3149, %v3148
        %v3177 = vpack.c.b16 %v3151, %v3150
        %v3178 = vpack.c.b16 %v3153, %v3152
        %v3179 = vpack.c.b16 %v3155, %v3154
        %v3180 = vpack.c.b16 %v3157, %v3156
        %v3181 = vpack.c.b16 %v3159, %v3158
        %v3182 = vpack.c.b16 %v3161, %v3160
        %v3183 = vpack.c.b16 %v3163, %v3162
        %v3184 = vpack.c.b16 %v3165, %v3164
        %v3185 = vpack.c.b16 %v3167, %v3166
        %v3186 = vpack.c.b16 %v3169, %v3168
        %v3187 = vpack.c.b16 %v3171, %v3170
        %v3189 = vsel %vm645, %v3172, 0
        %v3192 = vsel %vm645, %v3173, 0
        %v3195 = vsel %vm645, %v3174, 0
        %v3198 = vsel %vm645, %v3175, 0
        %v3201 = vsel %vm645, %v3176, 0
        %v3204 = vsel %vm645, %v3177, 0
        %v3207 = vsel %vm645, %v3178, 0
        %v3210 = vsel %vm645, %v3179, 0
        %v3213 = vsel %vm645, %v3180, 0
        %v3216 = vsel %vm645, %v3181, 0
        %v3219 = vsel %vm645, %v3182, 0
        %v3222 = vsel %vm645, %v3183, 0
        %v3225 = vsel %vm645, %v3184, 0
        %v3228 = vsel %vm645, %v3185, 0
        %v3231 = vsel %vm645, %v3186, 0
        %v3234 = vsel %vm645, %v3187, 0
        %v3237 = vsel %vm694, %v3107, 0
        %3239 = vmatprep.subr.bf16.mxu0 0
        %3240 = vmatpush1.bf16.msra.mxu0 0
        %3241 = vmatprep.subr.bf16.mxu0 0
        %3242 = vmatpush1.bf16.msra.mxu0 0
        %3243 = vmatprep.subr.bf16.mxu0 0
        %3244 = vmatpush1.bf16.msra.mxu0 0
        %3245 = vmatprep.subr.bf16.mxu0 0
        %3246 = vmatpush1.bf16.msra.mxu0 0
        %3247 = vmatprep.subr.bf16.mxu0 0
        %3248 = vmatpush1.bf16.msra.mxu0 0
        %3249 = vmatprep.subr.bf16.mxu0 0
        %3250 = vmatpush1.bf16.msra.mxu0 0
        %3251 = vmatprep.subr.bf16.mxu0 0
        %3252 = vmatpush1.bf16.msra.mxu0 0
        %3253 = vmatprep.subr.bf16.mxu0 0
        %3254 = vmatpush1.bf16.msra.mxu0 %v3237
        %3255 = vmatprep.subr.bf16.mxu0 0
        %3256 = vmatpush2.bf16.msra.mxu0 0
        %3257 = vmatprep.subr.bf16.mxu0 0
        %3258 = vmatpush2.bf16.msra.mxu0 0
        %3259 = vmatprep.subr.bf16.mxu0 0
        %3260 = vmatpush2.bf16.msra.mxu0 0
        %3261 = vmatprep.subr.bf16.mxu0 0
        %3262 = vmatpush2.bf16.msra.mxu0 0
        %3263 = vmatprep.subr.bf16.mxu0 0
        %3264 = vmatpush2.bf16.msra.mxu0 0
        %3265 = vmatprep.subr.bf16.mxu0 0
        %3266 = vmatpush2.bf16.msra.mxu0 0
        %3267 = vmatprep.subr.bf16.mxu0 0
        %3268 = vmatpush2.bf16.msra.mxu0 0
        %3269 = vmatprep.subr.bf16.mxu0 0
        %3270 = vmatpush2.bf16.msra.mxu0 0
        %3271 = vmatprep.mubr.bf16.mxu0 0
        %3272 = vmatmul.mubr.bf16.gmra.mxu0 %v3189
        %v3273 = vpop.f32.mrf.mxu0
        %v3274 = vadd.f32 0.0, %v3273
        %v3275 = vpop.f32.mrf.mxu0
        %v3276 = vpop.f32.mrf.mxu0
        %v3277 = vadd.f32 0.0, %v3276
        %v3278 = vpop.f32.mrf.mxu0
        %3279 = vmatprep.mubr.bf16.mxu0 0
        %3280 = vmatmul.mubr.bf16.gmra.mxu0 %v3192
        %v3281 = vpop.f32.mrf.mxu0
        %v3282 = vadd.f32 0.0, %v3281
        %v3283 = vpop.f32.mrf.mxu0
        %v3284 = vpop.f32.mrf.mxu0
        %v3285 = vadd.f32 0.0, %v3284
        %v3286 = vpop.f32.mrf.mxu0
        %3287 = vmatprep.mubr.bf16.mxu0 0
        %3288 = vmatmul.mubr.bf16.gmra.mxu0 %v3195
        %v3289 = vpop.f32.mrf.mxu0
        %v3290 = vadd.f32 0.0, %v3289
        %v3291 = vpop.f32.mrf.mxu0
        %v3292 = vpop.f32.mrf.mxu0
        %v3293 = vadd.f32 0.0, %v3292
        %v3294 = vpop.f32.mrf.mxu0
        %3295 = vmatprep.mubr.bf16.mxu0 0
        %3296 = vmatmul.mubr.bf16.gmra.mxu0 %v3198
        %v3297 = vpop.f32.mrf.mxu0
        %v3298 = vadd.f32 0.0, %v3297
        %v3299 = vpop.f32.mrf.mxu0
        %v3300 = vpop.f32.mrf.mxu0
        %v3301 = vadd.f32 0.0, %v3300
        %v3302 = vpop.f32.mrf.mxu0
        %3303 = vmatprep.mubr.bf16.mxu0 0
        %3304 = vmatmul.mubr.bf16.gmra.mxu0 %v3201
        %v3305 = vpop.f32.mrf.mxu0
        %v3306 = vadd.f32 0.0, %v3305
        %v3307 = vpop.f32.mrf.mxu0
        %v3308 = vpop.f32.mrf.mxu0
        %v3309 = vadd.f32 0.0, %v3308
        %v3310 = vpop.f32.mrf.mxu0
        %3311 = vmatprep.mubr.bf16.mxu0 0
        %3312 = vmatmul.mubr.bf16.gmra.mxu0 %v3204
        %v3313 = vpop.f32.mrf.mxu0
        %v3314 = vadd.f32 0.0, %v3313
        %v3315 = vpop.f32.mrf.mxu0
        %v3316 = vpop.f32.mrf.mxu0
        %v3317 = vadd.f32 0.0, %v3316
        %v3318 = vpop.f32.mrf.mxu0
        %3319 = vmatprep.mubr.bf16.mxu0 0
        %3320 = vmatmul.mubr.bf16.gmra.mxu0 %v3207
        %v3321 = vpop.f32.mrf.mxu0
        %v3322 = vadd.f32 0.0, %v3321
        %v3323 = vpop.f32.mrf.mxu0
        %v3324 = vpop.f32.mrf.mxu0
        %v3325 = vadd.f32 0.0, %v3324
        %v3326 = vpop.f32.mrf.mxu0
        %3327 = vmatprep.mubr.bf16.mxu0 0
        %3328 = vmatmul.mubr.bf16.gmra.mxu0 %v3210
        %v3329 = vpop.f32.mrf.mxu0
        %v3330 = vadd.f32 0.0, %v3329
        %v3331 = vpop.f32.mrf.mxu0
        %v3332 = vpop.f32.mrf.mxu0
        %v3333 = vadd.f32 0.0, %v3332
        %v3334 = vpop.f32.mrf.mxu0
        %3335 = vmatprep.mubr.bf16.mxu0 0
        %3336 = vmatmul.mubr.bf16.gmra.mxu0 %v3213
        %v3337 = vpop.f32.mrf.mxu0
        %v3338 = vadd.f32 0.0, %v3337
        %v3339 = vpop.f32.mrf.mxu0
        %v3340 = vpop.f32.mrf.mxu0
        %v3341 = vadd.f32 0.0, %v3340
        %v3342 = vpop.f32.mrf.mxu0
        %3343 = vmatprep.mubr.bf16.mxu0 0
        %3344 = vmatmul.mubr.bf16.gmra.mxu0 %v3216
        %v3345 = vpop.f32.mrf.mxu0
        %v3346 = vadd.f32 0.0, %v3345
        %v3347 = vpop.f32.mrf.mxu0
        %v3348 = vpop.f32.mrf.mxu0
        %v3349 = vadd.f32 0.0, %v3348
        %v3350 = vpop.f32.mrf.mxu0
        %3351 = vmatprep.mubr.bf16.mxu0 0
        %3352 = vmatmul.mubr.bf16.gmra.mxu0 %v3219
        %v3353 = vpop.f32.mrf.mxu0
        %v3354 = vadd.f32 0.0, %v3353
        %v3355 = vpop.f32.mrf.mxu0
        %v3356 = vpop.f32.mrf.mxu0
        %v3357 = vadd.f32 0.0, %v3356
        %v3358 = vpop.f32.mrf.mxu0
        %3359 = vmatprep.mubr.bf16.mxu0 0
        %3360 = vmatmul.mubr.bf16.gmra.mxu0 %v3222
        %v3361 = vpop.f32.mrf.mxu0
        %v3362 = vadd.f32 0.0, %v3361
        %v3363 = vpop.f32.mrf.mxu0
        %v3364 = vpop.f32.mrf.mxu0
        %v3365 = vadd.f32 0.0, %v3364
        %v3366 = vpop.f32.mrf.mxu0
        %3367 = vmatprep.mubr.bf16.mxu0 0
        %3368 = vmatmul.mubr.bf16.gmra.mxu0 %v3225
        %v3369 = vpop.f32.mrf.mxu0
        %v3370 = vadd.f32 0.0, %v3369
        %v3371 = vpop.f32.mrf.mxu0
        %v3372 = vpop.f32.mrf.mxu0
        %v3373 = vadd.f32 0.0, %v3372
        %v3374 = vpop.f32.mrf.mxu0
        %3375 = vmatprep.mubr.bf16.mxu0 0
        %3376 = vmatmul.mubr.bf16.gmra.mxu0 %v3228
        %v3377 = vpop.f32.mrf.mxu0
        %v3378 = vadd.f32 0.0, %v3377
        %v3379 = vpop.f32.mrf.mxu0
        %v3380 = vpop.f32.mrf.mxu0
        %v3381 = vadd.f32 0.0, %v3380
        %v3382 = vpop.f32.mrf.mxu0
        %3383 = vmatprep.mubr.bf16.mxu0 0
        %3384 = vmatmul.mubr.bf16.gmra.mxu0 %v3231
        %v3385 = vpop.f32.mrf.mxu0
        %v3386 = vadd.f32 0.0, %v3385
        %v3387 = vpop.f32.mrf.mxu0
        %v3388 = vpop.f32.mrf.mxu0
        %v3389 = vadd.f32 0.0, %v3388
        %v3390 = vpop.f32.mrf.mxu0
        %3391 = vmatprep.mubr.bf16.mxu0 0
        %3392 = vmatmul.mubr.bf16.gmra.mxu0 %v3234
        %v3393 = vpop.f32.mrf.mxu0
        %v3394 = vadd.f32 0.0, %v3393
        %v3395 = vpop.f32.mrf.mxu0
        %v3396 = vpop.f32.mrf.mxu0
        %v3397 = vadd.f32 0.0, %v3396
        %v3398 = vpop.f32.mrf.mxu0
        %3399 = vdwg.mxu0
        %v3400 = vadd.f32 %v3022, %v3274
        %v3401 = vadd.f32 %v3023, %v3277
        %v3402 = vadd.f32 %v3024, %v3282
        %v3403 = vadd.f32 %v3025, %v3285
        %v3404 = vadd.f32 %v3026, %v3290
        %v3405 = vadd.f32 %v3027, %v3293
        %v3406 = vadd.f32 %v3028, %v3298
        %v3407 = vadd.f32 %v3029, %v3301
        %v3408 = vadd.f32 %v3030, %v3306
        %v3409 = vadd.f32 %v3031, %v3309
        %v3410 = vadd.f32 %v3032, %v3314
        %v3411 = vadd.f32 %v3033, %v3317
        %v3412 = vadd.f32 %v3034, %v3322
        %v3413 = vadd.f32 %v3035, %v3325
        %v3414 = vadd.f32 %v3036, %v3330
        %v3415 = vadd.f32 %v3037, %v3333
        %v3416 = vadd.f32 %v3038, %v3338
        %v3417 = vadd.f32 %v3039, %v3341
        %v3418 = vadd.f32 %v3040, %v3346
        %v3419 = vadd.f32 %v3041, %v3349
        %v3420 = vadd.f32 %v3042, %v3354
        %v3421 = vadd.f32 %v3043, %v3357
        %v3422 = vadd.f32 %v3044, %v3362
        %v3423 = vadd.f32 %v3045, %v3365
        %v3424 = vadd.f32 %v3046, %v3370
        %v3425 = vadd.f32 %v3047, %v3373
        %v3426 = vadd.f32 %v3048, %v3378
        %v3427 = vadd.f32 %v3049, %v3381
        %v3428 = vadd.f32 %v3050, %v3386
        %v3429 = vadd.f32 %v3051, %v3389
        %v3430 = vadd.f32 %v3052, %v3394
        %v3431 = vadd.f32 %v3053, %v3397
        %v3433 = vshrl.u32 %v3058, 16
        %v3435 = vrot.slane %v3433, 4
        %v3436 = vshll.u32 %v3058, 16
        %v3438 = vrot.slane %v3436, 5
        %v3439 = vor.u32 %v3435, %v3438
        %v3440 = vrot.slane %v3439, 4
        %v3442 = vshll.u32 %v3059, 16
        %v3444 = vrot.slane %v3442, 5
        %v3445 = vsel %vm210, %v3440, %v3444
        %v3446 = vshrl.u32 %v3059, 16
        %v3448 = vrot.slane %v3446, 4
        %v3449 = vor.u32 %v3448, %v3444
        %v3450 = vrot.slane %v3449, 4
        %v3452 = vshll.u32 %v3060, 16
        %v3454 = vrot.slane %v3452, 5
        %v3455 = vsel %vm210, %v3450, %v3454
        %v3457 = vshrl.u32 %v3061, 16
        %v3459 = vrot.slane %v3457, 4
        %v3460 = vshll.u32 %v3061, 16
        %v3462 = vrot.slane %v3460, 5
        %v3463 = vor.u32 %v3459, %v3462
        %v3464 = vrot.slane %v3463, 4
        %v3466 = vshll.u32 %v3062, 16
        %v3468 = vrot.slane %v3466, 5
        %v3469 = vsel %vm210, %v3464, %v3468
        %v3470 = vshrl.u32 %v3062, 16
        %v3472 = vrot.slane %v3470, 4
        %v3473 = vor.u32 %v3472, %v3468
        %v3474 = vrot.slane %v3473, 4
        %v3476 = vshll.u32 %v3063, 16
        %v3478 = vrot.slane %v3476, 5
        %v3479 = vsel %vm210, %v3474, %v3478
        %v3481 = vshrl.u32 %v3064, 16
        %v3483 = vrot.slane %v3481, 4
        %v3484 = vshll.u32 %v3064, 16
        %v3486 = vrot.slane %v3484, 5
        %v3487 = vor.u32 %v3483, %v3486
        %v3488 = vrot.slane %v3487, 4
        %v3490 = vshll.u32 %v3065, 16
        %v3492 = vrot.slane %v3490, 5
        %v3493 = vsel %vm210, %v3488, %v3492
        %v3494 = vshrl.u32 %v3065, 16
        %v3496 = vrot.slane %v3494, 4
        %v3497 = vor.u32 %v3496, %v3492
        %v3498 = vrot.slane %v3497, 4
        %v3500 = vshll.u32 %v3066, 16
        %v3502 = vrot.slane %v3500, 5
        %v3503 = vsel %vm210, %v3498, %v3502
        %v3505 = vshrl.u32 %v3067, 16
        %v3507 = vrot.slane %v3505, 4
        %v3508 = vshll.u32 %v3067, 16
        %v3510 = vrot.slane %v3508, 5
        %v3511 = vor.u32 %v3507, %v3510
        %v3512 = vrot.slane %v3511, 4
        %v3514 = vshll.u32 %v3068, 16
        %v3516 = vrot.slane %v3514, 5
        %v3517 = vsel %vm210, %v3512, %v3516
        %v3518 = vshrl.u32 %v3068, 16
        %v3520 = vrot.slane %v3518, 4
        %v3521 = vor.u32 %v3520, %v3516
        %v3522 = vrot.slane %v3521, 4
        %v3524 = vshll.u32 %v3069, 16
        %v3526 = vrot.slane %v3524, 5
        %v3527 = vsel %vm210, %v3522, %v3526
        %v3529 = vshrl.u32 %v3070, 16
        %v3531 = vrot.slane %v3529, 4
        %v3532 = vshll.u32 %v3070, 16
        %v3534 = vrot.slane %v3532, 5
        %v3535 = vor.u32 %v3531, %v3534
        %v3536 = vrot.slane %v3535, 4
        %v3538 = vshll.u32 %v3071, 16
        %v3540 = vrot.slane %v3538, 5
        %v3541 = vsel %vm210, %v3536, %v3540
        %v3542 = vshrl.u32 %v3071, 16
        %v3544 = vrot.slane %v3542, 4
        %v3545 = vor.u32 %v3544, %v3540
        %v3546 = vrot.slane %v3545, 4
        %v3548 = vshll.u32 %v3072, 16
        %v3550 = vrot.slane %v3548, 5
        %v3551 = vsel %vm210, %v3546, %v3550
        %v3553 = vshrl.u32 %v3073, 16
        %v3555 = vrot.slane %v3553, 4
        %v3556 = vshll.u32 %v3073, 16
        %v3558 = vrot.slane %v3556, 5
        %v3559 = vor.u32 %v3555, %v3558
        %v3560 = vrot.slane %v3559, 4
        %v3562 = vshll.u32 %v3074, 16
        %v3564 = vrot.slane %v3562, 5
        %v3565 = vsel %vm210, %v3560, %v3564
        %v3566 = vshrl.u32 %v3074, 16
        %v3568 = vrot.slane %v3566, 4
        %v3569 = vor.u32 %v3568, %v3564
        %v3570 = vrot.slane %v3569, 4
        %v3572 = vshll.u32 %v3075, 16
        %v3574 = vrot.slane %v3572, 5
        %v3575 = vsel %vm210, %v3570, %v3574
        %v3577 = vshrl.u32 %v3076, 16
        %v3579 = vrot.slane %v3577, 4
        %v3580 = vshll.u32 %v3076, 16
        %v3582 = vrot.slane %v3580, 5
        %v3583 = vor.u32 %v3579, %v3582
        %v3584 = vrot.slane %v3583, 4
        %v3586 = vshll.u32 %v3077, 16
        %v3588 = vrot.slane %v3586, 5
        %v3589 = vsel %vm210, %v3584, %v3588
        %v3590 = vshrl.u32 %v3077, 16
        %v3592 = vrot.slane %v3590, 4
        %v3593 = vor.u32 %v3592, %v3588
        %v3594 = vrot.slane %v3593, 4
        %v3596 = vshll.u32 %v3078, 16
        %v3598 = vrot.slane %v3596, 5
        %v3599 = vsel %vm210, %v3594, %v3598
        %v3601 = vshrl.u32 %v3079, 16
        %v3603 = vrot.slane %v3601, 4
        %v3604 = vshll.u32 %v3079, 16
        %v3606 = vrot.slane %v3604, 5
        %v3607 = vor.u32 %v3603, %v3606
        %v3608 = vrot.slane %v3607, 4
        %v3610 = vshll.u32 %v3080, 16
        %v3612 = vrot.slane %v3610, 5
        %v3613 = vsel %vm210, %v3608, %v3612
        %v3614 = vshrl.u32 %v3080, 16
        %v3616 = vrot.slane %v3614, 4
        %v3617 = vor.u32 %v3616, %v3612
        %v3618 = vrot.slane %v3617, 4
        %v3620 = vshll.u32 %v3081, 16
        %v3622 = vrot.slane %v3620, 5
        %v3623 = vsel %vm210, %v3618, %v3622
        %v3625 = vshrl.u32 %v3082, 16
        %v3627 = vrot.slane %v3625, 4
        %v3628 = vshll.u32 %v3082, 16
        %v3630 = vrot.slane %v3628, 5
        %v3631 = vor.u32 %v3627, %v3630
        %v3632 = vrot.slane %v3631, 4
        %v3634 = vshll.u32 %v3083, 16
        %v3636 = vrot.slane %v3634, 5
        %v3637 = vsel %vm210, %v3632, %v3636
        %v3638 = vshrl.u32 %v3083, 16
        %v3640 = vrot.slane %v3638, 4
        %v3641 = vor.u32 %v3640, %v3636
        %v3642 = vrot.slane %v3641, 4
        %v3644 = vshll.u32 %v3084, 16
        %v3646 = vrot.slane %v3644, 5
        %v3647 = vsel %vm210, %v3642, %v3646
        %v3649 = vshrl.u32 %v3085, 16
        %v3651 = vrot.slane %v3649, 4
        %v3652 = vshll.u32 %v3085, 16
        %v3654 = vrot.slane %v3652, 5
        %v3655 = vor.u32 %v3651, %v3654
        %v3656 = vrot.slane %v3655, 4
        %v3658 = vshll.u32 %v3086, 16
        %v3660 = vrot.slane %v3658, 5
        %v3661 = vsel %vm210, %v3656, %v3660
        %v3662 = vshrl.u32 %v3086, 16
        %v3664 = vrot.slane %v3662, 4
        %v3665 = vor.u32 %v3664, %v3660
        %v3666 = vrot.slane %v3665, 4
        %v3668 = vshll.u32 %v3087, 16
        %v3670 = vrot.slane %v3668, 5
        %v3671 = vsel %vm210, %v3666, %v3670
        %v3673 = vshrl.u32 %v3088, 16
        %v3675 = vrot.slane %v3673, 4
        %v3676 = vshll.u32 %v3088, 16
        %v3678 = vrot.slane %v3676, 5
        %v3679 = vor.u32 %v3675, %v3678
        %v3680 = vrot.slane %v3679, 4
        %v3682 = vshll.u32 %v3089, 16
        %v3684 = vrot.slane %v3682, 5
        %v3685 = vsel %vm210, %v3680, %v3684
        %v3686 = vshrl.u32 %v3089, 16
        %v3688 = vrot.slane %v3686, 4
        %v3689 = vor.u32 %v3688, %v3684
        %v3690 = vrot.slane %v3689, 4
        %v3692 = vshll.u32 %v3090, 16
        %v3694 = vrot.slane %v3692, 5
        %v3695 = vsel %vm210, %v3690, %v3694
        %v3697 = vshrl.u32 %v3091, 16
        %v3699 = vrot.slane %v3697, 4
        %v3700 = vshll.u32 %v3091, 16
        %v3702 = vrot.slane %v3700, 5
        %v3703 = vor.u32 %v3699, %v3702
        %v3704 = vrot.slane %v3703, 4
        %v3706 = vshll.u32 %v3092, 16
        %v3708 = vrot.slane %v3706, 5
        %v3709 = vsel %vm210, %v3704, %v3708
        %v3710 = vshrl.u32 %v3092, 16
        %v3712 = vrot.slane %v3710, 4
        %v3713 = vor.u32 %v3712, %v3708
        %v3714 = vrot.slane %v3713, 4
        %v3716 = vshll.u32 %v3093, 16
        %v3718 = vrot.slane %v3716, 5
        %v3719 = vsel %vm210, %v3714, %v3718
        %v3721 = vshrl.u32 %v3094, 16
        %v3723 = vrot.slane %v3721, 4
        %v3724 = vshll.u32 %v3094, 16
        %v3726 = vrot.slane %v3724, 5
        %v3727 = vor.u32 %v3723, %v3726
        %v3728 = vrot.slane %v3727, 4
        %v3730 = vshll.u32 %v3095, 16
        %v3732 = vrot.slane %v3730, 5
        %v3733 = vsel %vm210, %v3728, %v3732
        %v3734 = vshrl.u32 %v3095, 16
        %v3736 = vrot.slane %v3734, 4
        %v3737 = vor.u32 %v3736, %v3732
        %v3738 = vrot.slane %v3737, 4
        %v3740 = vshll.u32 %v3096, 16
        %v3742 = vrot.slane %v3740, 5
        %v3743 = vsel %vm210, %v3738, %v3742
        %v3745 = vshrl.u32 %v3097, 16
        %v3747 = vrot.slane %v3745, 4
        %v3748 = vshll.u32 %v3097, 16
        %v3750 = vrot.slane %v3748, 5
        %v3751 = vor.u32 %v3747, %v3750
        %v3752 = vrot.slane %v3751, 4
        %v3754 = vshll.u32 %v3098, 16
        %v3756 = vrot.slane %v3754, 5
        %v3757 = vsel %vm210, %v3752, %v3756
        %v3758 = vshrl.u32 %v3098, 16
        %v3760 = vrot.slane %v3758, 4
        %v3761 = vor.u32 %v3760, %v3756
        %v3762 = vrot.slane %v3761, 4
        %v3764 = vshll.u32 %v3099, 16
        %v3766 = vrot.slane %v3764, 5
        %v3767 = vsel %vm210, %v3762, %v3766
        %v3769 = vshrl.u32 %v3100, 16
        %v3771 = vrot.slane %v3769, 4
        %v3772 = vshll.u32 %v3100, 16
        %v3774 = vrot.slane %v3772, 5
        %v3775 = vor.u32 %v3771, %v3774
        %v3776 = vrot.slane %v3775, 4
        %v3778 = vshll.u32 %v3101, 16
        %v3780 = vrot.slane %v3778, 5
        %v3781 = vsel %vm210, %v3776, %v3780
        %v3782 = vshrl.u32 %v3101, 16
        %v3784 = vrot.slane %v3782, 4
        %v3785 = vor.u32 %v3784, %v3780
        %v3786 = vrot.slane %v3785, 4
        %v3788 = vshll.u32 %v3102, 16
        %v3790 = vrot.slane %v3788, 5
        %v3791 = vsel %vm210, %v3786, %v3790
        %v3793 = vshrl.u32 %v3103, 16
        %v3795 = vrot.slane %v3793, 4
        %v3796 = vshll.u32 %v3103, 16
        %v3798 = vrot.slane %v3796, 5
        %v3799 = vor.u32 %v3795, %v3798
        %v3800 = vrot.slane %v3799, 4
        %v3802 = vshll.u32 %v3104, 16
        %v3804 = vrot.slane %v3802, 5
        %v3805 = vsel %vm210, %v3800, %v3804
        %v3806 = vshrl.u32 %v3104, 16
        %v3808 = vrot.slane %v3806, 4
        %v3809 = vor.u32 %v3808, %v3804
        %v3810 = vrot.slane %v3809, 4
        %v3812 = vshll.u32 %v3105, 16
        %v3814 = vrot.slane %v3812, 5
        %v3815 = vsel %vm210, %v3810, %v3814
        %s3816 = scalar_lea.vmem %s1, 14
        %v3817 = vld [vmem:[%s3816] sm:$0x3]
        %v3818 = vunpack.c.l.b16 %v3445
        %v3819 = vunpack.c.l.b16 %v3455
        %v3820 = vunpack.c.l.b16 %v3469
        %v3821 = vunpack.c.l.b16 %v3479
        %v3822 = vunpack.c.l.b16 %v3493
        %v3823 = vunpack.c.l.b16 %v3503
        %v3824 = vunpack.c.l.b16 %v3517
        %v3825 = vunpack.c.l.b16 %v3527
        %v3826 = vunpack.c.l.b16 %v3541
        %v3827 = vunpack.c.l.b16 %v3551
        %v3828 = vunpack.c.l.b16 %v3565
        %v3829 = vunpack.c.l.b16 %v3575
        %v3830 = vunpack.c.l.b16 %v3589
        %v3831 = vunpack.c.l.b16 %v3599
        %v3832 = vunpack.c.l.b16 %v3613
        %v3833 = vunpack.c.l.b16 %v3623
        %v3834 = vunpack.c.l.b16 %v3637
        %v3835 = vunpack.c.l.b16 %v3647
        %v3836 = vunpack.c.l.b16 %v3661
        %v3837 = vunpack.c.l.b16 %v3671
        %v3838 = vunpack.c.l.b16 %v3685
        %v3839 = vunpack.c.l.b16 %v3695
        %v3840 = vunpack.c.l.b16 %v3709
        %v3841 = vunpack.c.l.b16 %v3719
        %v3842 = vunpack.c.l.b16 %v3733
        %v3843 = vunpack.c.l.b16 %v3743
        %v3844 = vunpack.c.l.b16 %v3757
        %v3845 = vunpack.c.l.b16 %v3767
        %v3846 = vunpack.c.l.b16 %v3781
        %v3847 = vunpack.c.l.b16 %v3791
        %v3848 = vunpack.c.l.b16 %v3805
        %v3849 = vunpack.c.l.b16 %v3815
        %v3850 = vpack.c.b16 %v3819, %v3818
        %v3851 = vpack.c.b16 %v3821, %v3820
        %v3852 = vpack.c.b16 %v3823, %v3822
        %v3853 = vpack.c.b16 %v3825, %v3824
        %v3854 = vpack.c.b16 %v3827, %v3826
        %v3855 = vpack.c.b16 %v3829, %v3828
        %v3856 = vpack.c.b16 %v3831, %v3830
        %v3857 = vpack.c.b16 %v3833, %v3832
        %v3858 = vpack.c.b16 %v3835, %v3834
        %v3859 = vpack.c.b16 %v3837, %v3836
        %v3860 = vpack.c.b16 %v3839, %v3838
        %v3861 = vpack.c.b16 %v3841, %v3840
        %v3862 = vpack.c.b16 %v3843, %v3842
        %v3863 = vpack.c.b16 %v3845, %v3844
        %v3864 = vpack.c.b16 %v3847, %v3846
        %v3865 = vpack.c.b16 %v3849, %v3848
        %v3867 = vsel %vm645, %v3850, 0
        %v3870 = vsel %vm645, %v3851, 0
        %v3873 = vsel %vm645, %v3852, 0
        %v3876 = vsel %vm645, %v3853, 0
        %v3879 = vsel %vm645, %v3854, 0
        %v3882 = vsel %vm645, %v3855, 0
        %v3885 = vsel %vm645, %v3856, 0
        %v3888 = vsel %vm645, %v3857, 0
        %v3891 = vsel %vm645, %v3858, 0
        %v3894 = vsel %vm645, %v3859, 0
        %v3897 = vsel %vm645, %v3860, 0
        %v3900 = vsel %vm645, %v3861, 0
        %v3903 = vsel %vm645, %v3862, 0
        %v3906 = vsel %vm645, %v3863, 0
        %v3909 = vsel %vm645, %v3864, 0
        %v3912 = vsel %vm645, %v3865, 0
        %v3915 = vsel %vm694, %v3817, 0
        %3917 = vmatprep.subr.bf16.mxu0 0
        %3918 = vmatpush1.bf16.msra.mxu0 0
        %3919 = vmatprep.subr.bf16.mxu0 0
        %3920 = vmatpush1.bf16.msra.mxu0 0
        %3921 = vmatprep.subr.bf16.mxu0 0
        %3922 = vmatpush1.bf16.msra.mxu0 0
        %3923 = vmatprep.subr.bf16.mxu0 0
        %3924 = vmatpush1.bf16.msra.mxu0 0
        %3925 = vmatprep.subr.bf16.mxu0 0
        %3926 = vmatpush1.bf16.msra.mxu0 0
        %3927 = vmatprep.subr.bf16.mxu0 0
        %3928 = vmatpush1.bf16.msra.mxu0 0
        %3929 = vmatprep.subr.bf16.mxu0 0
        %3930 = vmatpush1.bf16.msra.mxu0 0
        %3931 = vmatprep.subr.bf16.mxu0 0
        %3932 = vmatpush1.bf16.msra.mxu0 %v3915
        %3933 = vmatprep.subr.bf16.mxu0 0
        %3934 = vmatpush2.bf16.msra.mxu0 0
        %3935 = vmatprep.subr.bf16.mxu0 0
        %3936 = vmatpush2.bf16.msra.mxu0 0
        %3937 = vmatprep.subr.bf16.mxu0 0
        %3938 = vmatpush2.bf16.msra.mxu0 0
        %3939 = vmatprep.subr.bf16.mxu0 0
        %3940 = vmatpush2.bf16.msra.mxu0 0
        %3941 = vmatprep.subr.bf16.mxu0 0
        %3942 = vmatpush2.bf16.msra.mxu0 0
        %3943 = vmatprep.subr.bf16.mxu0 0
        %3944 = vmatpush2.bf16.msra.mxu0 0
        %3945 = vmatprep.subr.bf16.mxu0 0
        %3946 = vmatpush2.bf16.msra.mxu0 0
        %3947 = vmatprep.subr.bf16.mxu0 0
        %3948 = vmatpush2.bf16.msra.mxu0 0
        %3949 = vmatprep.mubr.bf16.mxu0 0
        %3950 = vmatmul.mubr.bf16.gmra.mxu0 %v3867
        %v3951 = vpop.f32.mrf.mxu0
        %v3952 = vadd.f32 0.0, %v3951
        %v3953 = vpop.f32.mrf.mxu0
        %v3954 = vpop.f32.mrf.mxu0
        %v3955 = vadd.f32 0.0, %v3954
        %v3956 = vpop.f32.mrf.mxu0
        %3957 = vmatprep.mubr.bf16.mxu0 0
        %3958 = vmatmul.mubr.bf16.gmra.mxu0 %v3870
        %v3959 = vpop.f32.mrf.mxu0
        %v3960 = vadd.f32 0.0, %v3959
        %v3961 = vpop.f32.mrf.mxu0
        %v3962 = vpop.f32.mrf.mxu0
        %v3963 = vadd.f32 0.0, %v3962
        %v3964 = vpop.f32.mrf.mxu0
        %3965 = vmatprep.mubr.bf16.mxu0 0
        %3966 = vmatmul.mubr.bf16.gmra.mxu0 %v3873
        %v3967 = vpop.f32.mrf.mxu0
        %v3968 = vadd.f32 0.0, %v3967
        %v3969 = vpop.f32.mrf.mxu0
        %v3970 = vpop.f32.mrf.mxu0
        %v3971 = vadd.f32 0.0, %v3970
        %v3972 = vpop.f32.mrf.mxu0
        %3973 = vmatprep.mubr.bf16.mxu0 0
        %3974 = vmatmul.mubr.bf16.gmra.mxu0 %v3876
        %v3975 = vpop.f32.mrf.mxu0
        %v3976 = vadd.f32 0.0, %v3975
        %v3977 = vpop.f32.mrf.mxu0
        %v3978 = vpop.f32.mrf.mxu0
        %v3979 = vadd.f32 0.0, %v3978
        %v3980 = vpop.f32.mrf.mxu0
        %3981 = vmatprep.mubr.bf16.mxu0 0
        %3982 = vmatmul.mubr.bf16.gmra.mxu0 %v3879
        %v3983 = vpop.f32.mrf.mxu0
        %v3984 = vadd.f32 0.0, %v3983
        %v3985 = vpop.f32.mrf.mxu0
        %v3986 = vpop.f32.mrf.mxu0
        %v3987 = vadd.f32 0.0, %v3986
        %v3988 = vpop.f32.mrf.mxu0
        %3989 = vmatprep.mubr.bf16.mxu0 0
        %3990 = vmatmul.mubr.bf16.gmra.mxu0 %v3882
        %v3991 = vpop.f32.mrf.mxu0
        %v3992 = vadd.f32 0.0, %v3991
        %v3993 = vpop.f32.mrf.mxu0
        %v3994 = vpop.f32.mrf.mxu0
        %v3995 = vadd.f32 0.0, %v3994
        %v3996 = vpop.f32.mrf.mxu0
        %3997 = vmatprep.mubr.bf16.mxu0 0
        %3998 = vmatmul.mubr.bf16.gmra.mxu0 %v3885
        %v3999 = vpop.f32.mrf.mxu0
        %v4000 = vadd.f32 0.0, %v3999
        %v4001 = vpop.f32.mrf.mxu0
        %v4002 = vpop.f32.mrf.mxu0
        %v4003 = vadd.f32 0.0, %v4002
        %v4004 = vpop.f32.mrf.mxu0
        %4005 = vmatprep.mubr.bf16.mxu0 0
        %4006 = vmatmul.mubr.bf16.gmra.mxu0 %v3888
        %v4007 = vpop.f32.mrf.mxu0
        %v4008 = vadd.f32 0.0, %v4007
        %v4009 = vpop.f32.mrf.mxu0
        %v4010 = vpop.f32.mrf.mxu0
        %v4011 = vadd.f32 0.0, %v4010
        %v4012 = vpop.f32.mrf.mxu0
        %4013 = vmatprep.mubr.bf16.mxu0 0
        %4014 = vmatmul.mubr.bf16.gmra.mxu0 %v3891
        %v4015 = vpop.f32.mrf.mxu0
        %v4016 = vadd.f32 0.0, %v4015
        %v4017 = vpop.f32.mrf.mxu0
        %v4018 = vpop.f32.mrf.mxu0
        %v4019 = vadd.f32 0.0, %v4018
        %v4020 = vpop.f32.mrf.mxu0
        %4021 = vmatprep.mubr.bf16.mxu0 0
        %4022 = vmatmul.mubr.bf16.gmra.mxu0 %v3894
        %v4023 = vpop.f32.mrf.mxu0
        %v4024 = vadd.f32 0.0, %v4023
        %v4025 = vpop.f32.mrf.mxu0
        %v4026 = vpop.f32.mrf.mxu0
        %v4027 = vadd.f32 0.0, %v4026
        %v4028 = vpop.f32.mrf.mxu0
        %4029 = vmatprep.mubr.bf16.mxu0 0
        %4030 = vmatmul.mubr.bf16.gmra.mxu0 %v3897
        %v4031 = vpop.f32.mrf.mxu0
        %v4032 = vadd.f32 0.0, %v4031
        %v4033 = vpop.f32.mrf.mxu0
        %v4034 = vpop.f32.mrf.mxu0
        %v4035 = vadd.f32 0.0, %v4034
        %v4036 = vpop.f32.mrf.mxu0
        %4037 = vmatprep.mubr.bf16.mxu0 0
        %4038 = vmatmul.mubr.bf16.gmra.mxu0 %v3900
        %v4039 = vpop.f32.mrf.mxu0
        %v4040 = vadd.f32 0.0, %v4039
        %v4041 = vpop.f32.mrf.mxu0
        %v4042 = vpop.f32.mrf.mxu0
        %v4043 = vadd.f32 0.0, %v4042
        %v4044 = vpop.f32.mrf.mxu0
        %4045 = vmatprep.mubr.bf16.mxu0 0
        %4046 = vmatmul.mubr.bf16.gmra.mxu0 %v3903
        %v4047 = vpop.f32.mrf.mxu0
        %v4048 = vadd.f32 0.0, %v4047
        %v4049 = vpop.f32.mrf.mxu0
        %v4050 = vpop.f32.mrf.mxu0
        %v4051 = vadd.f32 0.0, %v4050
        %v4052 = vpop.f32.mrf.mxu0
        %4053 = vmatprep.mubr.bf16.mxu0 0
        %4054 = vmatmul.mubr.bf16.gmra.mxu0 %v3906
        %v4055 = vpop.f32.mrf.mxu0
        %v4056 = vadd.f32 0.0, %v4055
        %v4057 = vpop.f32.mrf.mxu0
        %v4058 = vpop.f32.mrf.mxu0
        %v4059 = vadd.f32 0.0, %v4058
        %v4060 = vpop.f32.mrf.mxu0
        %4061 = vmatprep.mubr.bf16.mxu0 0
        %4062 = vmatmul.mubr.bf16.gmra.mxu0 %v3909
        %v4063 = vpop.f32.mrf.mxu0
        %v4064 = vadd.f32 0.0, %v4063
        %v4065 = vpop.f32.mrf.mxu0
        %v4066 = vpop.f32.mrf.mxu0
        %v4067 = vadd.f32 0.0, %v4066
        %v4068 = vpop.f32.mrf.mxu0
        %4069 = vmatprep.mubr.bf16.mxu0 0
        %4070 = vmatmul.mubr.bf16.gmra.mxu0 %v3912
        %v4071 = vpop.f32.mrf.mxu0
        %v4072 = vadd.f32 0.0, %v4071
        %v4073 = vpop.f32.mrf.mxu0
        %v4074 = vpop.f32.mrf.mxu0
        %v4075 = vadd.f32 0.0, %v4074
        %v4076 = vpop.f32.mrf.mxu0
        %4077 = vdwg.mxu0
        %v4078 = vadd.f32 %v3400, %v3952
        %v4079 = vadd.f32 %v3401, %v3955
        %v4080 = vadd.f32 %v3402, %v3960
        %v4081 = vadd.f32 %v3403, %v3963
        %v4082 = vadd.f32 %v3404, %v3968
        %v4083 = vadd.f32 %v3405, %v3971
        %v4084 = vadd.f32 %v3406, %v3976
        %v4085 = vadd.f32 %v3407, %v3979
        %v4086 = vadd.f32 %v3408, %v3984
        %v4087 = vadd.f32 %v3409, %v3987
        %v4088 = vadd.f32 %v3410, %v3992
        %v4089 = vadd.f32 %v3411, %v3995
        %v4090 = vadd.f32 %v3412, %v4000
        %v4091 = vadd.f32 %v3413, %v4003
        %v4092 = vadd.f32 %v3414, %v4008
        %v4093 = vadd.f32 %v3415, %v4011
        %v4094 = vadd.f32 %v3416, %v4016
        %v4095 = vadd.f32 %v3417, %v4019
        %v4096 = vadd.f32 %v3418, %v4024
        %v4097 = vadd.f32 %v3419, %v4027
        %v4098 = vadd.f32 %v3420, %v4032
        %v4099 = vadd.f32 %v3421, %v4035
        %v4100 = vadd.f32 %v3422, %v4040
        %v4101 = vadd.f32 %v3423, %v4043
        %v4102 = vadd.f32 %v3424, %v4048
        %v4103 = vadd.f32 %v3425, %v4051
        %v4104 = vadd.f32 %v3426, %v4056
        %v4105 = vadd.f32 %v3427, %v4059
        %v4106 = vadd.f32 %v3428, %v4064
        %v4107 = vadd.f32 %v3429, %v4067
        %v4108 = vadd.f32 %v3430, %v4072
        %v4109 = vadd.f32 %v3431, %v4075
        %v4126 = vrot.slane %v3058, 5
        %v4127 = vrot.slane %v4126, 4
        %v4128 = vrot.slane %v3059, 5
        %v4129 = vsel %vm1169, %v4127, %v4128
        %v4130 = vrot.slane %v4128, 4
        %v4131 = vrot.slane %v3060, 5
        %v4132 = vsel %vm1169, %v4130, %v4131
        %v4133 = vrot.slane %v3061, 5
        %v4134 = vrot.slane %v4133, 4
        %v4135 = vrot.slane %v3062, 5
        %v4136 = vsel %vm1169, %v4134, %v4135
        %v4137 = vrot.slane %v4135, 4
        %v4138 = vrot.slane %v3063, 5
        %v4139 = vsel %vm1169, %v4137, %v4138
        %v4140 = vrot.slane %v3064, 5
        %v4141 = vrot.slane %v4140, 4
        %v4142 = vrot.slane %v3065, 5
        %v4143 = vsel %vm1169, %v4141, %v4142
        %v4144 = vrot.slane %v4142, 4
        %v4145 = vrot.slane %v3066, 5
        %v4146 = vsel %vm1169, %v4144, %v4145
        %v4147 = vrot.slane %v3067, 5
        %v4148 = vrot.slane %v4147, 4
        %v4149 = vrot.slane %v3068, 5
        %v4150 = vsel %vm1169, %v4148, %v4149
        %v4151 = vrot.slane %v4149, 4
        %v4152 = vrot.slane %v3069, 5
        %v4153 = vsel %vm1169, %v4151, %v4152
        %v4154 = vrot.slane %v3070, 5
        %v4155 = vrot.slane %v4154, 4
        %v4156 = vrot.slane %v3071, 5
        %v4157 = vsel %vm1169, %v4155, %v4156
        %v4158 = vrot.slane %v4156, 4
        %v4159 = vrot.slane %v3072, 5
        %v4160 = vsel %vm1169, %v4158, %v4159
        %v4161 = vrot.slane %v3073, 5
        %v4162 = vrot.slane %v4161, 4
        %v4163 = vrot.slane %v3074, 5
        %v4164 = vsel %vm1169, %v4162, %v4163
        %v4165 = vrot.slane %v4163, 4
        %v4166 = vrot.slane %v3075, 5
        %v4167 = vsel %vm1169, %v4165, %v4166
        %v4168 = vrot.slane %v3076, 5
        %v4169 = vrot.slane %v4168, 4
        %v4170 = vrot.slane %v3077, 5
        %v4171 = vsel %vm1169, %v4169, %v4170
        %v4172 = vrot.slane %v4170, 4
        %v4173 = vrot.slane %v3078, 5
        %v4174 = vsel %vm1169, %v4172, %v4173
        %v4175 = vrot.slane %v3079, 5
        %v4176 = vrot.slane %v4175, 4
        %v4177 = vrot.slane %v3080, 5
        %v4178 = vsel %vm1169, %v4176, %v4177
        %v4179 = vrot.slane %v4177, 4
        %v4180 = vrot.slane %v3081, 5
        %v4181 = vsel %vm1169, %v4179, %v4180
        %v4182 = vrot.slane %v3082, 5
        %v4183 = vrot.slane %v4182, 4
        %v4184 = vrot.slane %v3083, 5
        %v4185 = vsel %vm1169, %v4183, %v4184
        %v4186 = vrot.slane %v4184, 4
        %v4187 = vrot.slane %v3084, 5
        %v4188 = vsel %vm1169, %v4186, %v4187
        %v4189 = vrot.slane %v3085, 5
        %v4190 = vrot.slane %v4189, 4
        %v4191 = vrot.slane %v3086, 5
        %v4192 = vsel %vm1169, %v4190, %v4191
        %v4193 = vrot.slane %v4191, 4
        %v4194 = vrot.slane %v3087, 5
        %v4195 = vsel %vm1169, %v4193, %v4194
        %v4196 = vrot.slane %v3088, 5
        %v4197 = vrot.slane %v4196, 4
        %v4198 = vrot.slane %v3089, 5
        %v4199 = vsel %vm1169, %v4197, %v4198
        %v4200 = vrot.slane %v4198, 4
        %v4201 = vrot.slane %v3090, 5
        %v4202 = vsel %vm1169, %v4200, %v4201
        %v4203 = vrot.slane %v3091, 5
        %v4204 = vrot.slane %v4203, 4
        %v4205 = vrot.slane %v3092, 5
        %v4206 = vsel %vm1169, %v4204, %v4205
        %v4207 = vrot.slane %v4205, 4
        %v4208 = vrot.slane %v3093, 5
        %v4209 = vsel %vm1169, %v4207, %v4208
        %v4210 = vrot.slane %v3094, 5
        %v4211 = vrot.slane %v4210, 4
        %v4212 = vrot.slane %v3095, 5
        %v4213 = vsel %vm1169, %v4211, %v4212
        %v4214 = vrot.slane %v4212, 4
        %v4215 = vrot.slane %v3096, 5
        %v4216 = vsel %vm1169, %v4214, %v4215
        %v4217 = vrot.slane %v3097, 5
        %v4218 = vrot.slane %v4217, 4
        %v4219 = vrot.slane %v3098, 5
        %v4220 = vsel %vm1169, %v4218, %v4219
        %v4221 = vrot.slane %v4219, 4
        %v4222 = vrot.slane %v3099, 5
        %v4223 = vsel %vm1169, %v4221, %v4222
        %v4224 = vrot.slane %v3100, 5
        %v4225 = vrot.slane %v4224, 4
        %v4226 = vrot.slane %v3101, 5
        %v4227 = vsel %vm1169, %v4225, %v4226
        %v4228 = vrot.slane %v4226, 4
        %v4229 = vrot.slane %v3102, 5
        %v4230 = vsel %vm1169, %v4228, %v4229
        %v4231 = vrot.slane %v3103, 5
        %v4232 = vrot.slane %v4231, 4
        %v4233 = vrot.slane %v3104, 5
        %v4234 = vsel %vm1169, %v4232, %v4233
        %v4235 = vrot.slane %v4233, 4
        %v4236 = vrot.slane %v3105, 5
        %v4237 = vsel %vm1169, %v4235, %v4236
        %s4238 = scalar_lea.vmem %s1, 16
        %v4239 = vld [vmem:[%s4238] sm:$0x3]
        %v4240 = vunpack.c.l.b16 %v4129
        %v4241 = vunpack.c.l.b16 %v4132
        %v4242 = vunpack.c.l.b16 %v4136
        %v4243 = vunpack.c.l.b16 %v4139
        %v4244 = vunpack.c.l.b16 %v4143
        %v4245 = vunpack.c.l.b16 %v4146
        %v4246 = vunpack.c.l.b16 %v4150
        %v4247 = vunpack.c.l.b16 %v4153
        %v4248 = vunpack.c.l.b16 %v4157
        %v4249 = vunpack.c.l.b16 %v4160
        %v4250 = vunpack.c.l.b16 %v4164
        %v4251 = vunpack.c.l.b16 %v4167
        %v4252 = vunpack.c.l.b16 %v4171
        %v4253 = vunpack.c.l.b16 %v4174
        %v4254 = vunpack.c.l.b16 %v4178
        %v4255 = vunpack.c.l.b16 %v4181
        %v4256 = vunpack.c.l.b16 %v4185
        %v4257 = vunpack.c.l.b16 %v4188
        %v4258 = vunpack.c.l.b16 %v4192
        %v4259 = vunpack.c.l.b16 %v4195
        %v4260 = vunpack.c.l.b16 %v4199
        %v4261 = vunpack.c.l.b16 %v4202
        %v4262 = vunpack.c.l.b16 %v4206
        %v4263 = vunpack.c.l.b16 %v4209
        %v4264 = vunpack.c.l.b16 %v4213
        %v4265 = vunpack.c.l.b16 %v4216
        %v4266 = vunpack.c.l.b16 %v4220
        %v4267 = vunpack.c.l.b16 %v4223
        %v4268 = vunpack.c.l.b16 %v4227
        %v4269 = vunpack.c.l.b16 %v4230
        %v4270 = vunpack.c.l.b16 %v4234
        %v4271 = vunpack.c.l.b16 %v4237
        %v4272 = vpack.c.b16 %v4241, %v4240
        %v4273 = vpack.c.b16 %v4243, %v4242
        %v4274 = vpack.c.b16 %v4245, %v4244
        %v4275 = vpack.c.b16 %v4247, %v4246
        %v4276 = vpack.c.b16 %v4249, %v4248
        %v4277 = vpack.c.b16 %v4251, %v4250
        %v4278 = vpack.c.b16 %v4253, %v4252
        %v4279 = vpack.c.b16 %v4255, %v4254
        %v4280 = vpack.c.b16 %v4257, %v4256
        %v4281 = vpack.c.b16 %v4259, %v4258
        %v4282 = vpack.c.b16 %v4261, %v4260
        %v4283 = vpack.c.b16 %v4263, %v4262
        %v4284 = vpack.c.b16 %v4265, %v4264
        %v4285 = vpack.c.b16 %v4267, %v4266
        %v4286 = vpack.c.b16 %v4269, %v4268
        %v4287 = vpack.c.b16 %v4271, %v4270
        %v4289 = vsel %vm645, %v4272, 0
        %v4292 = vsel %vm645, %v4273, 0
        %v4295 = vsel %vm645, %v4274, 0
        %v4298 = vsel %vm645, %v4275, 0
        %v4301 = vsel %vm645, %v4276, 0
        %v4304 = vsel %vm645, %v4277, 0
        %v4307 = vsel %vm645, %v4278, 0
        %v4310 = vsel %vm645, %v4279, 0
        %v4313 = vsel %vm645, %v4280, 0
        %v4316 = vsel %vm645, %v4281, 0
        %v4319 = vsel %vm645, %v4282, 0
        %v4322 = vsel %vm645, %v4283, 0
        %v4325 = vsel %vm645, %v4284, 0
        %v4328 = vsel %vm645, %v4285, 0
        %v4331 = vsel %vm645, %v4286, 0
        %v4334 = vsel %vm645, %v4287, 0
        %v4337 = vsel %vm694, %v4239, 0
        %4339 = vmatprep.subr.bf16.mxu0 0
        %4340 = vmatpush1.bf16.msra.mxu0 0
        %4341 = vmatprep.subr.bf16.mxu0 0
        %4342 = vmatpush1.bf16.msra.mxu0 0
        %4343 = vmatprep.subr.bf16.mxu0 0
        %4344 = vmatpush1.bf16.msra.mxu0 0
        %4345 = vmatprep.subr.bf16.mxu0 0
        %4346 = vmatpush1.bf16.msra.mxu0 0
        %4347 = vmatprep.subr.bf16.mxu0 0
        %4348 = vmatpush1.bf16.msra.mxu0 0
        %4349 = vmatprep.subr.bf16.mxu0 0
        %4350 = vmatpush1.bf16.msra.mxu0 0
        %4351 = vmatprep.subr.bf16.mxu0 0
        %4352 = vmatpush1.bf16.msra.mxu0 0
        %4353 = vmatprep.subr.bf16.mxu0 0
        %4354 = vmatpush1.bf16.msra.mxu0 %v4337
        %4355 = vmatprep.subr.bf16.mxu0 0
        %4356 = vmatpush2.bf16.msra.mxu0 0
        %4357 = vmatprep.subr.bf16.mxu0 0
        %4358 = vmatpush2.bf16.msra.mxu0 0
        %4359 = vmatprep.subr.bf16.mxu0 0
        %4360 = vmatpush2.bf16.msra.mxu0 0
        %4361 = vmatprep.subr.bf16.mxu0 0
        %4362 = vmatpush2.bf16.msra.mxu0 0
        %4363 = vmatprep.subr.bf16.mxu0 0
        %4364 = vmatpush2.bf16.msra.mxu0 0
        %4365 = vmatprep.subr.bf16.mxu0 0
        %4366 = vmatpush2.bf16.msra.mxu0 0
        %4367 = vmatprep.subr.bf16.mxu0 0
        %4368 = vmatpush2.bf16.msra.mxu0 0
        %4369 = vmatprep.subr.bf16.mxu0 0
        %4370 = vmatpush2.bf16.msra.mxu0 0
        %4371 = vmatprep.mubr.bf16.mxu0 0
        %4372 = vmatmul.mubr.bf16.gmra.mxu0 %v4289
        %v4373 = vpop.f32.mrf.mxu0
        %v4374 = vadd.f32 0.0, %v4373
        %v4375 = vpop.f32.mrf.mxu0
        %v4376 = vpop.f32.mrf.mxu0
        %v4377 = vadd.f32 0.0, %v4376
        %v4378 = vpop.f32.mrf.mxu0
        %4379 = vmatprep.mubr.bf16.mxu0 0
        %4380 = vmatmul.mubr.bf16.gmra.mxu0 %v4292
        %v4381 = vpop.f32.mrf.mxu0
        %v4382 = vadd.f32 0.0, %v4381
        %v4383 = vpop.f32.mrf.mxu0
        %v4384 = vpop.f32.mrf.mxu0
        %v4385 = vadd.f32 0.0, %v4384
        %v4386 = vpop.f32.mrf.mxu0
        %4387 = vmatprep.mubr.bf16.mxu0 0
        %4388 = vmatmul.mubr.bf16.gmra.mxu0 %v4295
        %v4389 = vpop.f32.mrf.mxu0
        %v4390 = vadd.f32 0.0, %v4389
        %v4391 = vpop.f32.mrf.mxu0
        %v4392 = vpop.f32.mrf.mxu0
        %v4393 = vadd.f32 0.0, %v4392
        %v4394 = vpop.f32.mrf.mxu0
        %4395 = vmatprep.mubr.bf16.mxu0 0
        %4396 = vmatmul.mubr.bf16.gmra.mxu0 %v4298
        %v4397 = vpop.f32.mrf.mxu0
        %v4398 = vadd.f32 0.0, %v4397
        %v4399 = vpop.f32.mrf.mxu0
        %v4400 = vpop.f32.mrf.mxu0
        %v4401 = vadd.f32 0.0, %v4400
        %v4402 = vpop.f32.mrf.mxu0
        %4403 = vmatprep.mubr.bf16.mxu0 0
        %4404 = vmatmul.mubr.bf16.gmra.mxu0 %v4301
        %v4405 = vpop.f32.mrf.mxu0
        %v4406 = vadd.f32 0.0, %v4405
        %v4407 = vpop.f32.mrf.mxu0
        %v4408 = vpop.f32.mrf.mxu0
        %v4409 = vadd.f32 0.0, %v4408
        %v4410 = vpop.f32.mrf.mxu0
        %4411 = vmatprep.mubr.bf16.mxu0 0
        %4412 = vmatmul.mubr.bf16.gmra.mxu0 %v4304
        %v4413 = vpop.f32.mrf.mxu0
        %v4414 = vadd.f32 0.0, %v4413
        %v4415 = vpop.f32.mrf.mxu0
        %v4416 = vpop.f32.mrf.mxu0
        %v4417 = vadd.f32 0.0, %v4416
        %v4418 = vpop.f32.mrf.mxu0
        %4419 = vmatprep.mubr.bf16.mxu0 0
        %4420 = vmatmul.mubr.bf16.gmra.mxu0 %v4307
        %v4421 = vpop.f32.mrf.mxu0
        %v4422 = vadd.f32 0.0, %v4421
        %v4423 = vpop.f32.mrf.mxu0
        %v4424 = vpop.f32.mrf.mxu0
        %v4425 = vadd.f32 0.0, %v4424
        %v4426 = vpop.f32.mrf.mxu0
        %4427 = vmatprep.mubr.bf16.mxu0 0
        %4428 = vmatmul.mubr.bf16.gmra.mxu0 %v4310
        %v4429 = vpop.f32.mrf.mxu0
        %v4430 = vadd.f32 0.0, %v4429
        %v4431 = vpop.f32.mrf.mxu0
        %v4432 = vpop.f32.mrf.mxu0
        %v4433 = vadd.f32 0.0, %v4432
        %v4434 = vpop.f32.mrf.mxu0
        %4435 = vmatprep.mubr.bf16.mxu0 0
        %4436 = vmatmul.mubr.bf16.gmra.mxu0 %v4313
        %v4437 = vpop.f32.mrf.mxu0
        %v4438 = vadd.f32 0.0, %v4437
        %v4439 = vpop.f32.mrf.mxu0
        %v4440 = vpop.f32.mrf.mxu0
        %v4441 = vadd.f32 0.0, %v4440
        %v4442 = vpop.f32.mrf.mxu0
        %4443 = vmatprep.mubr.bf16.mxu0 0
        %4444 = vmatmul.mubr.bf16.gmra.mxu0 %v4316
        %v4445 = vpop.f32.mrf.mxu0
        %v4446 = vadd.f32 0.0, %v4445
        %v4447 = vpop.f32.mrf.mxu0
        %v4448 = vpop.f32.mrf.mxu0
        %v4449 = vadd.f32 0.0, %v4448
        %v4450 = vpop.f32.mrf.mxu0
        %4451 = vmatprep.mubr.bf16.mxu0 0
        %4452 = vmatmul.mubr.bf16.gmra.mxu0 %v4319
        %v4453 = vpop.f32.mrf.mxu0
        %v4454 = vadd.f32 0.0, %v4453
        %v4455 = vpop.f32.mrf.mxu0
        %v4456 = vpop.f32.mrf.mxu0
        %v4457 = vadd.f32 0.0, %v4456
        %v4458 = vpop.f32.mrf.mxu0
        %4459 = vmatprep.mubr.bf16.mxu0 0
        %4460 = vmatmul.mubr.bf16.gmra.mxu0 %v4322
        %v4461 = vpop.f32.mrf.mxu0
        %v4462 = vadd.f32 0.0, %v4461
        %v4463 = vpop.f32.mrf.mxu0
        %v4464 = vpop.f32.mrf.mxu0
        %v4465 = vadd.f32 0.0, %v4464
        %v4466 = vpop.f32.mrf.mxu0
        %4467 = vmatprep.mubr.bf16.mxu0 0
        %4468 = vmatmul.mubr.bf16.gmra.mxu0 %v4325
        %v4469 = vpop.f32.mrf.mxu0
        %v4470 = vadd.f32 0.0, %v4469
        %v4471 = vpop.f32.mrf.mxu0
        %v4472 = vpop.f32.mrf.mxu0
        %v4473 = vadd.f32 0.0, %v4472
        %v4474 = vpop.f32.mrf.mxu0
        %4475 = vmatprep.mubr.bf16.mxu0 0
        %4476 = vmatmul.mubr.bf16.gmra.mxu0 %v4328
        %v4477 = vpop.f32.mrf.mxu0
        %v4478 = vadd.f32 0.0, %v4477
        %v4479 = vpop.f32.mrf.mxu0
        %v4480 = vpop.f32.mrf.mxu0
        %v4481 = vadd.f32 0.0, %v4480
        %v4482 = vpop.f32.mrf.mxu0
        %4483 = vmatprep.mubr.bf16.mxu0 0
        %4484 = vmatmul.mubr.bf16.gmra.mxu0 %v4331
        %v4485 = vpop.f32.mrf.mxu0
        %v4486 = vadd.f32 0.0, %v4485
        %v4487 = vpop.f32.mrf.mxu0
        %v4488 = vpop.f32.mrf.mxu0
        %v4489 = vadd.f32 0.0, %v4488
        %v4490 = vpop.f32.mrf.mxu0
        %4491 = vmatprep.mubr.bf16.mxu0 0
        %4492 = vmatmul.mubr.bf16.gmra.mxu0 %v4334
        %v4493 = vpop.f32.mrf.mxu0
        %v4494 = vadd.f32 0.0, %v4493
        %v4495 = vpop.f32.mrf.mxu0
        %v4496 = vpop.f32.mrf.mxu0
        %v4497 = vadd.f32 0.0, %v4496
        %v4498 = vpop.f32.mrf.mxu0
        %4499 = vdwg.mxu0
        %v4500 = vadd.f32 %v4078, %v4374
        %v4501 = vadd.f32 %v4079, %v4377
        %v4502 = vadd.f32 %v4080, %v4382
        %v4503 = vadd.f32 %v4081, %v4385
        %v4504 = vadd.f32 %v4082, %v4390
        %v4505 = vadd.f32 %v4083, %v4393
        %v4506 = vadd.f32 %v4084, %v4398
        %v4507 = vadd.f32 %v4085, %v4401
        %v4508 = vadd.f32 %v4086, %v4406
        %v4509 = vadd.f32 %v4087, %v4409
        %v4510 = vadd.f32 %v4088, %v4414
        %v4511 = vadd.f32 %v4089, %v4417
        %v4512 = vadd.f32 %v4090, %v4422
        %v4513 = vadd.f32 %v4091, %v4425
        %v4514 = vadd.f32 %v4092, %v4430
        %v4515 = vadd.f32 %v4093, %v4433
        %v4516 = vadd.f32 %v4094, %v4438
        %v4517 = vadd.f32 %v4095, %v4441
        %v4518 = vadd.f32 %v4096, %v4446
        %v4519 = vadd.f32 %v4097, %v4449
        %v4520 = vadd.f32 %v4098, %v4454
        %v4521 = vadd.f32 %v4099, %v4457
        %v4522 = vadd.f32 %v4100, %v4462
        %v4523 = vadd.f32 %v4101, %v4465
        %v4524 = vadd.f32 %v4102, %v4470
        %v4525 = vadd.f32 %v4103, %v4473
        %v4526 = vadd.f32 %v4104, %v4478
        %v4527 = vadd.f32 %v4105, %v4481
        %v4528 = vadd.f32 %v4106, %v4486
        %v4529 = vadd.f32 %v4107, %v4489
        %v4530 = vadd.f32 %v4108, %v4494
        %v4531 = vadd.f32 %v4109, %v4497
        %vm4532 = vcmask 64512
        %v4533 = vsel %vm4532, %v4500, 0.0
        %v4534 = vsel %vm4532, %v4501, 0.0
        %v4535 = vadd.f32 %v4533, %v4534
        %v4536 = vsel %vm4532, %v4502, 0.0
        %v4537 = vadd.f32 %v4535, %v4536
        %v4538 = vsel %vm4532, %v4503, 0.0
        %v4539 = vadd.f32 %v4537, %v4538
        %v4540 = vsel %vm4532, %v4504, 0.0
        %v4541 = vadd.f32 %v4539, %v4540
        %v4542 = vsel %vm4532, %v4505, 0.0
        %v4543 = vadd.f32 %v4541, %v4542
        %v4544 = vsel %vm4532, %v4506, 0.0
        %v4545 = vadd.f32 %v4543, %v4544
        %v4546 = vsel %vm4532, %v4507, 0.0
        %v4547 = vadd.f32 %v4545, %v4546
        %v4548 = vsel %vm4532, %v4508, 0.0
        %v4549 = vadd.f32 %v4547, %v4548
        %v4550 = vsel %vm4532, %v4509, 0.0
        %v4551 = vadd.f32 %v4549, %v4550
        %v4552 = vsel %vm4532, %v4510, 0.0
        %v4553 = vadd.f32 %v4551, %v4552
        %v4554 = vsel %vm4532, %v4511, 0.0
        %v4555 = vadd.f32 %v4553, %v4554
        %v4556 = vsel %vm4532, %v4512, 0.0
        %v4557 = vadd.f32 %v4555, %v4556
        %v4558 = vsel %vm4532, %v4513, 0.0
        %v4559 = vadd.f32 %v4557, %v4558
        %v4560 = vsel %vm4532, %v4514, 0.0
        %v4561 = vadd.f32 %v4559, %v4560
        %v4562 = vsel %vm4532, %v4515, 0.0
        %v4563 = vadd.f32 %v4561, %v4562
        %v4564 = vsel %vm4532, %v4516, 0.0
        %v4565 = vadd.f32 %v4563, %v4564
        %v4566 = vsel %vm4532, %v4517, 0.0
        %v4567 = vadd.f32 %v4565, %v4566
        %v4568 = vsel %vm4532, %v4518, 0.0
        %v4569 = vadd.f32 %v4567, %v4568
        %v4570 = vsel %vm4532, %v4519, 0.0
        %v4571 = vadd.f32 %v4569, %v4570
        %v4572 = vsel %vm4532, %v4520, 0.0
        %v4573 = vadd.f32 %v4571, %v4572
        %v4574 = vsel %vm4532, %v4521, 0.0
        %v4575 = vadd.f32 %v4573, %v4574
        %v4576 = vsel %vm4532, %v4522, 0.0
        %v4577 = vadd.f32 %v4575, %v4576
        %v4578 = vsel %vm4532, %v4523, 0.0
        %v4579 = vadd.f32 %v4577, %v4578
        %v4580 = vsel %vm4532, %v4524, 0.0
        %v4581 = vadd.f32 %v4579, %v4580
        %v4582 = vsel %vm4532, %v4525, 0.0
        %v4583 = vadd.f32 %v4581, %v4582
        %v4584 = vsel %vm4532, %v4526, 0.0
        %v4585 = vadd.f32 %v4583, %v4584
        %v4586 = vsel %vm4532, %v4527, 0.0
        %v4587 = vadd.f32 %v4585, %v4586
        %v4588 = vsel %vm4532, %v4528, 0.0
        %v4589 = vadd.f32 %v4587, %v4588
        %v4590 = vsel %vm4532, %v4529, 0.0
        %v4591 = vadd.f32 %v4589, %v4590
        %v4592 = vsel %vm4532, %v4530, 0.0
        %v4593 = vadd.f32 %v4591, %v4592
        %v4594 = vsel %vm4532, %v4531, 0.0
        %v4595 = vadd.f32 %v4593, %v4594
        %v4596 = vrot.slane %v4595, 4
        %v4597 = vadd.f32 %v4595, %v4596
        %v4598 = vrot.slane %v4597, 2
        %v4599 = vadd.f32 %v4597, %v4598
        %v4600 = vrot.slane %v4599, 1
        %v4601 = vadd.f32 %v4599, %v4600
        %v4602 = vmul.f32 %v4500, %v4500
        %v4603 = vmul.f32 %v4501, %v4501
        %v4604 = vmul.f32 %v4502, %v4502
        %v4605 = vmul.f32 %v4503, %v4503
        %v4606 = vmul.f32 %v4504, %v4504
        %v4607 = vmul.f32 %v4505, %v4505
        %v4608 = vmul.f32 %v4506, %v4506
        %v4609 = vmul.f32 %v4507, %v4507
        %v4610 = vmul.f32 %v4508, %v4508
        %v4611 = vmul.f32 %v4509, %v4509
        %v4612 = vmul.f32 %v4510, %v4510
        %v4613 = vmul.f32 %v4511, %v4511
        %v4614 = vmul.f32 %v4512, %v4512
        %v4615 = vmul.f32 %v4513, %v4513
        %v4616 = vmul.f32 %v4514, %v4514
        %v4617 = vmul.f32 %v4515, %v4515
        %v4618 = vmul.f32 %v4516, %v4516
        %v4619 = vmul.f32 %v4517, %v4517
        %v4620 = vmul.f32 %v4518, %v4518
        %v4621 = vmul.f32 %v4519, %v4519
        %v4622 = vmul.f32 %v4520, %v4520
        %v4623 = vmul.f32 %v4521, %v4521
        %v4624 = vmul.f32 %v4522, %v4522
        %v4625 = vmul.f32 %v4523, %v4523
        %v4626 = vmul.f32 %v4524, %v4524
        %v4627 = vmul.f32 %v4525, %v4525
        %v4628 = vmul.f32 %v4526, %v4526
        %v4629 = vmul.f32 %v4527, %v4527
        %v4630 = vmul.f32 %v4528, %v4528
        %v4631 = vmul.f32 %v4529, %v4529
        %v4632 = vmul.f32 %v4530, %v4530
        %v4633 = vmul.f32 %v4531, %v4531
        %v4634 = vsel %vm4532, %v4602, 0.0
        %v4635 = vsel %vm4532, %v4603, 0.0
        %v4636 = vadd.f32 %v4634, %v4635
        %v4637 = vsel %vm4532, %v4604, 0.0
        %v4638 = vadd.f32 %v4636, %v4637
        %v4639 = vsel %vm4532, %v4605, 0.0
        %v4640 = vadd.f32 %v4638, %v4639
        %v4641 = vsel %vm4532, %v4606, 0.0
        %v4642 = vadd.f32 %v4640, %v4641
        %v4643 = vsel %vm4532, %v4607, 0.0
        %v4644 = vadd.f32 %v4642, %v4643
        %v4645 = vsel %vm4532, %v4608, 0.0
        %v4646 = vadd.f32 %v4644, %v4645
        %v4647 = vsel %vm4532, %v4609, 0.0
        %v4648 = vadd.f32 %v4646, %v4647
        %v4649 = vsel %vm4532, %v4610, 0.0
        %v4650 = vadd.f32 %v4648, %v4649
        %v4651 = vsel %vm4532, %v4611, 0.0
        %v4652 = vadd.f32 %v4650, %v4651
        %v4653 = vsel %vm4532, %v4612, 0.0
        %v4654 = vadd.f32 %v4652, %v4653
        %v4655 = vsel %vm4532, %v4613, 0.0
        %v4656 = vadd.f32 %v4654, %v4655
        %v4657 = vsel %vm4532, %v4614, 0.0
        %v4658 = vadd.f32 %v4656, %v4657
        %v4659 = vsel %vm4532, %v4615, 0.0
        %v4660 = vadd.f32 %v4658, %v4659
        %v4661 = vsel %vm4532, %v4616, 0.0
        %v4662 = vadd.f32 %v4660, %v4661
        %v4663 = vsel %vm4532, %v4617, 0.0
        %v4664 = vadd.f32 %v4662, %v4663
        %v4665 = vsel %vm4532, %v4618, 0.0
        %v4666 = vadd.f32 %v4664, %v4665
        %v4667 = vsel %vm4532, %v4619, 0.0
        %v4668 = vadd.f32 %v4666, %v4667
        %v4669 = vsel %vm4532, %v4620, 0.0
        %v4670 = vadd.f32 %v4668, %v4669
        %v4671 = vsel %vm4532, %v4621, 0.0
        %v4672 = vadd.f32 %v4670, %v4671
        %v4673 = vsel %vm4532, %v4622, 0.0
        %v4674 = vadd.f32 %v4672, %v4673
        %v4675 = vsel %vm4532, %v4623, 0.0
        %v4676 = vadd.f32 %v4674, %v4675
        %v4677 = vsel %vm4532, %v4624, 0.0
        %v4678 = vadd.f32 %v4676, %v4677
        %v4679 = vsel %vm4532, %v4625, 0.0
        %v4680 = vadd.f32 %v4678, %v4679
        %v4681 = vsel %vm4532, %v4626, 0.0
        %v4682 = vadd.f32 %v4680, %v4681
        %v4683 = vsel %vm4532, %v4627, 0.0
        %v4684 = vadd.f32 %v4682, %v4683
        %v4685 = vsel %vm4532, %v4628, 0.0
        %v4686 = vadd.f32 %v4684, %v4685
        %v4687 = vsel %vm4532, %v4629, 0.0
        %v4688 = vadd.f32 %v4686, %v4687
        %v4689 = vsel %vm4532, %v4630, 0.0
        %v4690 = vadd.f32 %v4688, %v4689
        %v4691 = vsel %vm4532, %v4631, 0.0
        %v4692 = vadd.f32 %v4690, %v4691
        %v4693 = vsel %vm4532, %v4632, 0.0
        %v4694 = vadd.f32 %v4692, %v4693
        %v4695 = vsel %vm4532, %v4633, 0.0
        %v4696 = vadd.f32 %v4694, %v4695
        %v4697 = vrot.slane %v4696, 4
        %v4698 = vadd.f32 %v4696, %v4697
        %v4699 = vrot.slane %v4698, 2
        %v4700 = vadd.f32 %v4698, %v4699
        %v4701 = vrot.slane %v4700, 1
        %v4702 = vadd.f32 %v4700, %v4701
        %vm4703 = vcmask 1040384
        %v4704 = vsel %vm4703, %v4601, %v4702
        %p4705 = scmp.eq.s32.totalorder %s21, 0
        // Predicated region
        $region29: #{tpu_custom_call.1} parent=27 // pred_check
          %p4706 = pneg %p4705
        $region30: #{tpu_custom_call.1} parent=27 // pred_check_branch
          %4708 = sbr.rel (%p4706) target = $region32
        $region31: #{tpu_custom_call.1} parent=27 // pred_region
          %vm4709 = vcmask 58368
          %4710 = vst.msk [vmem:[%s148] sm:$0x3] %vm4709, 0.0
        $region32: #{tpu_custom_call.1} parent=27 // pred_fallthru
          _
        %v4711 = vld [vmem:[%s148] sm:$0x3]
        %v4712 = vadd.f32 %v4711, %v4704
        %vm4713 = vcmask 58368
        %4714 = vst.msk [vmem:[%s148] sm:$0x3] %vm4713, %v4712
        %s4715 = sand.u32 %s83, 1
        %s4716 = scalar_lea.sflag [#allocation3], %s4715
        %s4717 = sand.u32 %s83, 1
        %s4718 = smul.addr %s4717, 2
        %s4719 = scalar_lea.vmem [#allocation2], %s4718
        // Predicated region
        $region33: #{tpu_custom_call.1} parent=27 // pred_check
          %p4720 = pneg %p93
        $region34: #{tpu_custom_call.1} parent=27 // pred_check_branch
          %4722 = sbr.rel (%p4720) target = $region36
        $region35: #{tpu_custom_call.1} parent=27 // pred_region
          %s4724 = ssub.s32 32, 32
          %4725 = vsyncadd %s4716, %s4724
          %s4726 = smul.addr %s20, 32
          %s4727 = scalar_lea.hbm %s2, %s4726
          %s4729 = sshll.u32 %s4719, 4
          %s4730 = int_to_ptr.vmem [resolvable:$true] %s4729
          %4732 = dma.vmem_to_hbm [thread:$0]  %s4730, 32, %s4727, %s4716
        $region36: #{tpu_custom_call.1} parent=27 // pred_fallthru
          _
      $region28: #{tpu_custom_call.1} parent=5 // pred_fallthru
        _
      %p4733 = scmp.le.s32.totalorder 2, %s11
      // Predicated region
      $region37: #{tpu_custom_call.1} parent=5 // pred_check
        %p4734 = pneg %p4733
      $region38: #{tpu_custom_call.1} parent=5 // pred_check_branch
        %4736 = sbr.rel (%p4734) target = $region40
      $region39: #{tpu_custom_call.1} parent=5 // pred_region
        %s4737 = ssub.s32 %s11, 2
        // Predicated region
        $region41: #{tpu_custom_call.1} parent=39 // pred_check
          %p4738 = pneg %p99
        $region42: #{tpu_custom_call.1} parent=39 // pred_check_branch
          %4740 = sbr.rel (%p4738) target = $region44
        $region43: #{tpu_custom_call.1} parent=39 // pred_region
          %s4741 = sand.u32 %s84, 1
          %s4742 = scalar_lea.sflag [#allocation3], %s4741
          %s4743 = sand.u32 %s84, 1
          %s4744 = smul.addr %s4743, 2
          %s4745 = scalar_lea.vmem [#allocation2], %s4744
          %4746 = dma.done %s4742, 32
        $region44: #{tpu_custom_call.1} parent=39 // pred_fallthru
          _
      $region40: #{tpu_custom_call.1} parent=5 // pred_fallthru
        _
    $region6: #{tpu_custom_call.1} parent=1 // loop_footer
      %s15 = sadd.s32 1, %s11
    $region7: #{tpu_custom_call.1} parent=1 // loop_footer_branch
      %10 = sbr.rel target = $region3
    $region8: #{tpu_custom_call.1} parent=1 // loop_exit
      _
    %4747 = vsyncpa [#allocation3], 1
    %s4748 = scalar_lea.sflag [#allocation3], 1
    %4749 = vsyncpa %s4748, 1

</llo_original>
